<compile_context>
chip_gen: v7x
topology: tpu7x:2x2x1
jax: 0.10.0
libtpu: 0.0.40
codegen_flags: <defaults>
</compile_context>

<pallas_src>
import numpy as np
import jax
import jax.numpy as jnp
from jax import lax
from jax.experimental import pallas as pl
from jax.experimental.pallas import tpu as pltpu

# ---------------- model hyper-params (the `args` of OurModel) ----------------
NUM_NODES = 8
WINDOW = 2                       # w = len(graphs)
DIM_EMB = 32
DIM_PE = 8
ADD_EIG_VALS = False
IN_DIM_PE = 2 * DIM_PE if ADD_EIG_VALS else DIM_PE
NHEAD = 4
DH = DIM_EMB // NHEAD
DIM_FEEDFORWARD = 64
NUM_LAYERS_TRSF = 2
ADD_VN = False
NUM_NODES_EMB = NUM_NODES + 1 if ADD_VN else NUM_NODES
SEQ = NUM_NODES_EMB * WINDOW     # supra-node sequence length
MAX_N_SUPRA = SEQ                # static upper bound on non-isolated supra-nodes
LN_EPS = 1e-5

VMEM_SPEC = pl.BlockSpec(memory_space=pltpu.MemorySpace.VMEM)


# --------------------- packed-slab layout (static, config-only) ---------------------
def _make_layout():
    order = [
        ('tokens', SEQ, DIM_EMB),                 # node_embedding tiled over the window
        ('lin_pe_w', IN_DIM_PE, IN_DIM_PE),
        ('lin_pe_b', 1, IN_DIM_PE),
        ('w_tok', DIM_EMB, DIM_EMB),              # lin_input split over [tokens | all_pe]
        ('w_pe', IN_DIM_PE, DIM_EMB),
        ('lin_input_b', 1, DIM_EMB),
    ]
    for l in range(NUM_LAYERS_TRSF):
        order += [
            (f'wq{l}', NHEAD * DIM_EMB, DH),      # per-head [D, dh] blocks, rows h*D:(h+1)*D
            (f'bq{l}', NHEAD, DH),                # per-head q bias rows (scaled)
            (f'wk{l}', NHEAD * DIM_EMB, DH),
            (f'wv{l}', NHEAD * DIM_EMB, DH),
            (f'wo{l}', DIM_EMB, DIM_EMB),         # out-proj, head h = rows h*dh:(h+1)*dh
            (f'bo{l}', 1, DIM_EMB),               # out-proj bias + folded V bias
            (f'w1{l}', DIM_EMB, DIM_FEEDFORWARD),
            (f'b1{l}', 1, DIM_FEEDFORWARD),
            (f'w2{l}', DIM_FEEDFORWARD, DIM_EMB),
            (f'b2{l}', 1, DIM_EMB),
            (f'ln1w{l}', 1, DIM_EMB), (f'ln1b{l}', 1, DIM_EMB),
            (f'ln2w{l}', 1, DIM_EMB), (f'ln2b{l}', 1, DIM_EMB),
        ]
    order += [('norm_w', 1, DIM_EMB), ('norm_b', 1, DIM_EMB)]
    layout, off = {}, 0
    for name, r, c in order:
        layout[name] = (off, r, c)
        off += ((r + 7) // 8) * 8                 # 8-align every block (sublane tile)
    return layout, off


LAYOUT, SLAB_ROWS = _make_layout()
SLAB_COLS = DIM_FEEDFORWARD       # widest block; VMEM lane-pads to 128 anyway


# --------------------------------- kernel helpers ------------------------------------
def _layernorm(x, w, b):
    mu = jnp.mean(x, axis=-1, keepdims=True)
    var = jnp.mean(jnp.square(x - mu), axis=-1, keepdims=True)
    return (x - mu) * lax.rsqrt(var + LN_EPS) * w + b


def _dot(a, b):          # a @ b
    return lax.dot_general(a, b, (((1,), (0,)), ((), ())),
                           preferred_element_type=jnp.float32)


def _dot_bt(a, b):       # a @ b.T  (contract last dims of both)
    return lax.dot_general(a, b, (((1,), (1,)), ((), ())),
                           preferred_element_type=jnp.float32)


def _dot_at(a, b):       # a.T @ b  (contract first dims of both)
    return lax.dot_general(a, b, (((0,), (0,)), ((), ())),
                           preferred_element_type=jnp.float32)


# ------------------------------------- kernel ----------------------------------------
def fused_forward_kernel(scal_ref, pe_ref, slab_ref, o_ref):
    """Whole forward: lin_pe -> scatter -> lin_input -> encoder -> norm -> gather."""
    n_supra = pe_ref.shape[0]
    n_out = o_ref.shape[0]

    def blk(name):
        off, r, c = LAYOUT[name]
        return slab_ref[off:off + r, :c]

    # ---- compute_st_pe ----
    pe_proj = _dot(pe_ref[...], blk('lin_pe_w')) + blk('lin_pe_b')           # [n_supra, P]
    # scatter `all_pe[mask] = pe_proj` as a one-hot matmul; padded mask entries
    # are -1 -> all-zero columns -> padded PE rows contribute nothing.
    row_ids = lax.broadcasted_iota(jnp.int32, (SEQ, n_supra), 0)
    scatter = (row_ids == scal_ref[0:1, :n_supra]).astype(jnp.float32)       # [SEQ, n_supra]
    all_pe = _dot(scatter, pe_proj)                                          # [SEQ, P]
    # lin_input on the (virtual) concat [tokens | all_pe] via split weights
    x = (_dot(blk('tokens'), blk('w_tok')) + _dot(all_pe, blk('w_pe'))
         + blk('lin_input_b'))                                               # [SEQ, D]

    # ---- nn.TransformerEncoder (post-norm, relu FFN, inference) ----
    for l in range(NUM_LAYERS_TRSF):
        wq_off = LAYOUT[f'wq{l}'][0]
        wk_off = LAYOUT[f'wk{l}'][0]
        wv_off = LAYOUT[f'wv{l}'][0]
        bq_off = LAYOUT[f'bq{l}'][0]
        wo_off = LAYOUT[f'wo{l}'][0]

        # statically-unrolled per-head attention; bo already contains the folded V bias
        attn = blk(f'bo{l}')                                                 # [1, D]
        for h in range(NHEAD):
            r = h * DIM_EMB
            q_h = (_dot(x, slab_ref[wq_off + r: wq_off + r + DIM_EMB, :DH])
                   + slab_ref[bq_off + h: bq_off + h + 1, :DH])              # scale folded
            k_h = _dot(x, slab_ref[wk_off + r: wk_off + r + DIM_EMB, :DH])   # K bias dropped
            v_h = _dot(x, slab_ref[wv_off + r: wv_off + r + DIM_EMB, :DH])   # V bias folded
            s = _dot_bt(q_h, k_h)                                            # [SEQ, SEQ]
            s = s - jnp.max(s, axis=-1, keepdims=True)
            p = jnp.exp(s)
            p = p * pl.reciprocal(jnp.sum(p, axis=-1, keepdims=True), approx=True)
            ctx = _dot(p, v_h)                                               # [SEQ, DH]
            attn = attn + _dot(ctx, slab_ref[wo_off + h * DH:
                                             wo_off + (h + 1) * DH, :DIM_EMB])

        # post-norm residual blocks (dropout == identity at inference)
        x = _layernorm(x + attn, blk(f'ln1w{l}'), blk(f'ln1b{l}'))
        ff = jnp.maximum(_dot(x, blk(f'w1{l}')) + blk(f'b1{l}'), 0.0)
        ff = _dot(ff, blk(f'w2{l}')) + blk(f'b2{l}')
        x = _layernorm(x + ff, blk(f'ln2w{l}'), blk(f'ln2b{l}'))

    # ---- final encoder LayerNorm ----
    z = _layernorm(x, blk('norm_w'), blk('norm_b'))

    # ---- fused gather: out[t*W + w] = z[w*NUM_NODES_EMB + train_idx[t]] ----
    g_rows = lax.broadcasted_iota(jnp.int32, (SEQ, n_out), 0)
    sel = (g_rows == scal_ref[1:2, :n_out]).astype(jnp.float32)              # [SEQ, n_out]
    o_ref[...] = _dot_at(sel, z)                                             # [n_out, D]


# -------------------------------- parameters ----------------------------------
def init_params(key):
    keys = iter(jax.random.split(key, 64))

    def nrm(shape, scale=0.05):
        return scale * jax.random.normal(next(keys), shape, dtype=jnp.float32)

    params = {
        'node_embedding': nrm((NUM_NODES_EMB, DIM_EMB), 1.0),          # nn.Embedding
        'lin_pe_w': nrm((IN_DIM_PE, IN_DIM_PE)),                       # nn.Linear
        'lin_pe_b': nrm((IN_DIM_PE,)),
        'lin_input_w': nrm((DIM_EMB, DIM_EMB + IN_DIM_PE)),            # nn.Linear
        'lin_input_b': nrm((DIM_EMB,)),
        'norm_w': jnp.ones((DIM_EMB,), jnp.float32),                   # final LayerNorm
        'norm_b': jnp.zeros((DIM_EMB,), jnp.float32),
        'layers': [],
    }
    for _ in range(NUM_LAYERS_TRSF):
        params['layers'].append({
            'wqkv': nrm((3 * DIM_EMB, DIM_EMB)),
            'bqkv': nrm((3 * DIM_EMB,)),
            'wo': nrm((DIM_EMB, DIM_EMB)),
            'bo': nrm((DIM_EMB,)),
            'w1': nrm((DIM_FEEDFORWARD, DIM_EMB)),
            'b1': nrm((DIM_FEEDFORWARD,)),
            'w2': nrm((DIM_EMB, DIM_FEEDFORWARD)),
            'b2': nrm((DIM_EMB,)),
            'ln1_w': jnp.ones((DIM_EMB,), jnp.float32),
            'ln1_b': jnp.zeros((DIM_EMB,), jnp.float32),
            'ln2_w': jnp.ones((DIM_EMB,), jnp.float32),
            'ln2_b': jnp.zeros((DIM_EMB,), jnp.float32),
        })
    return params


def prepare_params(params):
    """One-time prep: pre-transpose / per-head split / scale-fold every weight and
    pack everything into ONE f32 slab (single HBM->VMEM DMA per forward call)."""
    scale = 1.0 / (DH ** 0.5)
    slab = np.zeros((SLAB_ROWS, SLAB_COLS), np.float32)

    def put(name, arr):
        arr = np.asarray(arr, np.float32)
        if arr.ndim == 1:
            arr = arr.reshape(1, -1)
        off, r, c = LAYOUT[name]
        assert arr.shape == (r, c), (name, arr.shape, (r, c))
        slab[off:off + r, :c] = arr

    put('tokens', np.tile(np.asarray(params['node_embedding']), (WINDOW, 1)))
    put('lin_pe_w', np.asarray(params['lin_pe_w']).T)
    put('lin_pe_b', params['lin_pe_b'])
    lin_in_w = np.asarray(params['lin_input_w'])
    put('w_tok', lin_in_w[:, :DIM_EMB].T)
    put('w_pe', lin_in_w[:, DIM_EMB:].T)
    put('lin_input_b', params['lin_input_b'])

    for l, lp in enumerate(params['layers']):
        wqkv = np.asarray(lp['wqkv'])
        bqkv = np.asarray(lp['bqkv'])
        wq, wk, wv = wqkv[:DIM_EMB], wqkv[DIM_EMB:2 * DIM_EMB], wqkv[2 * DIM_EMB:]
        bq, bv = bqkv[:DIM_EMB], bqkv[2 * DIM_EMB:]

        def head_stack(w):   # [D_out, D_in] -> [NHEAD*D_in, dh]; head h at rows h*D:(h+1)*D
            return np.concatenate([w[h * DH:(h + 1) * DH, :].T for h in range(NHEAD)], 0)

        put(f'wq{l}', head_stack(wq) * scale)               # 1/sqrt(dh) folded into Q
        put(f'bq{l}', bq.reshape(NHEAD, DH) * scale)
        put(f'wk{l}', head_stack(wk))                       # K bias exactly cancelled by softmax
        put(f'wv{l}', head_stack(wv))
        wo_t = np.asarray(lp['wo']).T
        put(f'wo{l}', wo_t)
        put(f'bo{l}', np.asarray(lp['bo']) + bv @ wo_t)     # V bias folded (softmax rows sum to 1)
        put(f'w1{l}', np.asarray(lp['w1']).T)
        put(f'b1{l}', lp['b1'])
        put(f'w2{l}', np.asarray(lp['w2']).T)
        put(f'b2{l}', lp['b2'])
        put(f'ln1w{l}', lp['ln1_w']); put(f'ln1b{l}', lp['ln1_b'])
        put(f'ln2w{l}', lp['ln2_w']); put(f'ln2b{l}', lp['ln2_b'])

    put('norm_w', params['norm_w'])
    put('norm_b', params['norm_b'])
    return jnp.asarray(slab)


# ---------------------------------- forward ------------------------------------
@jax.jit
def our_model_forward(slab, pe_pad, mask_idx_pad, train_idx):
    """slab:         [SLAB_ROWS, SLAB_COLS] packed weights (from prepare_params),
       pe_pad:       [MAX_N_SUPRA, IN_DIM_PE] zero-padded Laplacian PE,
       mask_idx_pad: [MAX_N_SUPRA] int32 sequence positions of those nodes (-1 padding),
       train_idx:    [n_train] int32 node indices.
       Returns final_emb [n_train, WINDOW, DIM_EMB]."""
    n_train = train_idx.shape[0]
    n_out = n_train * WINDOW
    width = max(MAX_N_SUPRA, n_out)

    mask_row = jnp.full((width,), -1, jnp.int32).at[:MAX_N_SUPRA].set(
        mask_idx_pad.astype(jnp.int32))
    # gather positions in (t, w) output order: pos[t*W + w] = w*NUM_NODES_EMB + train_idx[t]
    pos = (jnp.arange(WINDOW, dtype=jnp.int32)[None, :] * NUM_NODES_EMB
           + train_idx.astype(jnp.int32)[:, None]).reshape(-1)
    pos_row = jnp.full((width,), -1, jnp.int32).at[:n_out].set(pos)
    scalars = jnp.stack([mask_row, pos_row], axis=0)                    # [2, width] int32

    out2d = pl.pallas_call(
        fused_forward_kernel,
        out_shape=jax.ShapeDtypeStruct((n_out, DIM_EMB), jnp.float32),
        in_specs=[VMEM_SPEC, VMEM_SPEC, VMEM_SPEC],
        out_specs=VMEM_SPEC,
    )(scalars, pe_pad.astype(jnp.float32), slab)

    # contiguous reshape (bitcast, no extra HBM round trip)
    return out2d.reshape(n_train, WINDOW, DIM_EMB)


# ----------------------------------- main ---------------------------------------
if __name__ == "__main__":
    key = jax.random.PRNGKey(0)
    k_params, k_pe = jax.random.split(key, 2)
    params = init_params(k_params)
    slab = prepare_params(params)

    # TODO(synk): the supra-Laplacian eigen-decomposition (AddSupraLaplacianPE) and
    # torch_geometric graph plumbing have no Pallas equivalent; a deterministic PE
    # tensor + non-isolated-node mask stand in for its output.
    # TODO(synk): the infonce_loss / classifier branches of forward() reference
    # submodules (proj_u, proj_g, out, classifier, self.args) that are never defined
    # in __init__ (would crash in PyTorch), so only the embedding path is implemented.
    n_supra = 12                                           # non-isolated supra-nodes
    pe = jax.random.normal(k_pe, (n_supra, IN_DIM_PE), dtype=jnp.float32)
    mask_idx = jnp.arange(n_supra, dtype=jnp.int32)        # duplicate-free by construction
    train_idx = jnp.array([0, 2, 5, 7], dtype=jnp.int32)

    # pad to the static MAX_N_SUPRA OUTSIDE the jit -> one executable for any n_supra
    pe_pad = jnp.zeros((MAX_N_SUPRA, IN_DIM_PE), jnp.float32).at[:n_supra].set(pe)
    mask_pad = jnp.full((MAX_N_SUPRA,), -1, jnp.int32).at[:n_supra].set(mask_idx)

    final_emb = our_model_forward(slab, pe_pad, mask_pad, train_idx)
    final_emb = jax.block_until_ready(final_emb)
    assert final_emb.shape == (train_idx.shape[0], WINDOW, DIM_EMB)
    assert bool(jnp.all(jnp.isfinite(final_emb)))
    print("KERNEL_OK")
</pallas_src>

<mosaic_0001>
module attributes {stable_mosaic.version = 11 : i64} {
  func.func @fused_forward_kernel(%arg0: memref<2x16xi32, #tpu.memory_space<vmem>>, %arg1: memref<16x8xf32, #tpu.memory_space<vmem>>, %arg2: memref<1248x64xf32, #tpu.memory_space<vmem>>, %arg3: memref<8x32xf32, #tpu.memory_space<vmem>>) attributes {dimension_semantics = [], scalar_prefetch = 0 : i64, scratch_operands = 0 : i64, tpu.core_type = #tpu.core_type<tc>} {
    %c0 = arith.constant 0 : index
    %c0_0 = arith.constant 0 : index
    %0 = vector.load %arg1[%c0, %c0_0] : memref<16x8xf32, #tpu.memory_space<vmem>>, vector<16x8xf32>
    %c16 = arith.constant 16 : index
    %c0_1 = arith.constant 0 : index
    %1 = vector.load %arg2[%c16, %c0_1] : memref<1248x64xf32, #tpu.memory_space<vmem>>, vector<8x8xf32>
    %cst = arith.constant dense<0.000000e+00> : vector<16x8xf32>
    %2 = tpu.matmul %0, %1, %cst {dimension_numbers = #tpu.dot_dimension_numbers<[1], [0], [0], [1], [0, 0, 1, 1], [], []>} : vector<16x8xf32>, vector<8x8xf32>, vector<16x8xf32> -> vector<16x8xf32>
    %c24 = arith.constant 24 : index
    %c0_2 = arith.constant 0 : index
    %3 = vector.load %arg2[%c24, %c0_2] : memref<1248x64xf32, #tpu.memory_space<vmem>>, vector<1x8xf32>
    %4 = vector.broadcast %3 : vector<1x8xf32> to vector<16x8xf32>
    %5 = arith.addf %2, %4 : vector<16x8xf32>
    %6 = tpu.iota {dimensions = array<i32: 0>} : vector<16x16xi32>
    %c0_3 = arith.constant 0 : index
    %c0_4 = arith.constant 0 : index
    %7 = vector.load %arg0[%c0_3, %c0_4] : memref<2x16xi32, #tpu.memory_space<vmem>>, vector<1x16xi32>
    %8 = vector.broadcast %7 : vector<1x16xi32> to vector<16x16xi32>
    %9 = arith.cmpi eq, %6, %8 : vector<16x16xi32>
    %10 = arith.extui %9 : vector<16x16xi1> to vector<16x16xi32>
    %11 = arith.sitofp %10 : vector<16x16xi32> to vector<16x16xf32>
    %cst_5 = arith.constant dense<0.000000e+00> : vector<16x8xf32>
    %12 = tpu.matmul %11, %5, %cst_5 {dimension_numbers = #tpu.dot_dimension_numbers<[1], [0], [0], [1], [0, 0, 1, 1], [], []>} : vector<16x16xf32>, vector<16x8xf32>, vector<16x8xf32> -> vector<16x8xf32>
    %c0_6 = arith.constant 0 : index
    %c0_7 = arith.constant 0 : index
    %13 = vector.load %arg2[%c0_6, %c0_7] : memref<1248x64xf32, #tpu.memory_space<vmem>>, vector<16x32xf32>
    %c32 = arith.constant 32 : index
    %c0_8 = arith.constant 0 : index
    %14 = vector.load %arg2[%c32, %c0_8] : memref<1248x64xf32, #tpu.memory_space<vmem>>, vector<32x32xf32>
    %cst_9 = arith.constant dense<0.000000e+00> : vector<16x32xf32>
    %15 = tpu.matmul %13, %14, %cst_9 {dimension_numbers = #tpu.dot_dimension_numbers<[1], [0], [0], [1], [0, 0, 1, 1], [], []>} : vector<16x32xf32>, vector<32x32xf32>, vector<16x32xf32> -> vector<16x32xf32>
    %c64 = arith.constant 64 : index
    %c0_10 = arith.constant 0 : index
    %16 = vector.load %arg2[%c64, %c0_10] : memref<1248x64xf32, #tpu.memory_space<vmem>>, vector<8x32xf32>
    %cst_11 = arith.constant dense<0.000000e+00> : vector<16x32xf32>
    %17 = tpu.matmul %12, %16, %cst_11 {dimension_numbers = #tpu.dot_dimension_numbers<[1], [0], [0], [1], [0, 0, 1, 1], [], []>} : vector<16x8xf32>, vector<8x32xf32>, vector<16x32xf32> -> vector<16x32xf32>
    %18 = arith.addf %15, %17 : vector<16x32xf32>
    %c72 = arith.constant 72 : index
    %c0_12 = arith.constant 0 : index
    %19 = vector.load %arg2[%c72, %c0_12] : memref<1248x64xf32, #tpu.memory_space<vmem>>, vector<1x32xf32>
    %20 = vector.broadcast %19 : vector<1x32xf32> to vector<16x32xf32>
    %21 = arith.addf %18, %20 : vector<16x32xf32>
    %c504 = arith.constant 504 : index
    %c0_13 = arith.constant 0 : index
    %22 = vector.load %arg2[%c504, %c0_13] : memref<1248x64xf32, #tpu.memory_space<vmem>>, vector<1x32xf32>
    %c80 = arith.constant 80 : index
    %c0_14 = arith.constant 0 : index
    %23 = vector.load %arg2[%c80, %c0_14] : memref<1248x64xf32, #tpu.memory_space<vmem>>, vector<32x8xf32>
    %cst_15 = arith.constant dense<0.000000e+00> : vector<16x8xf32>
    %24 = tpu.matmul %21, %23, %cst_15 {dimension_numbers = #tpu.dot_dimension_numbers<[1], [0], [0], [1], [0, 0, 1, 1], [], []>} : vector<16x32xf32>, vector<32x8xf32>, vector<16x8xf32> -> vector<16x8xf32>
    %c208 = arith.constant 208 : index
    %c0_16 = arith.constant 0 : index
    %25 = vector.load %arg2[%c208, %c0_16] : memref<1248x64xf32, #tpu.memory_space<vmem>>, vector<1x8xf32>
    %26 = vector.broadcast %25 : vector<1x8xf32> to vector<16x8xf32>
    %27 = arith.addf %24, %26 : vector<16x8xf32>
    %c216 = arith.constant 216 : index
    %c0_17 = arith.constant 0 : index
    %28 = vector.load %arg2[%c216, %c0_17] : memref<1248x64xf32, #tpu.memory_space<vmem>>, vector<32x8xf32>
    %cst_18 = arith.constant dense<0.000000e+00> : vector<16x8xf32>
    %29 = tpu.matmul %21, %28, %cst_18 {dimension_numbers = #tpu.dot_dimension_numbers<[1], [0], [0], [1], [0, 0, 1, 1], [], []>} : vector<16x32xf32>, vector<32x8xf32>, vector<16x8xf32> -> vector<16x8xf32>
    %c344 = arith.constant 344 : index
    %c0_19 = arith.constant 0 : index
    %30 = vector.load %arg2[%c344, %c0_19] : memref<1248x64xf32, #tpu.memory_space<vmem>>, vector<32x8xf32>
    %cst_20 = arith.constant dense<0.000000e+00> : vector<16x8xf32>
    %31 = tpu.matmul %21, %30, %cst_20 {dimension_numbers = #tpu.dot_dimension_numbers<[1], [0], [0], [1], [0, 0, 1, 1], [], []>} : vector<16x32xf32>, vector<32x8xf32>, vector<16x8xf32> -> vector<16x8xf32>
    %cst_21 = arith.constant dense<0.000000e+00> : vector<16x16xf32>
    %32 = tpu.matmul %27, %29, %cst_21 {dimension_numbers = #tpu.dot_dimension_numbers<[1], [1], [0], [0], [0, 0, 1, 0], [], []>} : vector<16x8xf32>, vector<16x8xf32>, vector<16x16xf32> -> vector<16x16xf32>
    %cst_22 = arith.constant dense<0xFF800000> : vector<16xf32>
    %33 = vector.multi_reduction <maximumf>, %32, %cst_22 [1] : vector<16x16xf32> to vector<16xf32>
    %34 = vector.shape_cast %33 : vector<16xf32> to vector<16x1xf32>
    %35 = vector.broadcast %34 : vector<16x1xf32> to vector<16x16xf32>
    %36 = arith.subf %32, %35 : vector<16x16xf32>
    %37 = math.exp %36 : vector<16x16xf32>
    %cst_23 = arith.constant dense<0.000000e+00> : vector<16xf32>
    %38 = vector.multi_reduction <add>, %37, %cst_23 [1] : vector<16x16xf32> to vector<16xf32>
    %39 = vector.shape_cast %38 : vector<16xf32> to vector<16x1xf32>
    %40 = tpu.reciprocal %39 {approx = true} : vector<16x1xf32> -> vector<16x1xf32>
    %41 = vector.broadcast %40 : vector<16x1xf32> to vector<16x16xf32>
    %42 = arith.mulf %37, %41 : vector<16x16xf32>
    %cst_24 = arith.constant dense<0.000000e+00> : vector<16x8xf32>
    %43 = tpu.matmul %42, %31, %cst_24 {dimension_numbers = #tpu.dot_dimension_numbers<[1], [0], [0], [1], [0, 0, 1, 1], [], []>} : vector<16x16xf32>, vector<16x8xf32>, vector<16x8xf32> -> vector<16x8xf32>
    %c472 = arith.constant 472 : index
    %c0_25 = arith.constant 0 : index
    %44 = vector.load %arg2[%c472, %c0_25] : memref<1248x64xf32, #tpu.memory_space<vmem>>, vector<8x32xf32>
    %cst_26 = arith.constant dense<0.000000e+00> : vector<16x32xf32>
    %45 = tpu.matmul %43, %44, %cst_26 {dimension_numbers = #tpu.dot_dimension_numbers<[1], [0], [0], [1], [0, 0, 1, 1], [], []>} : vector<16x8xf32>, vector<8x32xf32>, vector<16x32xf32> -> vector<16x32xf32>
    %46 = vector.broadcast %22 : vector<1x32xf32> to vector<16x32xf32>
    %47 = arith.addf %46, %45 : vector<16x32xf32>
    %c112 = arith.constant 112 : index
    %c0_27 = arith.constant 0 : index
    %48 = vector.load %arg2[%c112, %c0_27] : memref<1248x64xf32, #tpu.memory_space<vmem>>, vector<32x8xf32>
    %cst_28 = arith.constant dense<0.000000e+00> : vector<16x8xf32>
    %49 = tpu.matmul %21, %48, %cst_28 {dimension_numbers = #tpu.dot_dimension_numbers<[1], [0], [0], [1], [0, 0, 1, 1], [], []>} : vector<16x32xf32>, vector<32x8xf32>, vector<16x8xf32> -> vector<16x8xf32>
    %c209 = arith.constant 209 : index
    %c0_29 = arith.constant 0 : index
    %50 = vector.load %arg2[%c209, %c0_29] : memref<1248x64xf32, #tpu.memory_space<vmem>>, vector<1x8xf32>
    %51 = vector.broadcast %50 : vector<1x8xf32> to vector<16x8xf32>
    %52 = arith.addf %49, %51 : vector<16x8xf32>
    %c248 = arith.constant 248 : index
    %c0_30 = arith.constant 0 : index
    %53 = vector.load %arg2[%c248, %c0_30] : memref<1248x64xf32, #tpu.memory_space<vmem>>, vector<32x8xf32>
    %cst_31 = arith.constant dense<0.000000e+00> : vector<16x8xf32>
    %54 = tpu.matmul %21, %53, %cst_31 {dimension_numbers = #tpu.dot_dimension_numbers<[1], [0], [0], [1], [0, 0, 1, 1], [], []>} : vector<16x32xf32>, vector<32x8xf32>, vector<16x8xf32> -> vector<16x8xf32>
    %c376 = arith.constant 376 : index
    %c0_32 = arith.constant 0 : index
    %55 = vector.load %arg2[%c376, %c0_32] : memref<1248x64xf32, #tpu.memory_space<vmem>>, vector<32x8xf32>
    %cst_33 = arith.constant dense<0.000000e+00> : vector<16x8xf32>
    %56 = tpu.matmul %21, %55, %cst_33 {dimension_numbers = #tpu.dot_dimension_numbers<[1], [0], [0], [1], [0, 0, 1, 1], [], []>} : vector<16x32xf32>, vector<32x8xf32>, vector<16x8xf32> -> vector<16x8xf32>
    %cst_34 = arith.constant dense<0.000000e+00> : vector<16x16xf32>
    %57 = tpu.matmul %52, %54, %cst_34 {dimension_numbers = #tpu.dot_dimension_numbers<[1], [1], [0], [0], [0, 0, 1, 0], [], []>} : vector<16x8xf32>, vector<16x8xf32>, vector<16x16xf32> -> vector<16x16xf32>
    %cst_35 = arith.constant dense<0xFF800000> : vector<16xf32>
    %58 = vector.multi_reduction <maximumf>, %57, %cst_35 [1] : vector<16x16xf32> to vector<16xf32>
    %59 = vector.shape_cast %58 : vector<16xf32> to vector<16x1xf32>
    %60 = vector.broadcast %59 : vector<16x1xf32> to vector<16x16xf32>
    %61 = arith.subf %57, %60 : vector<16x16xf32>
    %62 = math.exp %61 : vector<16x16xf32>
    %cst_36 = arith.constant dense<0.000000e+00> : vector<16xf32>
    %63 = vector.multi_reduction <add>, %62, %cst_36 [1] : vector<16x16xf32> to vector<16xf32>
    %64 = vector.shape_cast %63 : vector<16xf32> to vector<16x1xf32>
    %65 = tpu.reciprocal %64 {approx = true} : vector<16x1xf32> -> vector<16x1xf32>
    %66 = vector.broadcast %65 : vector<16x1xf32> to vector<16x16xf32>
    %67 = arith.mulf %62, %66 : vector<16x16xf32>
    %cst_37 = arith.constant dense<0.000000e+00> : vector<16x8xf32>
    %68 = tpu.matmul %67, %56, %cst_37 {dimension_numbers = #tpu.dot_dimension_numbers<[1], [0], [0], [1], [0, 0, 1, 1], [], []>} : vector<16x16xf32>, vector<16x8xf32>, vector<16x8xf32> -> vector<16x8xf32>
    %c480 = arith.constant 480 : index
    %c0_38 = arith.constant 0 : index
    %69 = vector.load %arg2[%c480, %c0_38] : memref<1248x64xf32, #tpu.memory_space<vmem>>, vector<8x32xf32>
    %cst_39 = arith.constant dense<0.000000e+00> : vector<16x32xf32>
    %70 = tpu.matmul %68, %69, %cst_39 {dimension_numbers = #tpu.dot_dimension_numbers<[1], [0], [0], [1], [0, 0, 1, 1], [], []>} : vector<16x8xf32>, vector<8x32xf32>, vector<16x32xf32> -> vector<16x32xf32>
    %71 = arith.addf %47, %70 : vector<16x32xf32>
    %c144 = arith.constant 144 : index
    %c0_40 = arith.constant 0 : index
    %72 = vector.load %arg2[%c144, %c0_40] : memref<1248x64xf32, #tpu.memory_space<vmem>>, vector<32x8xf32>
    %cst_41 = arith.constant dense<0.000000e+00> : vector<16x8xf32>
    %73 = tpu.matmul %21, %72, %cst_41 {dimension_numbers = #tpu.dot_dimension_numbers<[1], [0], [0], [1], [0, 0, 1, 1], [], []>} : vector<16x32xf32>, vector<32x8xf32>, vector<16x8xf32> -> vector<16x8xf32>
    %c210 = arith.constant 210 : index
    %c0_42 = arith.constant 0 : index
    %74 = vector.load %arg2[%c210, %c0_42] : memref<1248x64xf32, #tpu.memory_space<vmem>>, vector<1x8xf32>
    %75 = vector.broadcast %74 : vector<1x8xf32> to vector<16x8xf32>
    %76 = arith.addf %73, %75 : vector<16x8xf32>
    %c280 = arith.constant 280 : index
    %c0_43 = arith.constant 0 : index
    %77 = vector.load %arg2[%c280, %c0_43] : memref<1248x64xf32, #tpu.memory_space<vmem>>, vector<32x8xf32>
    %cst_44 = arith.constant dense<0.000000e+00> : vector<16x8xf32>
    %78 = tpu.matmul %21, %77, %cst_44 {dimension_numbers = #tpu.dot_dimension_numbers<[1], [0], [0], [1], [0, 0, 1, 1], [], []>} : vector<16x32xf32>, vector<32x8xf32>, vector<16x8xf32> -> vector<16x8xf32>
    %c408 = arith.constant 408 : index
    %c0_45 = arith.constant 0 : index
    %79 = vector.load %arg2[%c408, %c0_45] : memref<1248x64xf32, #tpu.memory_space<vmem>>, vector<32x8xf32>
    %cst_46 = arith.constant dense<0.000000e+00> : vector<16x8xf32>
    %80 = tpu.matmul %21, %79, %cst_46 {dimension_numbers = #tpu.dot_dimension_numbers<[1], [0], [0], [1], [0, 0, 1, 1], [], []>} : vector<16x32xf32>, vector<32x8xf32>, vector<16x8xf32> -> vector<16x8xf32>
    %cst_47 = arith.constant dense<0.000000e+00> : vector<16x16xf32>
    %81 = tpu.matmul %76, %78, %cst_47 {dimension_numbers = #tpu.dot_dimension_numbers<[1], [1], [0], [0], [0, 0, 1, 0], [], []>} : vector<16x8xf32>, vector<16x8xf32>, vector<16x16xf32> -> vector<16x16xf32>
    %cst_48 = arith.constant dense<0xFF800000> : vector<16xf32>
    %82 = vector.multi_reduction <maximumf>, %81, %cst_48 [1] : vector<16x16xf32> to vector<16xf32>
    %83 = vector.shape_cast %82 : vector<16xf32> to vector<16x1xf32>
    %84 = vector.broadcast %83 : vector<16x1xf32> to vector<16x16xf32>
    %85 = arith.subf %81, %84 : vector<16x16xf32>
    %86 = math.exp %85 : vector<16x16xf32>
    %cst_49 = arith.constant dense<0.000000e+00> : vector<16xf32>
    %87 = vector.multi_reduction <add>, %86, %cst_49 [1] : vector<16x16xf32> to vector<16xf32>
    %88 = vector.shape_cast %87 : vector<16xf32> to vector<16x1xf32>
    %89 = tpu.reciprocal %88 {approx = true} : vector<16x1xf32> -> vector<16x1xf32>
    %90 = vector.broadcast %89 : vector<16x1xf32> to vector<16x16xf32>
    %91 = arith.mulf %86, %90 : vector<16x16xf32>
    %cst_50 = arith.constant dense<0.000000e+00> : vector<16x8xf32>
    %92 = tpu.matmul %91, %80, %cst_50 {dimension_numbers = #tpu.dot_dimension_numbers<[1], [0], [0], [1], [0, 0, 1, 1], [], []>} : vector<16x16xf32>, vector<16x8xf32>, vector<16x8xf32> -> vector<16x8xf32>
    %c488 = arith.constant 488 : index
    %c0_51 = arith.constant 0 : index
    %93 = vector.load %arg2[%c488, %c0_51] : memref<1248x64xf32, #tpu.memory_space<vmem>>, vector<8x32xf32>
    %cst_52 = arith.constant dense<0.000000e+00> : vector<16x32xf32>
    %94 = tpu.matmul %92, %93, %cst_52 {dimension_numbers = #tpu.dot_dimension_numbers<[1], [0], [0], [1], [0, 0, 1, 1], [], []>} : vector<16x8xf32>, vector<8x32xf32>, vector<16x32xf32> -> vector<16x32xf32>
    %95 = arith.addf %71, %94 : vector<16x32xf32>
    %c176 = arith.constant 176 : index
    %c0_53 = arith.constant 0 : index
    %96 = vector.load %arg2[%c176, %c0_53] : memref<1248x64xf32, #tpu.memory_space<vmem>>, vector<32x8xf32>
    %cst_54 = arith.constant dense<0.000000e+00> : vector<16x8xf32>
    %97 = tpu.matmul %21, %96, %cst_54 {dimension_numbers = #tpu.dot_dimension_numbers<[1], [0], [0], [1], [0, 0, 1, 1], [], []>} : vector<16x32xf32>, vector<32x8xf32>, vector<16x8xf32> -> vector<16x8xf32>
    %c211 = arith.constant 211 : index
    %c0_55 = arith.constant 0 : index
    %98 = vector.load %arg2[%c211, %c0_55] : memref<1248x64xf32, #tpu.memory_space<vmem>>, vector<1x8xf32>
    %99 = vector.broadcast %98 : vector<1x8xf32> to vector<16x8xf32>
    %100 = arith.addf %97, %99 : vector<16x8xf32>
    %c312 = arith.constant 312 : index
    %c0_56 = arith.constant 0 : index
    %101 = vector.load %arg2[%c312, %c0_56] : memref<1248x64xf32, #tpu.memory_space<vmem>>, vector<32x8xf32>
    %cst_57 = arith.constant dense<0.000000e+00> : vector<16x8xf32>
    %102 = tpu.matmul %21, %101, %cst_57 {dimension_numbers = #tpu.dot_dimension_numbers<[1], [0], [0], [1], [0, 0, 1, 1], [], []>} : vector<16x32xf32>, vector<32x8xf32>, vector<16x8xf32> -> vector<16x8xf32>
    %c440 = arith.constant 440 : index
    %c0_58 = arith.constant 0 : index
    %103 = vector.load %arg2[%c440, %c0_58] : memref<1248x64xf32, #tpu.memory_space<vmem>>, vector<32x8xf32>
    %cst_59 = arith.constant dense<0.000000e+00> : vector<16x8xf32>
    %104 = tpu.matmul %21, %103, %cst_59 {dimension_numbers = #tpu.dot_dimension_numbers<[1], [0], [0], [1], [0, 0, 1, 1], [], []>} : vector<16x32xf32>, vector<32x8xf32>, vector<16x8xf32> -> vector<16x8xf32>
    %cst_60 = arith.constant dense<0.000000e+00> : vector<16x16xf32>
    %105 = tpu.matmul %100, %102, %cst_60 {dimension_numbers = #tpu.dot_dimension_numbers<[1], [1], [0], [0], [0, 0, 1, 0], [], []>} : vector<16x8xf32>, vector<16x8xf32>, vector<16x16xf32> -> vector<16x16xf32>
    %cst_61 = arith.constant dense<0xFF800000> : vector<16xf32>
    %106 = vector.multi_reduction <maximumf>, %105, %cst_61 [1] : vector<16x16xf32> to vector<16xf32>
    %107 = vector.shape_cast %106 : vector<16xf32> to vector<16x1xf32>
    %108 = vector.broadcast %107 : vector<16x1xf32> to vector<16x16xf32>
    %109 = arith.subf %105, %108 : vector<16x16xf32>
    %110 = math.exp %109 : vector<16x16xf32>
    %cst_62 = arith.constant dense<0.000000e+00> : vector<16xf32>
    %111 = vector.multi_reduction <add>, %110, %cst_62 [1] : vector<16x16xf32> to vector<16xf32>
    %112 = vector.shape_cast %111 : vector<16xf32> to vector<16x1xf32>
    %113 = tpu.reciprocal %112 {approx = true} : vector<16x1xf32> -> vector<16x1xf32>
    %114 = vector.broadcast %113 : vector<16x1xf32> to vector<16x16xf32>
    %115 = arith.mulf %110, %114 : vector<16x16xf32>
    %cst_63 = arith.constant dense<0.000000e+00> : vector<16x8xf32>
    %116 = tpu.matmul %115, %104, %cst_63 {dimension_numbers = #tpu.dot_dimension_numbers<[1], [0], [0], [1], [0, 0, 1, 1], [], []>} : vector<16x16xf32>, vector<16x8xf32>, vector<16x8xf32> -> vector<16x8xf32>
    %c496 = arith.constant 496 : index
    %c0_64 = arith.constant 0 : index
    %117 = vector.load %arg2[%c496, %c0_64] : memref<1248x64xf32, #tpu.memory_space<vmem>>, vector<8x32xf32>
    %cst_65 = arith.constant dense<0.000000e+00> : vector<16x32xf32>
    %118 = tpu.matmul %116, %117, %cst_65 {dimension_numbers = #tpu.dot_dimension_numbers<[1], [0], [0], [1], [0, 0, 1, 1], [], []>} : vector<16x8xf32>, vector<8x32xf32>, vector<16x32xf32> -> vector<16x32xf32>
    %119 = arith.addf %95, %118 : vector<16x32xf32>
    %120 = arith.addf %21, %119 : vector<16x32xf32>
    %c624 = arith.constant 624 : index
    %c0_66 = arith.constant 0 : index
    %121 = vector.load %arg2[%c624, %c0_66] : memref<1248x64xf32, #tpu.memory_space<vmem>>, vector<1x32xf32>
    %c632 = arith.constant 632 : index
    %c0_67 = arith.constant 0 : index
    %122 = vector.load %arg2[%c632, %c0_67] : memref<1248x64xf32, #tpu.memory_space<vmem>>, vector<1x32xf32>
    %cst_68 = arith.constant dense<0.000000e+00> : vector<16xf32>
    %123 = vector.multi_reduction <add>, %120, %cst_68 [1] : vector<16x32xf32> to vector<16xf32>
    %124 = vector.shape_cast %123 : vector<16xf32> to vector<16x1xf32>
    %cst_69 = arith.constant 3.200000e+01 : f32
    %125 = vector.broadcast %cst_69 : f32 to vector<16x1xf32>
    %126 = arith.divf %124, %125 : vector<16x1xf32>
    %127 = vector.broadcast %126 : vector<16x1xf32> to vector<16x32xf32>
    %128 = arith.subf %120, %127 : vector<16x32xf32>
    %129 = arith.mulf %128, %128 : vector<16x32xf32>
    %cst_70 = arith.constant dense<0.000000e+00> : vector<16xf32>
    %130 = vector.multi_reduction <add>, %129, %cst_70 [1] : vector<16x32xf32> to vector<16xf32>
    %131 = vector.shape_cast %130 : vector<16xf32> to vector<16x1xf32>
    %cst_71 = arith.constant 3.200000e+01 : f32
    %132 = vector.broadcast %cst_71 : f32 to vector<16x1xf32>
    %133 = arith.divf %131, %132 : vector<16x1xf32>
    %134 = vector.broadcast %126 : vector<16x1xf32> to vector<16x32xf32>
    %135 = arith.subf %120, %134 : vector<16x32xf32>
    %cst_72 = arith.constant 9.99999974E-6 : f32
    %136 = vector.broadcast %cst_72 : f32 to vector<16x1xf32>
    %137 = arith.addf %133, %136 : vector<16x1xf32>
    %138 = math.rsqrt %137 : vector<16x1xf32>
    %139 = vector.broadcast %138 : vector<16x1xf32> to vector<16x32xf32>
    %140 = arith.mulf %135, %139 : vector<16x32xf32>
    %141 = vector.broadcast %121 : vector<1x32xf32> to vector<16x32xf32>
    %142 = arith.mulf %140, %141 : vector<16x32xf32>
    %143 = vector.broadcast %122 : vector<1x32xf32> to vector<16x32xf32>
    %144 = arith.addf %142, %143 : vector<16x32xf32>
    %c512 = arith.constant 512 : index
    %c0_73 = arith.constant 0 : index
    %145 = vector.load %arg2[%c512, %c0_73] : memref<1248x64xf32, #tpu.memory_space<vmem>>, vector<32x64xf32>
    %cst_74 = arith.constant dense<0.000000e+00> : vector<16x64xf32>
    %146 = tpu.matmul %144, %145, %cst_74 {dimension_numbers = #tpu.dot_dimension_numbers<[1], [0], [0], [1], [0, 0, 1, 1], [], []>} : vector<16x32xf32>, vector<32x64xf32>, vector<16x64xf32> -> vector<16x64xf32>
    %c544 = arith.constant 544 : index
    %c0_75 = arith.constant 0 : index
    %147 = vector.load %arg2[%c544, %c0_75] : memref<1248x64xf32, #tpu.memory_space<vmem>>, vector<1x64xf32>
    %148 = vector.broadcast %147 : vector<1x64xf32> to vector<16x64xf32>
    %149 = arith.addf %146, %148 : vector<16x64xf32>
    %cst_76 = arith.constant 0.000000e+00 : f32
    %150 = vector.broadcast %cst_76 : f32 to vector<16x64xf32>
    %151 = arith.maximumf %149, %150 : vector<16x64xf32>
    %c552 = arith.constant 552 : index
    %c0_77 = arith.constant 0 : index
    %152 = vector.load %arg2[%c552, %c0_77] : memref<1248x64xf32, #tpu.memory_space<vmem>>, vector<64x32xf32>
    %cst_78 = arith.constant dense<0.000000e+00> : vector<16x32xf32>
    %153 = tpu.matmul %151, %152, %cst_78 {dimension_numbers = #tpu.dot_dimension_numbers<[1], [0], [0], [1], [0, 0, 1, 1], [], []>} : vector<16x64xf32>, vector<64x32xf32>, vector<16x32xf32> -> vector<16x32xf32>
    %c616 = arith.constant 616 : index
    %c0_79 = arith.constant 0 : index
    %154 = vector.load %arg2[%c616, %c0_79] : memref<1248x64xf32, #tpu.memory_space<vmem>>, vector<1x32xf32>
    %155 = vector.broadcast %154 : vector<1x32xf32> to vector<16x32xf32>
    %156 = arith.addf %153, %155 : vector<16x32xf32>
    %157 = arith.addf %144, %156 : vector<16x32xf32>
    %c640 = arith.constant 640 : index
    %c0_80 = arith.constant 0 : index
    %158 = vector.load %arg2[%c640, %c0_80] : memref<1248x64xf32, #tpu.memory_space<vmem>>, vector<1x32xf32>
    %c648 = arith.constant 648 : index
    %c0_81 = arith.constant 0 : index
    %159 = vector.load %arg2[%c648, %c0_81] : memref<1248x64xf32, #tpu.memory_space<vmem>>, vector<1x32xf32>
    %cst_82 = arith.constant dense<0.000000e+00> : vector<16xf32>
    %160 = vector.multi_reduction <add>, %157, %cst_82 [1] : vector<16x32xf32> to vector<16xf32>
    %161 = vector.shape_cast %160 : vector<16xf32> to vector<16x1xf32>
    %cst_83 = arith.constant 3.200000e+01 : f32
    %162 = vector.broadcast %cst_83 : f32 to vector<16x1xf32>
    %163 = arith.divf %161, %162 : vector<16x1xf32>
    %164 = vector.broadcast %163 : vector<16x1xf32> to vector<16x32xf32>
    %165 = arith.subf %157, %164 : vector<16x32xf32>
    %166 = arith.mulf %165, %165 : vector<16x32xf32>
    %cst_84 = arith.constant dense<0.000000e+00> : vector<16xf32>
    %167 = vector.multi_reduction <add>, %166, %cst_84 [1] : vector<16x32xf32> to vector<16xf32>
    %168 = vector.shape_cast %167 : vector<16xf32> to vector<16x1xf32>
    %cst_85 = arith.constant 3.200000e+01 : f32
    %169 = vector.broadcast %cst_85 : f32 to vector<16x1xf32>
    %170 = arith.divf %168, %169 : vector<16x1xf32>
    %171 = vector.broadcast %163 : vector<16x1xf32> to vector<16x32xf32>
    %172 = arith.subf %157, %171 : vector<16x32xf32>
    %cst_86 = arith.constant 9.99999974E-6 : f32
    %173 = vector.broadcast %cst_86 : f32 to vector<16x1xf32>
    %174 = arith.addf %170, %173 : vector<16x1xf32>
    %175 = math.rsqrt %174 : vector<16x1xf32>
    %176 = vector.broadcast %175 : vector<16x1xf32> to vector<16x32xf32>
    %177 = arith.mulf %172, %176 : vector<16x32xf32>
    %178 = vector.broadcast %158 : vector<1x32xf32> to vector<16x32xf32>
    %179 = arith.mulf %177, %178 : vector<16x32xf32>
    %180 = vector.broadcast %159 : vector<1x32xf32> to vector<16x32xf32>
    %181 = arith.addf %179, %180 : vector<16x32xf32>
    %c1080 = arith.constant 1080 : index
    %c0_87 = arith.constant 0 : index
    %182 = vector.load %arg2[%c1080, %c0_87] : memref<1248x64xf32, #tpu.memory_space<vmem>>, vector<1x32xf32>
    %c656 = arith.constant 656 : index
    %c0_88 = arith.constant 0 : index
    %183 = vector.load %arg2[%c656, %c0_88] : memref<1248x64xf32, #tpu.memory_space<vmem>>, vector<32x8xf32>
    %cst_89 = arith.constant dense<0.000000e+00> : vector<16x8xf32>
    %184 = tpu.matmul %181, %183, %cst_89 {dimension_numbers = #tpu.dot_dimension_numbers<[1], [0], [0], [1], [0, 0, 1, 1], [], []>} : vector<16x32xf32>, vector<32x8xf32>, vector<16x8xf32> -> vector<16x8xf32>
    %c784 = arith.constant 784 : index
    %c0_90 = arith.constant 0 : index
    %185 = vector.load %arg2[%c784, %c0_90] : memref<1248x64xf32, #tpu.memory_space<vmem>>, vector<1x8xf32>
    %186 = vector.broadcast %185 : vector<1x8xf32> to vector<16x8xf32>
    %187 = arith.addf %184, %186 : vector<16x8xf32>
    %c792 = arith.constant 792 : index
    %c0_91 = arith.constant 0 : index
    %188 = vector.load %arg2[%c792, %c0_91] : memref<1248x64xf32, #tpu.memory_space<vmem>>, vector<32x8xf32>
    %cst_92 = arith.constant dense<0.000000e+00> : vector<16x8xf32>
    %189 = tpu.matmul %181, %188, %cst_92 {dimension_numbers = #tpu.dot_dimension_numbers<[1], [0], [0], [1], [0, 0, 1, 1], [], []>} : vector<16x32xf32>, vector<32x8xf32>, vector<16x8xf32> -> vector<16x8xf32>
    %c920 = arith.constant 920 : index
    %c0_93 = arith.constant 0 : index
    %190 = vector.load %arg2[%c920, %c0_93] : memref<1248x64xf32, #tpu.memory_space<vmem>>, vector<32x8xf32>
    %cst_94 = arith.constant dense<0.000000e+00> : vector<16x8xf32>
    %191 = tpu.matmul %181, %190, %cst_94 {dimension_numbers = #tpu.dot_dimension_numbers<[1], [0], [0], [1], [0, 0, 1, 1], [], []>} : vector<16x32xf32>, vector<32x8xf32>, vector<16x8xf32> -> vector<16x8xf32>
    %cst_95 = arith.constant dense<0.000000e+00> : vector<16x16xf32>
    %192 = tpu.matmul %187, %189, %cst_95 {dimension_numbers = #tpu.dot_dimension_numbers<[1], [1], [0], [0], [0, 0, 1, 0], [], []>} : vector<16x8xf32>, vector<16x8xf32>, vector<16x16xf32> -> vector<16x16xf32>
    %cst_96 = arith.constant dense<0xFF800000> : vector<16xf32>
    %193 = vector.multi_reduction <maximumf>, %192, %cst_96 [1] : vector<16x16xf32> to vector<16xf32>
    %194 = vector.shape_cast %193 : vector<16xf32> to vector<16x1xf32>
    %195 = vector.broadcast %194 : vector<16x1xf32> to vector<16x16xf32>
    %196 = arith.subf %192, %195 : vector<16x16xf32>
    %197 = math.exp %196 : vector<16x16xf32>
    %cst_97 = arith.constant dense<0.000000e+00> : vector<16xf32>
    %198 = vector.multi_reduction <add>, %197, %cst_97 [1] : vector<16x16xf32> to vector<16xf32>
    %199 = vector.shape_cast %198 : vector<16xf32> to vector<16x1xf32>
    %200 = tpu.reciprocal %199 {approx = true} : vector<16x1xf32> -> vector<16x1xf32>
    %201 = vector.broadcast %200 : vector<16x1xf32> to vector<16x16xf32>
    %202 = arith.mulf %197, %201 : vector<16x16xf32>
    %cst_98 = arith.constant dense<0.000000e+00> : vector<16x8xf32>
    %203 = tpu.matmul %202, %191, %cst_98 {dimension_numbers = #tpu.dot_dimension_numbers<[1], [0], [0], [1], [0, 0, 1, 1], [], []>} : vector<16x16xf32>, vector<16x8xf32>, vector<16x8xf32> -> vector<16x8xf32>
    %c1048 = arith.constant 1048 : index
    %c0_99 = arith.constant 0 : index
    %204 = vector.load %arg2[%c1048, %c0_99] : memref<1248x64xf32, #tpu.memory_space<vmem>>, vector<8x32xf32>
    %cst_100 = arith.constant dense<0.000000e+00> : vector<16x32xf32>
    %205 = tpu.matmul %203, %204, %cst_100 {dimension_numbers = #tpu.dot_dimension_numbers<[1], [0], [0], [1], [0, 0, 1, 1], [], []>} : vector<16x8xf32>, vector<8x32xf32>, vector<16x32xf32> -> vector<16x32xf32>
    %206 = vector.broadcast %182 : vector<1x32xf32> to vector<16x32xf32>
    %207 = arith.addf %206, %205 : vector<16x32xf32>
    %c688 = arith.constant 688 : index
    %c0_101 = arith.constant 0 : index
    %208 = vector.load %arg2[%c688, %c0_101] : memref<1248x64xf32, #tpu.memory_space<vmem>>, vector<32x8xf32>
    %cst_102 = arith.constant dense<0.000000e+00> : vector<16x8xf32>
    %209 = tpu.matmul %181, %208, %cst_102 {dimension_numbers = #tpu.dot_dimension_numbers<[1], [0], [0], [1], [0, 0, 1, 1], [], []>} : vector<16x32xf32>, vector<32x8xf32>, vector<16x8xf32> -> vector<16x8xf32>
    %c785 = arith.constant 785 : index
    %c0_103 = arith.constant 0 : index
    %210 = vector.load %arg2[%c785, %c0_103] : memref<1248x64xf32, #tpu.memory_space<vmem>>, vector<1x8xf32>
    %211 = vector.broadcast %210 : vector<1x8xf32> to vector<16x8xf32>
    %212 = arith.addf %209, %211 : vector<16x8xf32>
    %c824 = arith.constant 824 : index
    %c0_104 = arith.constant 0 : index
    %213 = vector.load %arg2[%c824, %c0_104] : memref<1248x64xf32, #tpu.memory_space<vmem>>, vector<32x8xf32>
    %cst_105 = arith.constant dense<0.000000e+00> : vector<16x8xf32>
    %214 = tpu.matmul %181, %213, %cst_105 {dimension_numbers = #tpu.dot_dimension_numbers<[1], [0], [0], [1], [0, 0, 1, 1], [], []>} : vector<16x32xf32>, vector<32x8xf32>, vector<16x8xf32> -> vector<16x8xf32>
    %c952 = arith.constant 952 : index
    %c0_106 = arith.constant 0 : index
    %215 = vector.load %arg2[%c952, %c0_106] : memref<1248x64xf32, #tpu.memory_space<vmem>>, vector<32x8xf32>
    %cst_107 = arith.constant dense<0.000000e+00> : vector<16x8xf32>
    %216 = tpu.matmul %181, %215, %cst_107 {dimension_numbers = #tpu.dot_dimension_numbers<[1], [0], [0], [1], [0, 0, 1, 1], [], []>} : vector<16x32xf32>, vector<32x8xf32>, vector<16x8xf32> -> vector<16x8xf32>
    %cst_108 = arith.constant dense<0.000000e+00> : vector<16x16xf32>
    %217 = tpu.matmul %212, %214, %cst_108 {dimension_numbers = #tpu.dot_dimension_numbers<[1], [1], [0], [0], [0, 0, 1, 0], [], []>} : vector<16x8xf32>, vector<16x8xf32>, vector<16x16xf32> -> vector<16x16xf32>
    %cst_109 = arith.constant dense<0xFF800000> : vector<16xf32>
    %218 = vector.multi_reduction <maximumf>, %217, %cst_109 [1] : vector<16x16xf32> to vector<16xf32>
    %219 = vector.shape_cast %218 : vector<16xf32> to vector<16x1xf32>
    %220 = vector.broadcast %219 : vector<16x1xf32> to vector<16x16xf32>
    %221 = arith.subf %217, %220 : vector<16x16xf32>
    %222 = math.exp %221 : vector<16x16xf32>
    %cst_110 = arith.constant dense<0.000000e+00> : vector<16xf32>
    %223 = vector.multi_reduction <add>, %222, %cst_110 [1] : vector<16x16xf32> to vector<16xf32>
    %224 = vector.shape_cast %223 : vector<16xf32> to vector<16x1xf32>
    %225 = tpu.reciprocal %224 {approx = true} : vector<16x1xf32> -> vector<16x1xf32>
    %226 = vector.broadcast %225 : vector<16x1xf32> to vector<16x16xf32>
    %227 = arith.mulf %222, %226 : vector<16x16xf32>
    %cst_111 = arith.constant dense<0.000000e+00> : vector<16x8xf32>
    %228 = tpu.matmul %227, %216, %cst_111 {dimension_numbers = #tpu.dot_dimension_numbers<[1], [0], [0], [1], [0, 0, 1, 1], [], []>} : vector<16x16xf32>, vector<16x8xf32>, vector<16x8xf32> -> vector<16x8xf32>
    %c1056 = arith.constant 1056 : index
    %c0_112 = arith.constant 0 : index
    %229 = vector.load %arg2[%c1056, %c0_112] : memref<1248x64xf32, #tpu.memory_space<vmem>>, vector<8x32xf32>
    %cst_113 = arith.constant dense<0.000000e+00> : vector<16x32xf32>
    %230 = tpu.matmul %228, %229, %cst_113 {dimension_numbers = #tpu.dot_dimension_numbers<[1], [0], [0], [1], [0, 0, 1, 1], [], []>} : vector<16x8xf32>, vector<8x32xf32>, vector<16x32xf32> -> vector<16x32xf32>
    %231 = arith.addf %207, %230 : vector<16x32xf32>
    %c720 = arith.constant 720 : index
    %c0_114 = arith.constant 0 : index
    %232 = vector.load %arg2[%c720, %c0_114] : memref<1248x64xf32, #tpu.memory_space<vmem>>, vector<32x8xf32>
    %cst_115 = arith.constant dense<0.000000e+00> : vector<16x8xf32>
    %233 = tpu.matmul %181, %232, %cst_115 {dimension_numbers = #tpu.dot_dimension_numbers<[1], [0], [0], [1], [0, 0, 1, 1], [], []>} : vector<16x32xf32>, vector<32x8xf32>, vector<16x8xf32> -> vector<16x8xf32>
    %c786 = arith.constant 786 : index
    %c0_116 = arith.constant 0 : index
    %234 = vector.load %arg2[%c786, %c0_116] : memref<1248x64xf32, #tpu.memory_space<vmem>>, vector<1x8xf32>
    %235 = vector.broadcast %234 : vector<1x8xf32> to vector<16x8xf32>
    %236 = arith.addf %233, %235 : vector<16x8xf32>
    %c856 = arith.constant 856 : index
    %c0_117 = arith.constant 0 : index
    %237 = vector.load %arg2[%c856, %c0_117] : memref<1248x64xf32, #tpu.memory_space<vmem>>, vector<32x8xf32>
    %cst_118 = arith.constant dense<0.000000e+00> : vector<16x8xf32>
    %238 = tpu.matmul %181, %237, %cst_118 {dimension_numbers = #tpu.dot_dimension_numbers<[1], [0], [0], [1], [0, 0, 1, 1], [], []>} : vector<16x32xf32>, vector<32x8xf32>, vector<16x8xf32> -> vector<16x8xf32>
    %c984 = arith.constant 984 : index
    %c0_119 = arith.constant 0 : index
    %239 = vector.load %arg2[%c984, %c0_119] : memref<1248x64xf32, #tpu.memory_space<vmem>>, vector<32x8xf32>
    %cst_120 = arith.constant dense<0.000000e+00> : vector<16x8xf32>
    %240 = tpu.matmul %181, %239, %cst_120 {dimension_numbers = #tpu.dot_dimension_numbers<[1], [0], [0], [1], [0, 0, 1, 1], [], []>} : vector<16x32xf32>, vector<32x8xf32>, vector<16x8xf32> -> vector<16x8xf32>
    %cst_121 = arith.constant dense<0.000000e+00> : vector<16x16xf32>
    %241 = tpu.matmul %236, %238, %cst_121 {dimension_numbers = #tpu.dot_dimension_numbers<[1], [1], [0], [0], [0, 0, 1, 0], [], []>} : vector<16x8xf32>, vector<16x8xf32>, vector<16x16xf32> -> vector<16x16xf32>
    %cst_122 = arith.constant dense<0xFF800000> : vector<16xf32>
    %242 = vector.multi_reduction <maximumf>, %241, %cst_122 [1] : vector<16x16xf32> to vector<16xf32>
    %243 = vector.shape_cast %242 : vector<16xf32> to vector<16x1xf32>
    %244 = vector.broadcast %243 : vector<16x1xf32> to vector<16x16xf32>
    %245 = arith.subf %241, %244 : vector<16x16xf32>
    %246 = math.exp %245 : vector<16x16xf32>
    %cst_123 = arith.constant dense<0.000000e+00> : vector<16xf32>
    %247 = vector.multi_reduction <add>, %246, %cst_123 [1] : vector<16x16xf32> to vector<16xf32>
    %248 = vector.shape_cast %247 : vector<16xf32> to vector<16x1xf32>
    %249 = tpu.reciprocal %248 {approx = true} : vector<16x1xf32> -> vector<16x1xf32>
    %250 = vector.broadcast %249 : vector<16x1xf32> to vector<16x16xf32>
    %251 = arith.mulf %246, %250 : vector<16x16xf32>
    %cst_124 = arith.constant dense<0.000000e+00> : vector<16x8xf32>
    %252 = tpu.matmul %251, %240, %cst_124 {dimension_numbers = #tpu.dot_dimension_numbers<[1], [0], [0], [1], [0, 0, 1, 1], [], []>} : vector<16x16xf32>, vector<16x8xf32>, vector<16x8xf32> -> vector<16x8xf32>
    %c1064 = arith.constant 1064 : index
    %c0_125 = arith.constant 0 : index
    %253 = vector.load %arg2[%c1064, %c0_125] : memref<1248x64xf32, #tpu.memory_space<vmem>>, vector<8x32xf32>
    %cst_126 = arith.constant dense<0.000000e+00> : vector<16x32xf32>
    %254 = tpu.matmul %252, %253, %cst_126 {dimension_numbers = #tpu.dot_dimension_numbers<[1], [0], [0], [1], [0, 0, 1, 1], [], []>} : vector<16x8xf32>, vector<8x32xf32>, vector<16x32xf32> -> vector<16x32xf32>
    %255 = arith.addf %231, %254 : vector<16x32xf32>
    %c752 = arith.constant 752 : index
    %c0_127 = arith.constant 0 : index
    %256 = vector.load %arg2[%c752, %c0_127] : memref<1248x64xf32, #tpu.memory_space<vmem>>, vector<32x8xf32>
    %cst_128 = arith.constant dense<0.000000e+00> : vector<16x8xf32>
    %257 = tpu.matmul %181, %256, %cst_128 {dimension_numbers = #tpu.dot_dimension_numbers<[1], [0], [0], [1], [0, 0, 1, 1], [], []>} : vector<16x32xf32>, vector<32x8xf32>, vector<16x8xf32> -> vector<16x8xf32>
    %c787 = arith.constant 787 : index
    %c0_129 = arith.constant 0 : index
    %258 = vector.load %arg2[%c787, %c0_129] : memref<1248x64xf32, #tpu.memory_space<vmem>>, vector<1x8xf32>
    %259 = vector.broadcast %258 : vector<1x8xf32> to vector<16x8xf32>
    %260 = arith.addf %257, %259 : vector<16x8xf32>
    %c888 = arith.constant 888 : index
    %c0_130 = arith.constant 0 : index
    %261 = vector.load %arg2[%c888, %c0_130] : memref<1248x64xf32, #tpu.memory_space<vmem>>, vector<32x8xf32>
    %cst_131 = arith.constant dense<0.000000e+00> : vector<16x8xf32>
    %262 = tpu.matmul %181, %261, %cst_131 {dimension_numbers = #tpu.dot_dimension_numbers<[1], [0], [0], [1], [0, 0, 1, 1], [], []>} : vector<16x32xf32>, vector<32x8xf32>, vector<16x8xf32> -> vector<16x8xf32>
    %c1016 = arith.constant 1016 : index
    %c0_132 = arith.constant 0 : index
    %263 = vector.load %arg2[%c1016, %c0_132] : memref<1248x64xf32, #tpu.memory_space<vmem>>, vector<32x8xf32>
    %cst_133 = arith.constant dense<0.000000e+00> : vector<16x8xf32>
    %264 = tpu.matmul %181, %263, %cst_133 {dimension_numbers = #tpu.dot_dimension_numbers<[1], [0], [0], [1], [0, 0, 1, 1], [], []>} : vector<16x32xf32>, vector<32x8xf32>, vector<16x8xf32> -> vector<16x8xf32>
    %cst_134 = arith.constant dense<0.000000e+00> : vector<16x16xf32>
    %265 = tpu.matmul %260, %262, %cst_134 {dimension_numbers = #tpu.dot_dimension_numbers<[1], [1], [0], [0], [0, 0, 1, 0], [], []>} : vector<16x8xf32>, vector<16x8xf32>, vector<16x16xf32> -> vector<16x16xf32>
    %cst_135 = arith.constant dense<0xFF800000> : vector<16xf32>
    %266 = vector.multi_reduction <maximumf>, %265, %cst_135 [1] : vector<16x16xf32> to vector<16xf32>
    %267 = vector.shape_cast %266 : vector<16xf32> to vector<16x1xf32>
    %268 = vector.broadcast %267 : vector<16x1xf32> to vector<16x16xf32>
    %269 = arith.subf %265, %268 : vector<16x16xf32>
    %270 = math.exp %269 : vector<16x16xf32>
    %cst_136 = arith.constant dense<0.000000e+00> : vector<16xf32>
    %271 = vector.multi_reduction <add>, %270, %cst_136 [1] : vector<16x16xf32> to vector<16xf32>
    %272 = vector.shape_cast %271 : vector<16xf32> to vector<16x1xf32>
    %273 = tpu.reciprocal %272 {approx = true} : vector<16x1xf32> -> vector<16x1xf32>
    %274 = vector.broadcast %273 : vector<16x1xf32> to vector<16x16xf32>
    %275 = arith.mulf %270, %274 : vector<16x16xf32>
    %cst_137 = arith.constant dense<0.000000e+00> : vector<16x8xf32>
    %276 = tpu.matmul %275, %264, %cst_137 {dimension_numbers = #tpu.dot_dimension_numbers<[1], [0], [0], [1], [0, 0, 1, 1], [], []>} : vector<16x16xf32>, vector<16x8xf32>, vector<16x8xf32> -> vector<16x8xf32>
    %c1072 = arith.constant 1072 : index
    %c0_138 = arith.constant 0 : index
    %277 = vector.load %arg2[%c1072, %c0_138] : memref<1248x64xf32, #tpu.memory_space<vmem>>, vector<8x32xf32>
    %cst_139 = arith.constant dense<0.000000e+00> : vector<16x32xf32>
    %278 = tpu.matmul %276, %277, %cst_139 {dimension_numbers = #tpu.dot_dimension_numbers<[1], [0], [0], [1], [0, 0, 1, 1], [], []>} : vector<16x8xf32>, vector<8x32xf32>, vector<16x32xf32> -> vector<16x32xf32>
    %279 = arith.addf %255, %278 : vector<16x32xf32>
    %280 = arith.addf %181, %279 : vector<16x32xf32>
    %c1200 = arith.constant 1200 : index
    %c0_140 = arith.constant 0 : index
    %281 = vector.load %arg2[%c1200, %c0_140] : memref<1248x64xf32, #tpu.memory_space<vmem>>, vector<1x32xf32>
    %c1208 = arith.constant 1208 : index
    %c0_141 = arith.constant 0 : index
    %282 = vector.load %arg2[%c1208, %c0_141] : memref<1248x64xf32, #tpu.memory_space<vmem>>, vector<1x32xf32>
    %cst_142 = arith.constant dense<0.000000e+00> : vector<16xf32>
    %283 = vector.multi_reduction <add>, %280, %cst_142 [1] : vector<16x32xf32> to vector<16xf32>
    %284 = vector.shape_cast %283 : vector<16xf32> to vector<16x1xf32>
    %cst_143 = arith.constant 3.200000e+01 : f32
    %285 = vector.broadcast %cst_143 : f32 to vector<16x1xf32>
    %286 = arith.divf %284, %285 : vector<16x1xf32>
    %287 = vector.broadcast %286 : vector<16x1xf32> to vector<16x32xf32>
    %288 = arith.subf %280, %287 : vector<16x32xf32>
    %289 = arith.mulf %288, %288 : vector<16x32xf32>
    %cst_144 = arith.constant dense<0.000000e+00> : vector<16xf32>
    %290 = vector.multi_reduction <add>, %289, %cst_144 [1] : vector<16x32xf32> to vector<16xf32>
    %291 = vector.shape_cast %290 : vector<16xf32> to vector<16x1xf32>
    %cst_145 = arith.constant 3.200000e+01 : f32
    %292 = vector.broadcast %cst_145 : f32 to vector<16x1xf32>
    %293 = arith.divf %291, %292 : vector<16x1xf32>
    %294 = vector.broadcast %286 : vector<16x1xf32> to vector<16x32xf32>
    %295 = arith.subf %280, %294 : vector<16x32xf32>
    %cst_146 = arith.constant 9.99999974E-6 : f32
    %296 = vector.broadcast %cst_146 : f32 to vector<16x1xf32>
    %297 = arith.addf %293, %296 : vector<16x1xf32>
    %298 = math.rsqrt %297 : vector<16x1xf32>
    %299 = vector.broadcast %298 : vector<16x1xf32> to vector<16x32xf32>
    %300 = arith.mulf %295, %299 : vector<16x32xf32>
    %301 = vector.broadcast %281 : vector<1x32xf32> to vector<16x32xf32>
    %302 = arith.mulf %300, %301 : vector<16x32xf32>
    %303 = vector.broadcast %282 : vector<1x32xf32> to vector<16x32xf32>
    %304 = arith.addf %302, %303 : vector<16x32xf32>
    %c1088 = arith.constant 1088 : index
    %c0_147 = arith.constant 0 : index
    %305 = vector.load %arg2[%c1088, %c0_147] : memref<1248x64xf32, #tpu.memory_space<vmem>>, vector<32x64xf32>
    %cst_148 = arith.constant dense<0.000000e+00> : vector<16x64xf32>
    %306 = tpu.matmul %304, %305, %cst_148 {dimension_numbers = #tpu.dot_dimension_numbers<[1], [0], [0], [1], [0, 0, 1, 1], [], []>} : vector<16x32xf32>, vector<32x64xf32>, vector<16x64xf32> -> vector<16x64xf32>
    %c1120 = arith.constant 1120 : index
    %c0_149 = arith.constant 0 : index
    %307 = vector.load %arg2[%c1120, %c0_149] : memref<1248x64xf32, #tpu.memory_space<vmem>>, vector<1x64xf32>
    %308 = vector.broadcast %307 : vector<1x64xf32> to vector<16x64xf32>
    %309 = arith.addf %306, %308 : vector<16x64xf32>
    %cst_150 = arith.constant 0.000000e+00 : f32
    %310 = vector.broadcast %cst_150 : f32 to vector<16x64xf32>
    %311 = arith.maximumf %309, %310 : vector<16x64xf32>
    %c1128 = arith.constant 1128 : index
    %c0_151 = arith.constant 0 : index
    %312 = vector.load %arg2[%c1128, %c0_151] : memref<1248x64xf32, #tpu.memory_space<vmem>>, vector<64x32xf32>
    %cst_152 = arith.constant dense<0.000000e+00> : vector<16x32xf32>
    %313 = tpu.matmul %311, %312, %cst_152 {dimension_numbers = #tpu.dot_dimension_numbers<[1], [0], [0], [1], [0, 0, 1, 1], [], []>} : vector<16x64xf32>, vector<64x32xf32>, vector<16x32xf32> -> vector<16x32xf32>
    %c1192 = arith.constant 1192 : index
    %c0_153 = arith.constant 0 : index
    %314 = vector.load %arg2[%c1192, %c0_153] : memref<1248x64xf32, #tpu.memory_space<vmem>>, vector<1x32xf32>
    %315 = vector.broadcast %314 : vector<1x32xf32> to vector<16x32xf32>
    %316 = arith.addf %313, %315 : vector<16x32xf32>
    %317 = arith.addf %304, %316 : vector<16x32xf32>
    %c1216 = arith.constant 1216 : index
    %c0_154 = arith.constant 0 : index
    %318 = vector.load %arg2[%c1216, %c0_154] : memref<1248x64xf32, #tpu.memory_space<vmem>>, vector<1x32xf32>
    %c1224 = arith.constant 1224 : index
    %c0_155 = arith.constant 0 : index
    %319 = vector.load %arg2[%c1224, %c0_155] : memref<1248x64xf32, #tpu.memory_space<vmem>>, vector<1x32xf32>
    %cst_156 = arith.constant dense<0.000000e+00> : vector<16xf32>
    %320 = vector.multi_reduction <add>, %317, %cst_156 [1] : vector<16x32xf32> to vector<16xf32>
    %321 = vector.shape_cast %320 : vector<16xf32> to vector<16x1xf32>
    %cst_157 = arith.constant 3.200000e+01 : f32
    %322 = vector.broadcast %cst_157 : f32 to vector<16x1xf32>
    %323 = arith.divf %321, %322 : vector<16x1xf32>
    %324 = vector.broadcast %323 : vector<16x1xf32> to vector<16x32xf32>
    %325 = arith.subf %317, %324 : vector<16x32xf32>
    %326 = arith.mulf %325, %325 : vector<16x32xf32>
    %cst_158 = arith.constant dense<0.000000e+00> : vector<16xf32>
    %327 = vector.multi_reduction <add>, %326, %cst_158 [1] : vector<16x32xf32> to vector<16xf32>
    %328 = vector.shape_cast %327 : vector<16xf32> to vector<16x1xf32>
    %cst_159 = arith.constant 3.200000e+01 : f32
    %329 = vector.broadcast %cst_159 : f32 to vector<16x1xf32>
    %330 = arith.divf %328, %329 : vector<16x1xf32>
    %331 = vector.broadcast %323 : vector<16x1xf32> to vector<16x32xf32>
    %332 = arith.subf %317, %331 : vector<16x32xf32>
    %cst_160 = arith.constant 9.99999974E-6 : f32
    %333 = vector.broadcast %cst_160 : f32 to vector<16x1xf32>
    %334 = arith.addf %330, %333 : vector<16x1xf32>
    %335 = math.rsqrt %334 : vector<16x1xf32>
    %336 = vector.broadcast %335 : vector<16x1xf32> to vector<16x32xf32>
    %337 = arith.mulf %332, %336 : vector<16x32xf32>
    %338 = vector.broadcast %318 : vector<1x32xf32> to vector<16x32xf32>
    %339 = arith.mulf %337, %338 : vector<16x32xf32>
    %340 = vector.broadcast %319 : vector<1x32xf32> to vector<16x32xf32>
    %341 = arith.addf %339, %340 : vector<16x32xf32>
    %c1232 = arith.constant 1232 : index
    %c0_161 = arith.constant 0 : index
    %342 = vector.load %arg2[%c1232, %c0_161] : memref<1248x64xf32, #tpu.memory_space<vmem>>, vector<1x32xf32>
    %c1240 = arith.constant 1240 : index
    %c0_162 = arith.constant 0 : index
    %343 = vector.load %arg2[%c1240, %c0_162] : memref<1248x64xf32, #tpu.memory_space<vmem>>, vector<1x32xf32>
    %cst_163 = arith.constant dense<0.000000e+00> : vector<16xf32>
    %344 = vector.multi_reduction <add>, %341, %cst_163 [1] : vector<16x32xf32> to vector<16xf32>
    %345 = vector.shape_cast %344 : vector<16xf32> to vector<16x1xf32>
    %cst_164 = arith.constant 3.200000e+01 : f32
    %346 = vector.broadcast %cst_164 : f32 to vector<16x1xf32>
    %347 = arith.divf %345, %346 : vector<16x1xf32>
    %348 = vector.broadcast %347 : vector<16x1xf32> to vector<16x32xf32>
    %349 = arith.subf %341, %348 : vector<16x32xf32>
    %350 = arith.mulf %349, %349 : vector<16x32xf32>
    %cst_165 = arith.constant dense<0.000000e+00> : vector<16xf32>
    %351 = vector.multi_reduction <add>, %350, %cst_165 [1] : vector<16x32xf32> to vector<16xf32>
    %352 = vector.shape_cast %351 : vector<16xf32> to vector<16x1xf32>
    %cst_166 = arith.constant 3.200000e+01 : f32
    %353 = vector.broadcast %cst_166 : f32 to vector<16x1xf32>
    %354 = arith.divf %352, %353 : vector<16x1xf32>
    %355 = vector.broadcast %347 : vector<16x1xf32> to vector<16x32xf32>
    %356 = arith.subf %341, %355 : vector<16x32xf32>
    %cst_167 = arith.constant 9.99999974E-6 : f32
    %357 = vector.broadcast %cst_167 : f32 to vector<16x1xf32>
    %358 = arith.addf %354, %357 : vector<16x1xf32>
    %359 = math.rsqrt %358 : vector<16x1xf32>
    %360 = vector.broadcast %359 : vector<16x1xf32> to vector<16x32xf32>
    %361 = arith.mulf %356, %360 : vector<16x32xf32>
    %362 = vector.broadcast %342 : vector<1x32xf32> to vector<16x32xf32>
    %363 = arith.mulf %361, %362 : vector<16x32xf32>
    %364 = vector.broadcast %343 : vector<1x32xf32> to vector<16x32xf32>
    %365 = arith.addf %363, %364 : vector<16x32xf32>
    %366 = tpu.iota {dimensions = array<i32: 0>} : vector<16x8xi32>
    %c1 = arith.constant 1 : index
    %c0_168 = arith.constant 0 : index
    %367 = vector.load %arg0[%c1, %c0_168] : memref<2x16xi32, #tpu.memory_space<vmem>>, vector<1x8xi32>
    %368 = vector.broadcast %367 : vector<1x8xi32> to vector<16x8xi32>
    %369 = arith.cmpi eq, %366, %368 : vector<16x8xi32>
    %370 = arith.extui %369 : vector<16x8xi1> to vector<16x8xi32>
    %371 = arith.sitofp %370 : vector<16x8xi32> to vector<16x8xf32>
    %cst_169 = arith.constant dense<0.000000e+00> : vector<8x32xf32>
    %372 = tpu.matmul %371, %365, %cst_169 {dimension_numbers = #tpu.dot_dimension_numbers<[0], [0], [1], [1], [0, 1, 1, 1], [], []>} : vector<16x8xf32>, vector<16x32xf32>, vector<8x32xf32> -> vector<8x32xf32>
    %c0_170 = arith.constant 0 : index
    %c0_171 = arith.constant 0 : index
    %373 = vector.load %arg3[%c0_170, %c0_171] : memref<8x32xf32, #tpu.memory_space<vmem>>, vector<8x32xf32>
    tpu.vector_store %arg3[%c0_170, %c0_171], %372 {strides = array<i32>} : memref<8x32xf32, #tpu.memory_space<vmem>>, vector<8x32xf32>,
    return
  }
}

</mosaic_0001>

<llo_original>
// kernel: our_model_forward.1
$region0: #{our_model_forward.1}
  #allocation0 [shape = 'u32[]', space=smem, size = 0x4, offset = 0x4, fixed_abs, tag = 'smem constant byte address 0x4 - core index']
  #allocation1 [shape = 'u32[144,128]{1,0:T(1,128)}', space=vmem, size = 0x12000, scoped, tag = 'internal scratch']
  %s0 = inlined_call_operand.vmem [shape: s32[2,16], index: 0, kind: input, shape index: {}]
  %s1 = inlined_call_operand.vmem [shape: f32[16,8], index: 1, kind: input, shape index: {}]
  %s2 = inlined_call_operand.vmem [shape: f32[1248,64], index: 2, kind: input, shape index: {}]
  %s3 = inlined_call_operand.hbm [shape: f32[8,32], index: 3, kind: output, shape index: {}]
  %s4 = sld [smem:[#allocation0]]
  $region22: #{our_model_forward.1} parent=0
    _
  %s6 = ssub.s32 1, %s4
  %s7 = scalar_select 0, %s6, %s4
  $region1: #{our_model_forward.1} parent=0
    #allocation2 [shape = 'u8[4096]{0}', space=vmem, size = 0x1000, scoped, tag = 'output window, operand 0, single buffered']
    #allocation3 [shape = 's32[1]{0}', space=sflag, size = 0x4, scoped, tag = 'scoped memory for our_model_forward.1']
    %8 = vsyncpa [#allocation3], 0
    // Predicated region
    $region2: #{our_model_forward.1} parent=1 // pred_check
      _
    $region3: #{our_model_forward.1} parent=1 // pred_check_branch
      %10 = sbr.rel (0) target = $region5
    $region4: #{our_model_forward.1} parent=1 // pred_region
      _
    $region5: #{our_model_forward.1} parent=1 // pred_fallthru
      _
    // Predicated region
    $region6: #{our_model_forward.1} parent=1 // pred_check
      _
    $region7: #{our_model_forward.1} parent=1 // pred_check_branch
      %12 = sbr.rel (0) target = $region9
    $region8: #{our_model_forward.1} parent=1 // pred_region
      _
    $region9: #{our_model_forward.1} parent=1 // pred_fallthru
      _
    // Predicated region
    $region10: #{our_model_forward.1} parent=1 // pred_check
      _
    $region11: #{our_model_forward.1} parent=1 // pred_check_branch
      %14 = sbr.rel (0) target = $region13
    $region12: #{our_model_forward.1} parent=1 // pred_region
      _
    $region13: #{our_model_forward.1} parent=1 // pred_fallthru
      _
    %v15 = vld [vmem:[%s1] sm:$0xff]
    %v16 = vld [vmem:[%s1 + $0x8] sm:$0xff]
    %v17 = vld [vmem:[%s2 + $0x10] sm:$0xff]
    %v18 = vld [vmem:[%s2 + $0x18] sm:$0x1]
    %v19 = vlaneseq
    %v20 = vshrl.u32 %v19, 7
    %v21 = vsub.s32 0, %v20
    %v22 = vrot.slane %v18, %v21
    %vm23 = vcmask 64512
    %v25 = vsel %vm23, %v15, 0
    %v28 = vsel %vm23, %v16, 0
    %30 = vmatprep.subr.mxu0 0.0
    %31 = vmatpush1.msra.mxu0 %v17
    %32 = vmatprep.subr.mxu0 0.0
    %33 = vmatpush1.msra.mxu0 0.0
    %34 = vmatprep.subr.mxu0 0.0
    %35 = vmatpush1.msra.mxu0 0.0
    %36 = vmatprep.subr.mxu0 0.0
    %37 = vmatpush1.msra.mxu0 0.0
    %38 = vmatprep.subr.mxu0 0.0
    %39 = vmatpush1.msra.mxu0 0.0
    %40 = vmatprep.subr.mxu0 0.0
    %41 = vmatpush1.msra.mxu0 0.0
    %42 = vmatprep.subr.mxu0 0.0
    %43 = vmatpush1.msra.mxu0 0.0
    %44 = vmatprep.subr.mxu0 0.0
    %45 = vmatpush1.msra.mxu0 0.0
    %46 = vmatprep.subr.mxu0 0.0
    %47 = vmatpush1.msra.mxu0 0.0
    %48 = vmatprep.subr.mxu0 0.0
    %49 = vmatpush1.msra.mxu0 0.0
    %50 = vmatprep.subr.mxu0 0.0
    %51 = vmatpush1.msra.mxu0 0.0
    %52 = vmatprep.subr.mxu0 0.0
    %53 = vmatpush1.msra.mxu0 0.0
    %54 = vmatprep.subr.mxu0 0.0
    %55 = vmatpush1.msra.mxu0 0.0
    %56 = vmatprep.subr.mxu0 0.0
    %57 = vmatpush1.msra.mxu0 0.0
    %58 = vmatprep.subr.mxu0 0.0
    %59 = vmatpush1.msra.mxu0 0.0
    %60 = vmatprep.subr.mxu0 0.0
    %61 = vmatpush1.msra.mxu0 0.0
    %62 = vmatprep.subr.mxu0 0.0
    %63 = vmatpush1.msra.mxu0 0.0
    %64 = vmatprep.subr.mxu0 0.0
    %65 = vmatpush1.msra.mxu0 0.0
    %66 = vmatprep.subr.mxu0 0.0
    %67 = vmatpush1.msra.mxu0 0.0
    %68 = vmatprep.subr.mxu0 0.0
    %69 = vmatpush1.msra.mxu0 0.0
    %70 = vmatprep.subr.mxu0 0.0
    %71 = vmatpush1.msra.mxu0 0.0
    %72 = vmatprep.subr.mxu0 0.0
    %73 = vmatpush1.msra.mxu0 0.0
    %74 = vmatprep.subr.mxu0 0.0
    %75 = vmatpush1.msra.mxu0 0.0
    %76 = vmatprep.subr.mxu0 0.0
    %77 = vmatpush1.msra.mxu0 0.0
    %78 = vmatprep.subr.mxu0 0.0
    %79 = vmatpush1.msra.mxu0 0.0
    %80 = vmatprep.subr.mxu0 0.0
    %81 = vmatpush1.msra.mxu0 0.0
    %82 = vmatprep.subr.mxu0 0.0
    %83 = vmatpush1.msra.mxu0 0.0
    %84 = vmatprep.subr.mxu0 0.0
    %85 = vmatpush1.msra.mxu0 0.0
    %86 = vmatprep.subr.mxu0 0.0
    %87 = vmatpush1.msra.mxu0 0.0
    %88 = vmatprep.subr.mxu0 0.0
    %89 = vmatpush1.msra.mxu0 0.0
    %90 = vmatprep.subr.mxu0 0.0
    %91 = vmatpush1.msra.mxu0 0.0
    %92 = vmatprep.subr.mxu0 0.0
    %93 = vmatpush1.msra.mxu0 0.0
    %94 = vmatprep.mubr.f32.mxu0 0.0
    %95 = vmatmul.mubr.f32.gmra.mrb[0].mxu0 %v25
    %v96 = vpop.f32.mrb[0].mxu0
    %v97 = vadd.f32 %v22, %v96
    %v98 = vpop.f32.mrb[0].mxu0
    %99 = vmatprep.mubr.f32.mxu0 0.0
    %100 = vmatmul.mubr.f32.gmra.mrb[0].mxu0 %v28
    %v101 = vpop.f32.mrb[0].mxu0
    %v102 = vadd.f32 %v22, %v101
    %v103 = vpop.f32.mrb[0].mxu0
    %104 = vdwg.mxu0
    %v105 = vlaneseq
    %v106 = vshrl.u32 %v105, 7
    %v107 = vadd.s32 %v106, 8
    %v108 = vld [vmem:[%s0] sm:$0x1]
    %v109 = vlaneseq
    %v110 = vshrl.u32 %v109, 7
    %v111 = vsub.s32 0, %v110
    %v112 = vrot.slane %v108, %v111
    %vm113 = vcmp.eq.s32.totalorder %v106, %v112
    %vm114 = vcmp.eq.s32.totalorder %v107, %v112
    %v115 = vsel %vm113, 1, 0
    %v116 = vsel %vm114, 1, 0
    %v117 = vcvt.s32.f32 %v115
    %v118 = vcvt.s32.f32 %v116
    %vm119 = vcmask 130048
    %v121 = vsel %vm119, %v117, 0
    %v124 = vsel %vm119, %v118, 0
    %126 = vmatprep.subr.mxu0 0.0
    %127 = vmatpush1.msra.mxu0 %v97
    %128 = vmatprep.subr.mxu0 0.0
    %129 = vmatpush1.msra.mxu0 %v102
    %130 = vmatprep.subr.mxu0 0.0
    %131 = vmatpush1.msra.mxu0 0.0
    %132 = vmatprep.subr.mxu0 0.0
    %133 = vmatpush1.msra.mxu0 0.0
    %134 = vmatprep.subr.mxu0 0.0
    %135 = vmatpush1.msra.mxu0 0.0
    %136 = vmatprep.subr.mxu0 0.0
    %137 = vmatpush1.msra.mxu0 0.0
    %138 = vmatprep.subr.mxu0 0.0
    %139 = vmatpush1.msra.mxu0 0.0
    %140 = vmatprep.subr.mxu0 0.0
    %141 = vmatpush1.msra.mxu0 0.0
    %142 = vmatprep.subr.mxu0 0.0
    %143 = vmatpush1.msra.mxu0 0.0
    %144 = vmatprep.subr.mxu0 0.0
    %145 = vmatpush1.msra.mxu0 0.0
    %146 = vmatprep.subr.mxu0 0.0
    %147 = vmatpush1.msra.mxu0 0.0
    %148 = vmatprep.subr.mxu0 0.0
    %149 = vmatpush1.msra.mxu0 0.0
    %150 = vmatprep.subr.mxu0 0.0
    %151 = vmatpush1.msra.mxu0 0.0
    %152 = vmatprep.subr.mxu0 0.0
    %153 = vmatpush1.msra.mxu0 0.0
    %154 = vmatprep.subr.mxu0 0.0
    %155 = vmatpush1.msra.mxu0 0.0
    %156 = vmatprep.subr.mxu0 0.0
    %157 = vmatpush1.msra.mxu0 0.0
    %158 = vmatprep.subr.mxu0 0.0
    %159 = vmatpush1.msra.mxu0 0.0
    %160 = vmatprep.subr.mxu0 0.0
    %161 = vmatpush1.msra.mxu0 0.0
    %162 = vmatprep.subr.mxu0 0.0
    %163 = vmatpush1.msra.mxu0 0.0
    %164 = vmatprep.subr.mxu0 0.0
    %165 = vmatpush1.msra.mxu0 0.0
    %166 = vmatprep.subr.mxu0 0.0
    %167 = vmatpush1.msra.mxu0 0.0
    %168 = vmatprep.subr.mxu0 0.0
    %169 = vmatpush1.msra.mxu0 0.0
    %170 = vmatprep.subr.mxu0 0.0
    %171 = vmatpush1.msra.mxu0 0.0
    %172 = vmatprep.subr.mxu0 0.0
    %173 = vmatpush1.msra.mxu0 0.0
    %174 = vmatprep.subr.mxu0 0.0
    %175 = vmatpush1.msra.mxu0 0.0
    %176 = vmatprep.subr.mxu0 0.0
    %177 = vmatpush1.msra.mxu0 0.0
    %178 = vmatprep.subr.mxu0 0.0
    %179 = vmatpush1.msra.mxu0 0.0
    %180 = vmatprep.subr.mxu0 0.0
    %181 = vmatpush1.msra.mxu0 0.0
    %182 = vmatprep.subr.mxu0 0.0
    %183 = vmatpush1.msra.mxu0 0.0
    %184 = vmatprep.subr.mxu0 0.0
    %185 = vmatpush1.msra.mxu0 0.0
    %186 = vmatprep.subr.mxu0 0.0
    %187 = vmatpush1.msra.mxu0 0.0
    %188 = vmatprep.subr.mxu0 0.0
    %189 = vmatpush1.msra.mxu0 0.0
    %190 = vmatprep.mubr.f32.mxu0 0.0
    %191 = vmatmul.mubr.f32.gmra.mrb[0].mxu0 %v121
    %v192 = vpop.f32.mrb[0].mxu0
    %v193 = vadd.f32 0.0, %v192
    %v194 = vpop.f32.mrb[0].mxu0
    %195 = vmatprep.mubr.f32.mxu0 0.0
    %196 = vmatmul.mubr.f32.gmra.mrb[0].mxu0 %v124
    %v197 = vpop.f32.mrb[0].mxu0
    %v198 = vadd.f32 0.0, %v197
    %v199 = vpop.f32.mrb[0].mxu0
    %200 = vdwg.mxu0
    %v201 = vld [vmem:[%s2] sm:$0xff]
    %v202 = vld [vmem:[%s2 + $0x8] sm:$0xff]
    %v203 = vld [vmem:[%s2 + $0x20] sm:$0xff]
    %v204 = vld [vmem:[%s2 + $0x28] sm:$0xff]
    %v205 = vld [vmem:[%s2 + $0x30] sm:$0xff]
    %v206 = vld [vmem:[%s2 + $0x38] sm:$0xff]
    %v207 = vld [vmem:[%s2 + $0x40] sm:$0xff]
    %v209 = vsel %vm23, %v193, 0
    %v212 = vsel %vm23, %v198, 0
    %214 = vmatprep.subr.mxu0 0.0
    %215 = vmatpush1.msra.mxu0 %v207
    %216 = vmatprep.subr.mxu0 0.0
    %217 = vmatpush1.msra.mxu0 0.0
    %218 = vmatprep.subr.mxu0 0.0
    %219 = vmatpush1.msra.mxu0 0.0
    %220 = vmatprep.subr.mxu0 0.0
    %221 = vmatpush1.msra.mxu0 0.0
    %222 = vmatprep.subr.mxu0 0.0
    %223 = vmatpush1.msra.mxu0 0.0
    %224 = vmatprep.subr.mxu0 0.0
    %225 = vmatpush1.msra.mxu0 0.0
    %226 = vmatprep.subr.mxu0 0.0
    %227 = vmatpush1.msra.mxu0 0.0
    %228 = vmatprep.subr.mxu0 0.0
    %229 = vmatpush1.msra.mxu0 0.0
    %230 = vmatprep.subr.mxu0 0.0
    %231 = vmatpush1.msra.mxu0 0.0
    %232 = vmatprep.subr.mxu0 0.0
    %233 = vmatpush1.msra.mxu0 0.0
    %234 = vmatprep.subr.mxu0 0.0
    %235 = vmatpush1.msra.mxu0 0.0
    %236 = vmatprep.subr.mxu0 0.0
    %237 = vmatpush1.msra.mxu0 0.0
    %238 = vmatprep.subr.mxu0 0.0
    %239 = vmatpush1.msra.mxu0 0.0
    %240 = vmatprep.subr.mxu0 0.0
    %241 = vmatpush1.msra.mxu0 0.0
    %242 = vmatprep.subr.mxu0 0.0
    %243 = vmatpush1.msra.mxu0 0.0
    %244 = vmatprep.subr.mxu0 0.0
    %245 = vmatpush1.msra.mxu0 0.0
    %246 = vmatprep.subr.mxu0 0.0
    %247 = vmatpush1.msra.mxu0 0.0
    %248 = vmatprep.subr.mxu0 0.0
    %249 = vmatpush1.msra.mxu0 0.0
    %250 = vmatprep.subr.mxu0 0.0
    %251 = vmatpush1.msra.mxu0 0.0
    %252 = vmatprep.subr.mxu0 0.0
    %253 = vmatpush1.msra.mxu0 0.0
    %254 = vmatprep.subr.mxu0 0.0
    %255 = vmatpush1.msra.mxu0 0.0
    %256 = vmatprep.subr.mxu0 0.0
    %257 = vmatpush1.msra.mxu0 0.0
    %258 = vmatprep.subr.mxu0 0.0
    %259 = vmatpush1.msra.mxu0 0.0
    %260 = vmatprep.subr.mxu0 0.0
    %261 = vmatpush1.msra.mxu0 0.0
    %262 = vmatprep.subr.mxu0 0.0
    %263 = vmatpush1.msra.mxu0 0.0
    %264 = vmatprep.subr.mxu0 0.0
    %265 = vmatpush1.msra.mxu0 0.0
    %266 = vmatprep.subr.mxu0 0.0
    %267 = vmatpush1.msra.mxu0 0.0
    %268 = vmatprep.subr.mxu0 0.0
    %269 = vmatpush1.msra.mxu0 0.0
    %270 = vmatprep.subr.mxu0 0.0
    %271 = vmatpush1.msra.mxu0 0.0
    %272 = vmatprep.subr.mxu0 0.0
    %273 = vmatpush1.msra.mxu0 0.0
    %274 = vmatprep.subr.mxu0 0.0
    %275 = vmatpush1.msra.mxu0 0.0
    %276 = vmatprep.subr.mxu0 0.0
    %277 = vmatpush1.msra.mxu0 0.0
    %278 = vmatprep.mubr.f32.mxu0 0.0
    %279 = vmatmul.mubr.f32.gmra.mrb[0].mxu0 %v209
    %v280 = vpop.f32.mrb[0].mxu0
    %v281 = vadd.f32 0.0, %v280
    %v282 = vpop.f32.mrb[0].mxu0
    %283 = vmatprep.mubr.f32.mxu0 0.0
    %284 = vmatmul.mubr.f32.gmra.mrb[0].mxu0 %v212
    %v285 = vpop.f32.mrb[0].mxu0
    %v286 = vadd.f32 0.0, %v285
    %v287 = vpop.f32.mrb[0].mxu0
    %288 = vdwg.mxu0
    %vm289 = vcmask 261120
    %v291 = vsel %vm289, %v201, 0
    %v294 = vsel %vm289, %v202, 0
    %296 = vmatprep.subr.mxu0 0.0
    %297 = vmatpush1.msra.mxu0 %v203
    %298 = vmatprep.subr.mxu0 0.0
    %299 = vmatpush1.msra.mxu0 %v204
    %300 = vmatprep.subr.mxu0 0.0
    %301 = vmatpush1.msra.mxu0 %v205
    %302 = vmatprep.subr.mxu0 0.0
    %303 = vmatpush1.msra.mxu0 %v206
    %304 = vmatprep.subr.mxu0 0.0
    %305 = vmatpush1.msra.mxu0 0.0
    %306 = vmatprep.subr.mxu0 0.0
    %307 = vmatpush1.msra.mxu0 0.0
    %308 = vmatprep.subr.mxu0 0.0
    %309 = vmatpush1.msra.mxu0 0.0
    %310 = vmatprep.subr.mxu0 0.0
    %311 = vmatpush1.msra.mxu0 0.0
    %312 = vmatprep.subr.mxu0 0.0
    %313 = vmatpush1.msra.mxu0 0.0
    %314 = vmatprep.subr.mxu0 0.0
    %315 = vmatpush1.msra.mxu0 0.0
    %316 = vmatprep.subr.mxu0 0.0
    %317 = vmatpush1.msra.mxu0 0.0
    %318 = vmatprep.subr.mxu0 0.0
    %319 = vmatpush1.msra.mxu0 0.0
    %320 = vmatprep.subr.mxu0 0.0
    %321 = vmatpush1.msra.mxu0 0.0
    %322 = vmatprep.subr.mxu0 0.0
    %323 = vmatpush1.msra.mxu0 0.0
    %324 = vmatprep.subr.mxu0 0.0
    %325 = vmatpush1.msra.mxu0 0.0
    %326 = vmatprep.subr.mxu0 0.0
    %327 = vmatpush1.msra.mxu0 0.0
    %328 = vmatprep.subr.mxu0 0.0
    %329 = vmatpush1.msra.mxu0 0.0
    %330 = vmatprep.subr.mxu0 0.0
    %331 = vmatpush1.msra.mxu0 0.0
    %332 = vmatprep.subr.mxu0 0.0
    %333 = vmatpush1.msra.mxu0 0.0
    %334 = vmatprep.subr.mxu0 0.0
    %335 = vmatpush1.msra.mxu0 0.0
    %336 = vmatprep.subr.mxu0 0.0
    %337 = vmatpush1.msra.mxu0 0.0
    %338 = vmatprep.subr.mxu0 0.0
    %339 = vmatpush1.msra.mxu0 0.0
    %340 = vmatprep.subr.mxu0 0.0
    %341 = vmatpush1.msra.mxu0 0.0
    %342 = vmatprep.subr.mxu0 0.0
    %343 = vmatpush1.msra.mxu0 0.0
    %344 = vmatprep.subr.mxu0 0.0
    %345 = vmatpush1.msra.mxu0 0.0
    %346 = vmatprep.subr.mxu0 0.0
    %347 = vmatpush1.msra.mxu0 0.0
    %348 = vmatprep.subr.mxu0 0.0
    %349 = vmatpush1.msra.mxu0 0.0
    %350 = vmatprep.subr.mxu0 0.0
    %351 = vmatpush1.msra.mxu0 0.0
    %352 = vmatprep.subr.mxu0 0.0
    %353 = vmatpush1.msra.mxu0 0.0
    %354 = vmatprep.subr.mxu0 0.0
    %355 = vmatpush1.msra.mxu0 0.0
    %356 = vmatprep.subr.mxu0 0.0
    %357 = vmatpush1.msra.mxu0 0.0
    %358 = vmatprep.subr.mxu0 0.0
    %359 = vmatpush1.msra.mxu0 0.0
    %360 = vmatprep.mubr.f32.mxu0 0.0
    %361 = vmatmul.mubr.f32.gmra.mrb[0].mxu0 %v291
    %v362 = vpop.f32.mrb[0].mxu0
    %v363 = vadd.f32 %v281, %v362
    %v364 = vpop.f32.mrb[0].mxu0
    %365 = vmatprep.mubr.f32.mxu0 0.0
    %366 = vmatmul.mubr.f32.gmra.mrb[0].mxu0 %v294
    %v367 = vpop.f32.mrb[0].mxu0
    %v368 = vadd.f32 %v286, %v367
    %v369 = vpop.f32.mrb[0].mxu0
    %370 = vdwg.mxu0
    %v371 = vld [vmem:[%s2 + $0x48] sm:$0x1]
    %v372 = vlaneseq
    %v373 = vshrl.u32 %v372, 7
    %v374 = vsub.s32 0, %v373
    %v375 = vrot.slane %v371, %v374
    %v376 = vadd.f32 %v363, %v375
    %v377 = vadd.f32 %v368, %v375
    %v378 = vld [vmem:[%s2 + $0x1f8] sm:$0x1]
    %v379 = vld [vmem:[%s2 + $0x50] sm:$0xff]
    %v380 = vld [vmem:[%s2 + $0x58] sm:$0xff]
    %v381 = vld [vmem:[%s2 + $0x60] sm:$0xff]
    %v382 = vld [vmem:[%s2 + $0x68] sm:$0xff]
    %v383 = vld [vmem:[%s2 + $0xd0] sm:$0x1]
    %v384 = vlaneseq
    %v385 = vshrl.u32 %v384, 7
    %v386 = vsub.s32 0, %v385
    %v387 = vrot.slane %v383, %v386
    %v389 = vsel %vm289, %v376, 0
    %v392 = vsel %vm289, %v377, 0
    %394 = vmatprep.subr.mxu0 0.0
    %395 = vmatpush1.msra.mxu0 %v379
    %396 = vmatprep.subr.mxu0 0.0
    %397 = vmatpush1.msra.mxu0 %v380
    %398 = vmatprep.subr.mxu0 0.0
    %399 = vmatpush1.msra.mxu0 %v381
    %400 = vmatprep.subr.mxu0 0.0
    %401 = vmatpush1.msra.mxu0 %v382
    %402 = vmatprep.subr.mxu0 0.0
    %403 = vmatpush1.msra.mxu0 0.0
    %404 = vmatprep.subr.mxu0 0.0
    %405 = vmatpush1.msra.mxu0 0.0
    %406 = vmatprep.subr.mxu0 0.0
    %407 = vmatpush1.msra.mxu0 0.0
    %408 = vmatprep.subr.mxu0 0.0
    %409 = vmatpush1.msra.mxu0 0.0
    %410 = vmatprep.subr.mxu0 0.0
    %411 = vmatpush1.msra.mxu0 0.0
    %412 = vmatprep.subr.mxu0 0.0
    %413 = vmatpush1.msra.mxu0 0.0
    %414 = vmatprep.subr.mxu0 0.0
    %415 = vmatpush1.msra.mxu0 0.0
    %416 = vmatprep.subr.mxu0 0.0
    %417 = vmatpush1.msra.mxu0 0.0
    %418 = vmatprep.subr.mxu0 0.0
    %419 = vmatpush1.msra.mxu0 0.0
    %420 = vmatprep.subr.mxu0 0.0
    %421 = vmatpush1.msra.mxu0 0.0
    %422 = vmatprep.subr.mxu0 0.0
    %423 = vmatpush1.msra.mxu0 0.0
    %424 = vmatprep.subr.mxu0 0.0
    %425 = vmatpush1.msra.mxu0 0.0
    %426 = vmatprep.subr.mxu0 0.0
    %427 = vmatpush1.msra.mxu0 0.0
    %428 = vmatprep.subr.mxu0 0.0
    %429 = vmatpush1.msra.mxu0 0.0
    %430 = vmatprep.subr.mxu0 0.0
    %431 = vmatpush1.msra.mxu0 0.0
    %432 = vmatprep.subr.mxu0 0.0
    %433 = vmatpush1.msra.mxu0 0.0
    %434 = vmatprep.subr.mxu0 0.0
    %435 = vmatpush1.msra.mxu0 0.0
    %436 = vmatprep.subr.mxu0 0.0
    %437 = vmatpush1.msra.mxu0 0.0
    %438 = vmatprep.subr.mxu0 0.0
    %439 = vmatpush1.msra.mxu0 0.0
    %440 = vmatprep.subr.mxu0 0.0
    %441 = vmatpush1.msra.mxu0 0.0
    %442 = vmatprep.subr.mxu0 0.0
    %443 = vmatpush1.msra.mxu0 0.0
    %444 = vmatprep.subr.mxu0 0.0
    %445 = vmatpush1.msra.mxu0 0.0
    %446 = vmatprep.subr.mxu0 0.0
    %447 = vmatpush1.msra.mxu0 0.0
    %448 = vmatprep.subr.mxu0 0.0
    %449 = vmatpush1.msra.mxu0 0.0
    %450 = vmatprep.subr.mxu0 0.0
    %451 = vmatpush1.msra.mxu0 0.0
    %452 = vmatprep.subr.mxu0 0.0
    %453 = vmatpush1.msra.mxu0 0.0
    %454 = vmatprep.subr.mxu0 0.0
    %455 = vmatpush1.msra.mxu0 0.0
    %456 = vmatprep.subr.mxu0 0.0
    %457 = vmatpush1.msra.mxu0 0.0
    %458 = vmatprep.mubr.f32.mxu0 0.0
    %459 = vmatmul.mubr.f32.gmra.mrb[0].mxu0 %v389
    %v460 = vpop.f32.mrb[0].mxu0
    %v461 = vadd.f32 %v387, %v460
    %v462 = vpop.f32.mrb[0].mxu0
    %463 = vmatprep.mubr.f32.mxu0 0.0
    %464 = vmatmul.mubr.f32.gmra.mrb[0].mxu0 %v392
    %v465 = vpop.f32.mrb[0].mxu0
    %v466 = vadd.f32 %v387, %v465
    %v467 = vpop.f32.mrb[0].mxu0
    %468 = vdwg.mxu0
    %v469 = vld [vmem:[%s2 + $0xd8] sm:$0xff]
    %v470 = vld [vmem:[%s2 + $0xe0] sm:$0xff]
    %v471 = vld [vmem:[%s2 + $0xe8] sm:$0xff]
    %v472 = vld [vmem:[%s2 + $0xf0] sm:$0xff]
    %473 = vmatprep.subr.mxu0 0.0
    %474 = vmatpush1.msra.mxu0 %v469
    %475 = vmatprep.subr.mxu0 0.0
    %476 = vmatpush1.msra.mxu0 %v470
    %477 = vmatprep.subr.mxu0 0.0
    %478 = vmatpush1.msra.mxu0 %v471
    %479 = vmatprep.subr.mxu0 0.0
    %480 = vmatpush1.msra.mxu0 %v472
    %481 = vmatprep.subr.mxu0 0.0
    %482 = vmatpush1.msra.mxu0 0.0
    %483 = vmatprep.subr.mxu0 0.0
    %484 = vmatpush1.msra.mxu0 0.0
    %485 = vmatprep.subr.mxu0 0.0
    %486 = vmatpush1.msra.mxu0 0.0
    %487 = vmatprep.subr.mxu0 0.0
    %488 = vmatpush1.msra.mxu0 0.0
    %489 = vmatprep.subr.mxu0 0.0
    %490 = vmatpush1.msra.mxu0 0.0
    %491 = vmatprep.subr.mxu0 0.0
    %492 = vmatpush1.msra.mxu0 0.0
    %493 = vmatprep.subr.mxu0 0.0
    %494 = vmatpush1.msra.mxu0 0.0
    %495 = vmatprep.subr.mxu0 0.0
    %496 = vmatpush1.msra.mxu0 0.0
    %497 = vmatprep.subr.mxu0 0.0
    %498 = vmatpush1.msra.mxu0 0.0
    %499 = vmatprep.subr.mxu0 0.0
    %500 = vmatpush1.msra.mxu0 0.0
    %501 = vmatprep.subr.mxu0 0.0
    %502 = vmatpush1.msra.mxu0 0.0
    %503 = vmatprep.subr.mxu0 0.0
    %504 = vmatpush1.msra.mxu0 0.0
    %505 = vmatprep.subr.mxu0 0.0
    %506 = vmatpush1.msra.mxu0 0.0
    %507 = vmatprep.subr.mxu0 0.0
    %508 = vmatpush1.msra.mxu0 0.0
    %509 = vmatprep.subr.mxu0 0.0
    %510 = vmatpush1.msra.mxu0 0.0
    %511 = vmatprep.subr.mxu0 0.0
    %512 = vmatpush1.msra.mxu0 0.0
    %513 = vmatprep.subr.mxu0 0.0
    %514 = vmatpush1.msra.mxu0 0.0
    %515 = vmatprep.subr.mxu0 0.0
    %516 = vmatpush1.msra.mxu0 0.0
    %517 = vmatprep.subr.mxu0 0.0
    %518 = vmatpush1.msra.mxu0 0.0
    %519 = vmatprep.subr.mxu0 0.0
    %520 = vmatpush1.msra.mxu0 0.0
    %521 = vmatprep.subr.mxu0 0.0
    %522 = vmatpush1.msra.mxu0 0.0
    %523 = vmatprep.subr.mxu0 0.0
    %524 = vmatpush1.msra.mxu0 0.0
    %525 = vmatprep.subr.mxu0 0.0
    %526 = vmatpush1.msra.mxu0 0.0
    %527 = vmatprep.subr.mxu0 0.0
    %528 = vmatpush1.msra.mxu0 0.0
    %529 = vmatprep.subr.mxu0 0.0
    %530 = vmatpush1.msra.mxu0 0.0
    %531 = vmatprep.subr.mxu0 0.0
    %532 = vmatpush1.msra.mxu0 0.0
    %533 = vmatprep.subr.mxu0 0.0
    %534 = vmatpush1.msra.mxu0 0.0
    %535 = vmatprep.subr.mxu0 0.0
    %536 = vmatpush1.msra.mxu0 0.0
    %537 = vmatprep.mubr.f32.mxu0 0.0
    %538 = vmatmul.mubr.f32.gmra.mrb[0].mxu0 %v389
    %v539 = vpop.f32.mrb[0].mxu0
    %v540 = vadd.f32 0.0, %v539
    %v541 = vpop.f32.mrb[0].mxu0
    %542 = vmatprep.mubr.f32.mxu0 0.0
    %543 = vmatmul.mubr.f32.gmra.mrb[0].mxu0 %v392
    %v544 = vpop.f32.mrb[0].mxu0
    %v545 = vadd.f32 0.0, %v544
    %v546 = vpop.f32.mrb[0].mxu0
    %547 = vdwg.mxu0
    %v548 = vld [vmem:[%s2 + $0x158] sm:$0xff]
    %v549 = vld [vmem:[%s2 + $0x160] sm:$0xff]
    %v550 = vld [vmem:[%s2 + $0x168] sm:$0xff]
    %v551 = vld [vmem:[%s2 + $0x170] sm:$0xff]
    %552 = vmatprep.subr.mxu0 0.0
    %553 = vmatpush1.msra.mxu0 %v548
    %554 = vmatprep.subr.mxu0 0.0
    %555 = vmatpush1.msra.mxu0 %v549
    %556 = vmatprep.subr.mxu0 0.0
    %557 = vmatpush1.msra.mxu0 %v550
    %558 = vmatprep.subr.mxu0 0.0
    %559 = vmatpush1.msra.mxu0 %v551
    %560 = vmatprep.subr.mxu0 0.0
    %561 = vmatpush1.msra.mxu0 0.0
    %562 = vmatprep.subr.mxu0 0.0
    %563 = vmatpush1.msra.mxu0 0.0
    %564 = vmatprep.subr.mxu0 0.0
    %565 = vmatpush1.msra.mxu0 0.0
    %566 = vmatprep.subr.mxu0 0.0
    %567 = vmatpush1.msra.mxu0 0.0
    %568 = vmatprep.subr.mxu0 0.0
    %569 = vmatpush1.msra.mxu0 0.0
    %570 = vmatprep.subr.mxu0 0.0
    %571 = vmatpush1.msra.mxu0 0.0
    %572 = vmatprep.subr.mxu0 0.0
    %573 = vmatpush1.msra.mxu0 0.0
    %574 = vmatprep.subr.mxu0 0.0
    %575 = vmatpush1.msra.mxu0 0.0
    %576 = vmatprep.subr.mxu0 0.0
    %577 = vmatpush1.msra.mxu0 0.0
    %578 = vmatprep.subr.mxu0 0.0
    %579 = vmatpush1.msra.mxu0 0.0
    %580 = vmatprep.subr.mxu0 0.0
    %581 = vmatpush1.msra.mxu0 0.0
    %582 = vmatprep.subr.mxu0 0.0
    %583 = vmatpush1.msra.mxu0 0.0
    %584 = vmatprep.subr.mxu0 0.0
    %585 = vmatpush1.msra.mxu0 0.0
    %586 = vmatprep.subr.mxu0 0.0
    %587 = vmatpush1.msra.mxu0 0.0
    %588 = vmatprep.subr.mxu0 0.0
    %589 = vmatpush1.msra.mxu0 0.0
    %590 = vmatprep.subr.mxu0 0.0
    %591 = vmatpush1.msra.mxu0 0.0
    %592 = vmatprep.subr.mxu0 0.0
    %593 = vmatpush1.msra.mxu0 0.0
    %594 = vmatprep.subr.mxu0 0.0
    %595 = vmatpush1.msra.mxu0 0.0
    %596 = vmatprep.subr.mxu0 0.0
    %597 = vmatpush1.msra.mxu0 0.0
    %598 = vmatprep.subr.mxu0 0.0
    %599 = vmatpush1.msra.mxu0 0.0
    %600 = vmatprep.subr.mxu0 0.0
    %601 = vmatpush1.msra.mxu0 0.0
    %602 = vmatprep.subr.mxu0 0.0
    %603 = vmatpush1.msra.mxu0 0.0
    %604 = vmatprep.subr.mxu0 0.0
    %605 = vmatpush1.msra.mxu0 0.0
    %606 = vmatprep.subr.mxu0 0.0
    %607 = vmatpush1.msra.mxu0 0.0
    %608 = vmatprep.subr.mxu0 0.0
    %609 = vmatpush1.msra.mxu0 0.0
    %610 = vmatprep.subr.mxu0 0.0
    %611 = vmatpush1.msra.mxu0 0.0
    %612 = vmatprep.subr.mxu0 0.0
    %613 = vmatpush1.msra.mxu0 0.0
    %614 = vmatprep.subr.mxu0 0.0
    %615 = vmatpush1.msra.mxu0 0.0
    %616 = vmatprep.mubr.f32.mxu0 0.0
    %617 = vmatmul.mubr.f32.gmra.mrb[0].mxu0 %v389
    %v618 = vpop.f32.mrb[0].mxu0
    %v619 = vadd.f32 0.0, %v618
    %v620 = vpop.f32.mrb[0].mxu0
    %621 = vmatprep.mubr.f32.mxu0 0.0
    %622 = vmatmul.mubr.f32.gmra.mrb[0].mxu0 %v392
    %v623 = vpop.f32.mrb[0].mxu0
    %v624 = vadd.f32 0.0, %v623
    %v625 = vpop.f32.mrb[0].mxu0
    %626 = vdwg.mxu0
    %v628 = vsel %vm23, %v461, 0
    %v631 = vsel %vm23, %v466, 0
    %v634 = vsel %vm23, %v540, 0
    %v637 = vsel %vm23, %v545, 0
    %639 = vmatprep.subr.mxu0 0.0
    %640 = vmatpush1.xpose.msra.mxu0 %v634
    %641 = vmatprep.subr.mxu0 0.0
    %642 = vmatpush1.xpose.msra.mxu0 %v637
    %643 = vmatprep.subr.mxu0 0.0
    %644 = vmatpush1.xpose.msra.mxu0 0.0
    %645 = vmatprep.subr.mxu0 0.0
    %646 = vmatpush1.xpose.msra.mxu0 0.0
    %647 = vmatprep.subr.mxu0 0.0
    %648 = vmatpush1.xpose.msra.mxu0 0.0
    %649 = vmatprep.subr.mxu0 0.0
    %650 = vmatpush1.xpose.msra.mxu0 0.0
    %651 = vmatprep.subr.mxu0 0.0
    %652 = vmatpush1.xpose.msra.mxu0 0.0
    %653 = vmatprep.subr.mxu0 0.0
    %654 = vmatpush1.xpose.msra.mxu0 0.0
    %655 = vmatprep.subr.mxu0 0.0
    %656 = vmatpush1.xpose.msra.mxu0 0.0
    %657 = vmatprep.subr.mxu0 0.0
    %658 = vmatpush1.xpose.msra.mxu0 0.0
    %659 = vmatprep.subr.mxu0 0.0
    %660 = vmatpush1.xpose.msra.mxu0 0.0
    %661 = vmatprep.subr.mxu0 0.0
    %662 = vmatpush1.xpose.msra.mxu0 0.0
    %663 = vmatprep.subr.mxu0 0.0
    %664 = vmatpush1.xpose.msra.mxu0 0.0
    %665 = vmatprep.subr.mxu0 0.0
    %666 = vmatpush1.xpose.msra.mxu0 0.0
    %667 = vmatprep.subr.mxu0 0.0
    %668 = vmatpush1.xpose.msra.mxu0 0.0
    %669 = vmatprep.subr.mxu0 0.0
    %670 = vmatpush1.xpose.msra.mxu0 0.0
    %671 = vmatprep.subr.mxu0 0.0
    %672 = vmatpush1.xpose.msra.mxu0 0.0
    %673 = vmatprep.subr.mxu0 0.0
    %674 = vmatpush1.xpose.msra.mxu0 0.0
    %675 = vmatprep.subr.mxu0 0.0
    %676 = vmatpush1.xpose.msra.mxu0 0.0
    %677 = vmatprep.subr.mxu0 0.0
    %678 = vmatpush1.xpose.msra.mxu0 0.0
    %679 = vmatprep.subr.mxu0 0.0
    %680 = vmatpush1.xpose.msra.mxu0 0.0
    %681 = vmatprep.subr.mxu0 0.0
    %682 = vmatpush1.xpose.msra.mxu0 0.0
    %683 = vmatprep.subr.mxu0 0.0
    %684 = vmatpush1.xpose.msra.mxu0 0.0
    %685 = vmatprep.subr.mxu0 0.0
    %686 = vmatpush1.xpose.msra.mxu0 0.0
    %687 = vmatprep.subr.mxu0 0.0
    %688 = vmatpush1.xpose.msra.mxu0 0.0
    %689 = vmatprep.subr.mxu0 0.0
    %690 = vmatpush1.xpose.msra.mxu0 0.0
    %691 = vmatprep.subr.mxu0 0.0
    %692 = vmatpush1.xpose.msra.mxu0 0.0
    %693 = vmatprep.subr.mxu0 0.0
    %694 = vmatpush1.xpose.msra.mxu0 0.0
    %695 = vmatprep.subr.mxu0 0.0
    %696 = vmatpush1.xpose.msra.mxu0 0.0
    %697 = vmatprep.subr.mxu0 0.0
    %698 = vmatpush1.xpose.msra.mxu0 0.0
    %699 = vmatprep.subr.mxu0 0.0
    %700 = vmatpush1.xpose.msra.mxu0 0.0
    %701 = vmatprep.subr.mxu0 0.0
    %702 = vmatpush1.xpose.msra.mxu0 0.0
    %703 = vmatprep.mubr.f32.mxu0 0.0
    %704 = vmatmul.mubr.f32.gmra.mrb[0].mxu0 %v628
    %v705 = vpop.f32.mrb[0].mxu0
    %v706 = vadd.f32 0.0, %v705
    %v707 = vpop.f32.mrb[0].mxu0
    %708 = vmatprep.mubr.f32.mxu0 0.0
    %709 = vmatmul.mubr.f32.gmra.mrb[0].mxu0 %v631
    %v710 = vpop.f32.mrb[0].mxu0
    %v711 = vadd.f32 0.0, %v710
    %v712 = vpop.f32.mrb[0].mxu0
    %713 = vdwg.mxu0
    %v714 = vsel %vm119, %v706, -inf
    %715 = vmax.xlane.f32.xlu0 %v714
    %v716 = vpop.xlane.xlu0 %715
    %v717 = vsel %vm119, %v711, -inf
    %718 = vmax.xlane.f32.xlu0 %v717
    %v719 = vpop.xlane.xlu0 %718
    %v720 = vsub.f32 %v706, %v716
    %v721 = vsub.f32 %v711, %v719
    %v722 = vmul.f32 %v720, 1.442695
    %v723 = vpow.pop %v722
    %v724 = vmul.f32 %v721, 1.442695
    %v725 = vpow.pop %v724
    %v726 = vsel %vm119, %v723, 0.0
    %727 = vadd.xlane.f32.xlu0 %v726
    %v728 = vpop.xlane.xlu0 %727
    %v729 = vsel %vm119, %v725, 0.0
    %730 = vadd.xlane.f32.xlu0 %v729
    %v731 = vpop.xlane.xlu0 %730
    %v732 = vrcp.pop %v728
    %v733 = vrcp.pop %v731
    %v734 = vmul.f32 %v723, %v732
    %v735 = vmul.f32 %v725, %v733
    %v737 = vsel %vm119, %v734, 0
    %v740 = vsel %vm119, %v735, 0
    %742 = vmatprep.subr.mxu0 0.0
    %743 = vmatpush1.msra.mxu0 %v619
    %744 = vmatprep.subr.mxu0 0.0
    %745 = vmatpush1.msra.mxu0 %v624
    %746 = vmatprep.subr.mxu0 0.0
    %747 = vmatpush1.msra.mxu0 0.0
    %748 = vmatprep.subr.mxu0 0.0
    %749 = vmatpush1.msra.mxu0 0.0
    %750 = vmatprep.subr.mxu0 0.0
    %751 = vmatpush1.msra.mxu0 0.0
    %752 = vmatprep.subr.mxu0 0.0
    %753 = vmatpush1.msra.mxu0 0.0
    %754 = vmatprep.subr.mxu0 0.0
    %755 = vmatpush1.msra.mxu0 0.0
    %756 = vmatprep.subr.mxu0 0.0
    %757 = vmatpush1.msra.mxu0 0.0
    %758 = vmatprep.subr.mxu0 0.0
    %759 = vmatpush1.msra.mxu0 0.0
    %760 = vmatprep.subr.mxu0 0.0
    %761 = vmatpush1.msra.mxu0 0.0
    %762 = vmatprep.subr.mxu0 0.0
    %763 = vmatpush1.msra.mxu0 0.0
    %764 = vmatprep.subr.mxu0 0.0
    %765 = vmatpush1.msra.mxu0 0.0
    %766 = vmatprep.subr.mxu0 0.0
    %767 = vmatpush1.msra.mxu0 0.0
    %768 = vmatprep.subr.mxu0 0.0
    %769 = vmatpush1.msra.mxu0 0.0
    %770 = vmatprep.subr.mxu0 0.0
    %771 = vmatpush1.msra.mxu0 0.0
    %772 = vmatprep.subr.mxu0 0.0
    %773 = vmatpush1.msra.mxu0 0.0
    %774 = vmatprep.subr.mxu0 0.0
    %775 = vmatpush1.msra.mxu0 0.0
    %776 = vmatprep.subr.mxu0 0.0
    %777 = vmatpush1.msra.mxu0 0.0
    %778 = vmatprep.subr.mxu0 0.0
    %779 = vmatpush1.msra.mxu0 0.0
    %780 = vmatprep.subr.mxu0 0.0
    %781 = vmatpush1.msra.mxu0 0.0
    %782 = vmatprep.subr.mxu0 0.0
    %783 = vmatpush1.msra.mxu0 0.0
    %784 = vmatprep.subr.mxu0 0.0
    %785 = vmatpush1.msra.mxu0 0.0
    %786 = vmatprep.subr.mxu0 0.0
    %787 = vmatpush1.msra.mxu0 0.0
    %788 = vmatprep.subr.mxu0 0.0
    %789 = vmatpush1.msra.mxu0 0.0
    %790 = vmatprep.subr.mxu0 0.0
    %791 = vmatpush1.msra.mxu0 0.0
    %792 = vmatprep.subr.mxu0 0.0
    %793 = vmatpush1.msra.mxu0 0.0
    %794 = vmatprep.subr.mxu0 0.0
    %795 = vmatpush1.msra.mxu0 0.0
    %796 = vmatprep.subr.mxu0 0.0
    %797 = vmatpush1.msra.mxu0 0.0
    %798 = vmatprep.subr.mxu0 0.0
    %799 = vmatpush1.msra.mxu0 0.0
    %800 = vmatprep.subr.mxu0 0.0
    %801 = vmatpush1.msra.mxu0 0.0
    %802 = vmatprep.subr.mxu0 0.0
    %803 = vmatpush1.msra.mxu0 0.0
    %804 = vmatprep.subr.mxu0 0.0
    %805 = vmatpush1.msra.mxu0 0.0
    %806 = vmatprep.mubr.f32.mxu0 0.0
    %807 = vmatmul.mubr.f32.gmra.mrb[0].mxu0 %v737
    %v808 = vpop.f32.mrb[0].mxu0
    %v809 = vadd.f32 0.0, %v808
    %v810 = vpop.f32.mrb[0].mxu0
    %811 = vmatprep.mubr.f32.mxu0 0.0
    %812 = vmatmul.mubr.f32.gmra.mrb[0].mxu0 %v740
    %v813 = vpop.f32.mrb[0].mxu0
    %v814 = vadd.f32 0.0, %v813
    %v815 = vpop.f32.mrb[0].mxu0
    %816 = vdwg.mxu0
    %v817 = vld [vmem:[%s2 + $0x1d8] sm:$0xff]
    %v819 = vsel %vm23, %v809, 0
    %v822 = vsel %vm23, %v814, 0
    %824 = vmatprep.subr.mxu0 0.0
    %825 = vmatpush1.msra.mxu0 %v817
    %826 = vmatprep.subr.mxu0 0.0
    %827 = vmatpush1.msra.mxu0 0.0
    %828 = vmatprep.subr.mxu0 0.0
    %829 = vmatpush1.msra.mxu0 0.0
    %830 = vmatprep.subr.mxu0 0.0
    %831 = vmatpush1.msra.mxu0 0.0
    %832 = vmatprep.subr.mxu0 0.0
    %833 = vmatpush1.msra.mxu0 0.0
    %834 = vmatprep.subr.mxu0 0.0
    %835 = vmatpush1.msra.mxu0 0.0
    %836 = vmatprep.subr.mxu0 0.0
    %837 = vmatpush1.msra.mxu0 0.0
    %838 = vmatprep.subr.mxu0 0.0
    %839 = vmatpush1.msra.mxu0 0.0
    %840 = vmatprep.subr.mxu0 0.0
    %841 = vmatpush1.msra.mxu0 0.0
    %842 = vmatprep.subr.mxu0 0.0
    %843 = vmatpush1.msra.mxu0 0.0
    %844 = vmatprep.subr.mxu0 0.0
    %845 = vmatpush1.msra.mxu0 0.0
    %846 = vmatprep.subr.mxu0 0.0
    %847 = vmatpush1.msra.mxu0 0.0
    %848 = vmatprep.subr.mxu0 0.0
    %849 = vmatpush1.msra.mxu0 0.0
    %850 = vmatprep.subr.mxu0 0.0
    %851 = vmatpush1.msra.mxu0 0.0
    %852 = vmatprep.subr.mxu0 0.0
    %853 = vmatpush1.msra.mxu0 0.0
    %854 = vmatprep.subr.mxu0 0.0
    %855 = vmatpush1.msra.mxu0 0.0
    %856 = vmatprep.subr.mxu0 0.0
    %857 = vmatpush1.msra.mxu0 0.0
    %858 = vmatprep.subr.mxu0 0.0
    %859 = vmatpush1.msra.mxu0 0.0
    %860 = vmatprep.subr.mxu0 0.0
    %861 = vmatpush1.msra.mxu0 0.0
    %862 = vmatprep.subr.mxu0 0.0
    %863 = vmatpush1.msra.mxu0 0.0
    %864 = vmatprep.subr.mxu0 0.0
    %865 = vmatpush1.msra.mxu0 0.0
    %866 = vmatprep.subr.mxu0 0.0
    %867 = vmatpush1.msra.mxu0 0.0
    %868 = vmatprep.subr.mxu0 0.0
    %869 = vmatpush1.msra.mxu0 0.0
    %870 = vmatprep.subr.mxu0 0.0
    %871 = vmatpush1.msra.mxu0 0.0
    %872 = vmatprep.subr.mxu0 0.0
    %873 = vmatpush1.msra.mxu0 0.0
    %874 = vmatprep.subr.mxu0 0.0
    %875 = vmatpush1.msra.mxu0 0.0
    %876 = vmatprep.subr.mxu0 0.0
    %877 = vmatpush1.msra.mxu0 0.0
    %878 = vmatprep.subr.mxu0 0.0
    %879 = vmatpush1.msra.mxu0 0.0
    %880 = vmatprep.subr.mxu0 0.0
    %881 = vmatpush1.msra.mxu0 0.0
    %882 = vmatprep.subr.mxu0 0.0
    %883 = vmatpush1.msra.mxu0 0.0
    %884 = vmatprep.subr.mxu0 0.0
    %885 = vmatpush1.msra.mxu0 0.0
    %886 = vmatprep.subr.mxu0 0.0
    %887 = vmatpush1.msra.mxu0 0.0
    %888 = vmatprep.mubr.f32.mxu0 0.0
    %889 = vmatmul.mubr.f32.gmra.mrb[0].mxu0 %v819
    %v890 = vpop.f32.mrb[0].mxu0
    %v891 = vadd.f32 0.0, %v890
    %v892 = vpop.f32.mrb[0].mxu0
    %893 = vmatprep.mubr.f32.mxu0 0.0
    %894 = vmatmul.mubr.f32.gmra.mrb[0].mxu0 %v822
    %v895 = vpop.f32.mrb[0].mxu0
    %v896 = vadd.f32 0.0, %v895
    %v897 = vpop.f32.mrb[0].mxu0
    %898 = vdwg.mxu0
    %v899 = vlaneseq
    %v900 = vshrl.u32 %v899, 7
    %v901 = vsub.s32 0, %v900
    %v902 = vrot.slane %v378, %v901
    %v903 = vadd.f32 %v902, %v891
    %v904 = vadd.f32 %v902, %v896
    %v905 = vld [vmem:[%s2 + $0x70] sm:$0xff]
    %v906 = vld [vmem:[%s2 + $0x78] sm:$0xff]
    %v907 = vld [vmem:[%s2 + $0x80] sm:$0xff]
    %v908 = vld [vmem:[%s2 + $0x88] sm:$0xff]
    %v909 = vld [vmem:[%s2 + $0xd1] sm:$0x1]
    %v910 = vlaneseq
    %v911 = vshrl.u32 %v910, 7
    %v912 = vsub.s32 0, %v911
    %v913 = vrot.slane %v909, %v912
    %914 = vmatprep.subr.mxu0 0.0
    %915 = vmatpush1.msra.mxu0 %v905
    %916 = vmatprep.subr.mxu0 0.0
    %917 = vmatpush1.msra.mxu0 %v906
    %918 = vmatprep.subr.mxu0 0.0
    %919 = vmatpush1.msra.mxu0 %v907
    %920 = vmatprep.subr.mxu0 0.0
    %921 = vmatpush1.msra.mxu0 %v908
    %922 = vmatprep.subr.mxu0 0.0
    %923 = vmatpush1.msra.mxu0 0.0
    %924 = vmatprep.subr.mxu0 0.0
    %925 = vmatpush1.msra.mxu0 0.0
    %926 = vmatprep.subr.mxu0 0.0
    %927 = vmatpush1.msra.mxu0 0.0
    %928 = vmatprep.subr.mxu0 0.0
    %929 = vmatpush1.msra.mxu0 0.0
    %930 = vmatprep.subr.mxu0 0.0
    %931 = vmatpush1.msra.mxu0 0.0
    %932 = vmatprep.subr.mxu0 0.0
    %933 = vmatpush1.msra.mxu0 0.0
    %934 = vmatprep.subr.mxu0 0.0
    %935 = vmatpush1.msra.mxu0 0.0
    %936 = vmatprep.subr.mxu0 0.0
    %937 = vmatpush1.msra.mxu0 0.0
    %938 = vmatprep.subr.mxu0 0.0
    %939 = vmatpush1.msra.mxu0 0.0
    %940 = vmatprep.subr.mxu0 0.0
    %941 = vmatpush1.msra.mxu0 0.0
    %942 = vmatprep.subr.mxu0 0.0
    %943 = vmatpush1.msra.mxu0 0.0
    %944 = vmatprep.subr.mxu0 0.0
    %945 = vmatpush1.msra.mxu0 0.0
    %946 = vmatprep.subr.mxu0 0.0
    %947 = vmatpush1.msra.mxu0 0.0
    %948 = vmatprep.subr.mxu0 0.0
    %949 = vmatpush1.msra.mxu0 0.0
    %950 = vmatprep.subr.mxu0 0.0
    %951 = vmatpush1.msra.mxu0 0.0
    %952 = vmatprep.subr.mxu0 0.0
    %953 = vmatpush1.msra.mxu0 0.0
    %954 = vmatprep.subr.mxu0 0.0
    %955 = vmatpush1.msra.mxu0 0.0
    %956 = vmatprep.subr.mxu0 0.0
    %957 = vmatpush1.msra.mxu0 0.0
    %958 = vmatprep.subr.mxu0 0.0
    %959 = vmatpush1.msra.mxu0 0.0
    %960 = vmatprep.subr.mxu0 0.0
    %961 = vmatpush1.msra.mxu0 0.0
    %962 = vmatprep.subr.mxu0 0.0
    %963 = vmatpush1.msra.mxu0 0.0
    %964 = vmatprep.subr.mxu0 0.0
    %965 = vmatpush1.msra.mxu0 0.0
    %966 = vmatprep.subr.mxu0 0.0
    %967 = vmatpush1.msra.mxu0 0.0
    %968 = vmatprep.subr.mxu0 0.0
    %969 = vmatpush1.msra.mxu0 0.0
    %970 = vmatprep.subr.mxu0 0.0
    %971 = vmatpush1.msra.mxu0 0.0
    %972 = vmatprep.subr.mxu0 0.0
    %973 = vmatpush1.msra.mxu0 0.0
    %974 = vmatprep.subr.mxu0 0.0
    %975 = vmatpush1.msra.mxu0 0.0
    %976 = vmatprep.subr.mxu0 0.0
    %977 = vmatpush1.msra.mxu0 0.0
    %978 = vmatprep.mubr.f32.mxu0 0.0
    %979 = vmatmul.mubr.f32.gmra.mrb[0].mxu0 %v389
    %v980 = vpop.f32.mrb[0].mxu0
    %v981 = vadd.f32 %v913, %v980
    %v982 = vpop.f32.mrb[0].mxu0
    %983 = vmatprep.mubr.f32.mxu0 0.0
    %984 = vmatmul.mubr.f32.gmra.mrb[0].mxu0 %v392
    %v985 = vpop.f32.mrb[0].mxu0
    %v986 = vadd.f32 %v913, %v985
    %v987 = vpop.f32.mrb[0].mxu0
    %988 = vdwg.mxu0
    %v989 = vld [vmem:[%s2 + $0xf8] sm:$0xff]
    %v990 = vld [vmem:[%s2 + $0x100] sm:$0xff]
    %v991 = vld [vmem:[%s2 + $0x108] sm:$0xff]
    %v992 = vld [vmem:[%s2 + $0x110] sm:$0xff]
    %993 = vmatprep.subr.mxu0 0.0
    %994 = vmatpush1.msra.mxu0 %v989
    %995 = vmatprep.subr.mxu0 0.0
    %996 = vmatpush1.msra.mxu0 %v990
    %997 = vmatprep.subr.mxu0 0.0
    %998 = vmatpush1.msra.mxu0 %v991
    %999 = vmatprep.subr.mxu0 0.0
    %1000 = vmatpush1.msra.mxu0 %v992
    %1001 = vmatprep.subr.mxu0 0.0
    %1002 = vmatpush1.msra.mxu0 0.0
    %1003 = vmatprep.subr.mxu0 0.0
    %1004 = vmatpush1.msra.mxu0 0.0
    %1005 = vmatprep.subr.mxu0 0.0
    %1006 = vmatpush1.msra.mxu0 0.0
    %1007 = vmatprep.subr.mxu0 0.0
    %1008 = vmatpush1.msra.mxu0 0.0
    %1009 = vmatprep.subr.mxu0 0.0
    %1010 = vmatpush1.msra.mxu0 0.0
    %1011 = vmatprep.subr.mxu0 0.0
    %1012 = vmatpush1.msra.mxu0 0.0
    %1013 = vmatprep.subr.mxu0 0.0
    %1014 = vmatpush1.msra.mxu0 0.0
    %1015 = vmatprep.subr.mxu0 0.0
    %1016 = vmatpush1.msra.mxu0 0.0
    %1017 = vmatprep.subr.mxu0 0.0
    %1018 = vmatpush1.msra.mxu0 0.0
    %1019 = vmatprep.subr.mxu0 0.0
    %1020 = vmatpush1.msra.mxu0 0.0
    %1021 = vmatprep.subr.mxu0 0.0
    %1022 = vmatpush1.msra.mxu0 0.0
    %1023 = vmatprep.subr.mxu0 0.0
    %1024 = vmatpush1.msra.mxu0 0.0
    %1025 = vmatprep.subr.mxu0 0.0
    %1026 = vmatpush1.msra.mxu0 0.0
    %1027 = vmatprep.subr.mxu0 0.0
    %1028 = vmatpush1.msra.mxu0 0.0
    %1029 = vmatprep.subr.mxu0 0.0
    %1030 = vmatpush1.msra.mxu0 0.0
    %1031 = vmatprep.subr.mxu0 0.0
    %1032 = vmatpush1.msra.mxu0 0.0
    %1033 = vmatprep.subr.mxu0 0.0
    %1034 = vmatpush1.msra.mxu0 0.0
    %1035 = vmatprep.subr.mxu0 0.0
    %1036 = vmatpush1.msra.mxu0 0.0
    %1037 = vmatprep.subr.mxu0 0.0
    %1038 = vmatpush1.msra.mxu0 0.0
    %1039 = vmatprep.subr.mxu0 0.0
    %1040 = vmatpush1.msra.mxu0 0.0
    %1041 = vmatprep.subr.mxu0 0.0
    %1042 = vmatpush1.msra.mxu0 0.0
    %1043 = vmatprep.subr.mxu0 0.0
    %1044 = vmatpush1.msra.mxu0 0.0
    %1045 = vmatprep.subr.mxu0 0.0
    %1046 = vmatpush1.msra.mxu0 0.0
    %1047 = vmatprep.subr.mxu0 0.0
    %1048 = vmatpush1.msra.mxu0 0.0
    %1049 = vmatprep.subr.mxu0 0.0
    %1050 = vmatpush1.msra.mxu0 0.0
    %1051 = vmatprep.subr.mxu0 0.0
    %1052 = vmatpush1.msra.mxu0 0.0
    %1053 = vmatprep.subr.mxu0 0.0
    %1054 = vmatpush1.msra.mxu0 0.0
    %1055 = vmatprep.subr.mxu0 0.0
    %1056 = vmatpush1.msra.mxu0 0.0
    %1057 = vmatprep.mubr.f32.mxu0 0.0
    %1058 = vmatmul.mubr.f32.gmra.mrb[0].mxu0 %v389
    %v1059 = vpop.f32.mrb[0].mxu0
    %v1060 = vadd.f32 0.0, %v1059
    %v1061 = vpop.f32.mrb[0].mxu0
    %1062 = vmatprep.mubr.f32.mxu0 0.0
    %1063 = vmatmul.mubr.f32.gmra.mrb[0].mxu0 %v392
    %v1064 = vpop.f32.mrb[0].mxu0
    %v1065 = vadd.f32 0.0, %v1064
    %v1066 = vpop.f32.mrb[0].mxu0
    %1067 = vdwg.mxu0
    %v1068 = vld [vmem:[%s2 + $0x178] sm:$0xff]
    %v1069 = vld [vmem:[%s2 + $0x180] sm:$0xff]
    %v1070 = vld [vmem:[%s2 + $0x188] sm:$0xff]
    %v1071 = vld [vmem:[%s2 + $0x190] sm:$0xff]
    %1072 = vmatprep.subr.mxu0 0.0
    %1073 = vmatpush1.msra.mxu0 %v1068
    %1074 = vmatprep.subr.mxu0 0.0
    %1075 = vmatpush1.msra.mxu0 %v1069
    %1076 = vmatprep.subr.mxu0 0.0
    %1077 = vmatpush1.msra.mxu0 %v1070
    %1078 = vmatprep.subr.mxu0 0.0
    %1079 = vmatpush1.msra.mxu0 %v1071
    %1080 = vmatprep.subr.mxu0 0.0
    %1081 = vmatpush1.msra.mxu0 0.0
    %1082 = vmatprep.subr.mxu0 0.0
    %1083 = vmatpush1.msra.mxu0 0.0
    %1084 = vmatprep.subr.mxu0 0.0
    %1085 = vmatpush1.msra.mxu0 0.0
    %1086 = vmatprep.subr.mxu0 0.0
    %1087 = vmatpush1.msra.mxu0 0.0
    %1088 = vmatprep.subr.mxu0 0.0
    %1089 = vmatpush1.msra.mxu0 0.0
    %1090 = vmatprep.subr.mxu0 0.0
    %1091 = vmatpush1.msra.mxu0 0.0
    %1092 = vmatprep.subr.mxu0 0.0
    %1093 = vmatpush1.msra.mxu0 0.0
    %1094 = vmatprep.subr.mxu0 0.0
    %1095 = vmatpush1.msra.mxu0 0.0
    %1096 = vmatprep.subr.mxu0 0.0
    %1097 = vmatpush1.msra.mxu0 0.0
    %1098 = vmatprep.subr.mxu0 0.0
    %1099 = vmatpush1.msra.mxu0 0.0
    %1100 = vmatprep.subr.mxu0 0.0
    %1101 = vmatpush1.msra.mxu0 0.0
    %1102 = vmatprep.subr.mxu0 0.0
    %1103 = vmatpush1.msra.mxu0 0.0
    %1104 = vmatprep.subr.mxu0 0.0
    %1105 = vmatpush1.msra.mxu0 0.0
    %1106 = vmatprep.subr.mxu0 0.0
    %1107 = vmatpush1.msra.mxu0 0.0
    %1108 = vmatprep.subr.mxu0 0.0
    %1109 = vmatpush1.msra.mxu0 0.0
    %1110 = vmatprep.subr.mxu0 0.0
    %1111 = vmatpush1.msra.mxu0 0.0
    %1112 = vmatprep.subr.mxu0 0.0
    %1113 = vmatpush1.msra.mxu0 0.0
    %1114 = vmatprep.subr.mxu0 0.0
    %1115 = vmatpush1.msra.mxu0 0.0
    %1116 = vmatprep.subr.mxu0 0.0
    %1117 = vmatpush1.msra.mxu0 0.0
    %1118 = vmatprep.subr.mxu0 0.0
    %1119 = vmatpush1.msra.mxu0 0.0
    %1120 = vmatprep.subr.mxu0 0.0
    %1121 = vmatpush1.msra.mxu0 0.0
    %1122 = vmatprep.subr.mxu0 0.0
    %1123 = vmatpush1.msra.mxu0 0.0
    %1124 = vmatprep.subr.mxu0 0.0
    %1125 = vmatpush1.msra.mxu0 0.0
    %1126 = vmatprep.subr.mxu0 0.0
    %1127 = vmatpush1.msra.mxu0 0.0
    %1128 = vmatprep.subr.mxu0 0.0
    %1129 = vmatpush1.msra.mxu0 0.0
    %1130 = vmatprep.subr.mxu0 0.0
    %1131 = vmatpush1.msra.mxu0 0.0
    %1132 = vmatprep.subr.mxu0 0.0
    %1133 = vmatpush1.msra.mxu0 0.0
    %1134 = vmatprep.subr.mxu0 0.0
    %1135 = vmatpush1.msra.mxu0 0.0
    %1136 = vmatprep.mubr.f32.mxu0 0.0
    %1137 = vmatmul.mubr.f32.gmra.mrb[0].mxu0 %v389
    %v1138 = vpop.f32.mrb[0].mxu0
    %v1139 = vadd.f32 0.0, %v1138
    %v1140 = vpop.f32.mrb[0].mxu0
    %1141 = vmatprep.mubr.f32.mxu0 0.0
    %1142 = vmatmul.mubr.f32.gmra.mrb[0].mxu0 %v392
    %v1143 = vpop.f32.mrb[0].mxu0
    %v1144 = vadd.f32 0.0, %v1143
    %v1145 = vpop.f32.mrb[0].mxu0
    %1146 = vdwg.mxu0
    %v1148 = vsel %vm23, %v981, 0
    %v1151 = vsel %vm23, %v986, 0
    %v1154 = vsel %vm23, %v1060, 0
    %v1157 = vsel %vm23, %v1065, 0
    %1159 = vmatprep.subr.mxu0 0.0
    %1160 = vmatpush1.xpose.msra.mxu0 %v1154
    %1161 = vmatprep.subr.mxu0 0.0
    %1162 = vmatpush1.xpose.msra.mxu0 %v1157
    %1163 = vmatprep.subr.mxu0 0.0
    %1164 = vmatpush1.xpose.msra.mxu0 0.0
    %1165 = vmatprep.subr.mxu0 0.0
    %1166 = vmatpush1.xpose.msra.mxu0 0.0
    %1167 = vmatprep.subr.mxu0 0.0
    %1168 = vmatpush1.xpose.msra.mxu0 0.0
    %1169 = vmatprep.subr.mxu0 0.0
    %1170 = vmatpush1.xpose.msra.mxu0 0.0
    %1171 = vmatprep.subr.mxu0 0.0
    %1172 = vmatpush1.xpose.msra.mxu0 0.0
    %1173 = vmatprep.subr.mxu0 0.0
    %1174 = vmatpush1.xpose.msra.mxu0 0.0
    %1175 = vmatprep.subr.mxu0 0.0
    %1176 = vmatpush1.xpose.msra.mxu0 0.0
    %1177 = vmatprep.subr.mxu0 0.0
    %1178 = vmatpush1.xpose.msra.mxu0 0.0
    %1179 = vmatprep.subr.mxu0 0.0
    %1180 = vmatpush1.xpose.msra.mxu0 0.0
    %1181 = vmatprep.subr.mxu0 0.0
    %1182 = vmatpush1.xpose.msra.mxu0 0.0
    %1183 = vmatprep.subr.mxu0 0.0
    %1184 = vmatpush1.xpose.msra.mxu0 0.0
    %1185 = vmatprep.subr.mxu0 0.0
    %1186 = vmatpush1.xpose.msra.mxu0 0.0
    %1187 = vmatprep.subr.mxu0 0.0
    %1188 = vmatpush1.xpose.msra.mxu0 0.0
    %1189 = vmatprep.subr.mxu0 0.0
    %1190 = vmatpush1.xpose.msra.mxu0 0.0
    %1191 = vmatprep.subr.mxu0 0.0
    %1192 = vmatpush1.xpose.msra.mxu0 0.0
    %1193 = vmatprep.subr.mxu0 0.0
    %1194 = vmatpush1.xpose.msra.mxu0 0.0
    %1195 = vmatprep.subr.mxu0 0.0
    %1196 = vmatpush1.xpose.msra.mxu0 0.0
    %1197 = vmatprep.subr.mxu0 0.0
    %1198 = vmatpush1.xpose.msra.mxu0 0.0
    %1199 = vmatprep.subr.mxu0 0.0
    %1200 = vmatpush1.xpose.msra.mxu0 0.0
    %1201 = vmatprep.subr.mxu0 0.0
    %1202 = vmatpush1.xpose.msra.mxu0 0.0
    %1203 = vmatprep.subr.mxu0 0.0
    %1204 = vmatpush1.xpose.msra.mxu0 0.0
    %1205 = vmatprep.subr.mxu0 0.0
    %1206 = vmatpush1.xpose.msra.mxu0 0.0
    %1207 = vmatprep.subr.mxu0 0.0
    %1208 = vmatpush1.xpose.msra.mxu0 0.0
    %1209 = vmatprep.subr.mxu0 0.0
    %1210 = vmatpush1.xpose.msra.mxu0 0.0
    %1211 = vmatprep.subr.mxu0 0.0
    %1212 = vmatpush1.xpose.msra.mxu0 0.0
    %1213 = vmatprep.subr.mxu0 0.0
    %1214 = vmatpush1.xpose.msra.mxu0 0.0
    %1215 = vmatprep.subr.mxu0 0.0
    %1216 = vmatpush1.xpose.msra.mxu0 0.0
    %1217 = vmatprep.subr.mxu0 0.0
    %1218 = vmatpush1.xpose.msra.mxu0 0.0
    %1219 = vmatprep.subr.mxu0 0.0
    %1220 = vmatpush1.xpose.msra.mxu0 0.0
    %1221 = vmatprep.subr.mxu0 0.0
    %1222 = vmatpush1.xpose.msra.mxu0 0.0
    %1223 = vmatprep.mubr.f32.mxu0 0.0
    %1224 = vmatmul.mubr.f32.gmra.mrb[0].mxu0 %v1148
    %v1225 = vpop.f32.mrb[0].mxu0
    %v1226 = vadd.f32 0.0, %v1225
    %v1227 = vpop.f32.mrb[0].mxu0
    %1228 = vmatprep.mubr.f32.mxu0 0.0
    %1229 = vmatmul.mubr.f32.gmra.mrb[0].mxu0 %v1151
    %v1230 = vpop.f32.mrb[0].mxu0
    %v1231 = vadd.f32 0.0, %v1230
    %v1232 = vpop.f32.mrb[0].mxu0
    %1233 = vdwg.mxu0
    %v1234 = vsel %vm119, %v1226, -inf
    %1235 = vmax.xlane.f32.xlu0 %v1234
    %v1236 = vpop.xlane.xlu0 %1235
    %v1237 = vsel %vm119, %v1231, -inf
    %1238 = vmax.xlane.f32.xlu0 %v1237
    %v1239 = vpop.xlane.xlu0 %1238
    %v1240 = vsub.f32 %v1226, %v1236
    %v1241 = vsub.f32 %v1231, %v1239
    %v1242 = vmul.f32 %v1240, 1.442695
    %v1243 = vpow.pop %v1242
    %v1244 = vmul.f32 %v1241, 1.442695
    %v1245 = vpow.pop %v1244
    %v1246 = vsel %vm119, %v1243, 0.0
    %1247 = vadd.xlane.f32.xlu0 %v1246
    %v1248 = vpop.xlane.xlu0 %1247
    %v1249 = vsel %vm119, %v1245, 0.0
    %1250 = vadd.xlane.f32.xlu0 %v1249
    %v1251 = vpop.xlane.xlu0 %1250
    %v1252 = vrcp.pop %v1248
    %v1253 = vrcp.pop %v1251
    %v1254 = vmul.f32 %v1243, %v1252
    %v1255 = vmul.f32 %v1245, %v1253
    %v1257 = vsel %vm119, %v1254, 0
    %v1260 = vsel %vm119, %v1255, 0
    %1262 = vmatprep.subr.mxu0 0.0
    %1263 = vmatpush1.msra.mxu0 %v1139
    %1264 = vmatprep.subr.mxu0 0.0
    %1265 = vmatpush1.msra.mxu0 %v1144
    %1266 = vmatprep.subr.mxu0 0.0
    %1267 = vmatpush1.msra.mxu0 0.0
    %1268 = vmatprep.subr.mxu0 0.0
    %1269 = vmatpush1.msra.mxu0 0.0
    %1270 = vmatprep.subr.mxu0 0.0
    %1271 = vmatpush1.msra.mxu0 0.0
    %1272 = vmatprep.subr.mxu0 0.0
    %1273 = vmatpush1.msra.mxu0 0.0
    %1274 = vmatprep.subr.mxu0 0.0
    %1275 = vmatpush1.msra.mxu0 0.0
    %1276 = vmatprep.subr.mxu0 0.0
    %1277 = vmatpush1.msra.mxu0 0.0
    %1278 = vmatprep.subr.mxu0 0.0
    %1279 = vmatpush1.msra.mxu0 0.0
    %1280 = vmatprep.subr.mxu0 0.0
    %1281 = vmatpush1.msra.mxu0 0.0
    %1282 = vmatprep.subr.mxu0 0.0
    %1283 = vmatpush1.msra.mxu0 0.0
    %1284 = vmatprep.subr.mxu0 0.0
    %1285 = vmatpush1.msra.mxu0 0.0
    %1286 = vmatprep.subr.mxu0 0.0
    %1287 = vmatpush1.msra.mxu0 0.0
    %1288 = vmatprep.subr.mxu0 0.0
    %1289 = vmatpush1.msra.mxu0 0.0
    %1290 = vmatprep.subr.mxu0 0.0
    %1291 = vmatpush1.msra.mxu0 0.0
    %1292 = vmatprep.subr.mxu0 0.0
    %1293 = vmatpush1.msra.mxu0 0.0
    %1294 = vmatprep.subr.mxu0 0.0
    %1295 = vmatpush1.msra.mxu0 0.0
    %1296 = vmatprep.subr.mxu0 0.0
    %1297 = vmatpush1.msra.mxu0 0.0
    %1298 = vmatprep.subr.mxu0 0.0
    %1299 = vmatpush1.msra.mxu0 0.0
    %1300 = vmatprep.subr.mxu0 0.0
    %1301 = vmatpush1.msra.mxu0 0.0
    %1302 = vmatprep.subr.mxu0 0.0
    %1303 = vmatpush1.msra.mxu0 0.0
    %1304 = vmatprep.subr.mxu0 0.0
    %1305 = vmatpush1.msra.mxu0 0.0
    %1306 = vmatprep.subr.mxu0 0.0
    %1307 = vmatpush1.msra.mxu0 0.0
    %1308 = vmatprep.subr.mxu0 0.0
    %1309 = vmatpush1.msra.mxu0 0.0
    %1310 = vmatprep.subr.mxu0 0.0
    %1311 = vmatpush1.msra.mxu0 0.0
    %1312 = vmatprep.subr.mxu0 0.0
    %1313 = vmatpush1.msra.mxu0 0.0
    %1314 = vmatprep.subr.mxu0 0.0
    %1315 = vmatpush1.msra.mxu0 0.0
    %1316 = vmatprep.subr.mxu0 0.0
    %1317 = vmatpush1.msra.mxu0 0.0
    %1318 = vmatprep.subr.mxu0 0.0
    %1319 = vmatpush1.msra.mxu0 0.0
    %1320 = vmatprep.subr.mxu0 0.0
    %1321 = vmatpush1.msra.mxu0 0.0
    %1322 = vmatprep.subr.mxu0 0.0
    %1323 = vmatpush1.msra.mxu0 0.0
    %1324 = vmatprep.subr.mxu0 0.0
    %1325 = vmatpush1.msra.mxu0 0.0
    %1326 = vmatprep.mubr.f32.mxu0 0.0
    %1327 = vmatmul.mubr.f32.gmra.mrb[0].mxu0 %v1257
    %v1328 = vpop.f32.mrb[0].mxu0
    %v1329 = vadd.f32 0.0, %v1328
    %v1330 = vpop.f32.mrb[0].mxu0
    %1331 = vmatprep.mubr.f32.mxu0 0.0
    %1332 = vmatmul.mubr.f32.gmra.mrb[0].mxu0 %v1260
    %v1333 = vpop.f32.mrb[0].mxu0
    %v1334 = vadd.f32 0.0, %v1333
    %v1335 = vpop.f32.mrb[0].mxu0
    %1336 = vdwg.mxu0
    %v1337 = vld [vmem:[%s2 + $0x1e0] sm:$0xff]
    %v1339 = vsel %vm23, %v1329, 0
    %v1342 = vsel %vm23, %v1334, 0
    %1344 = vmatprep.subr.mxu0 0.0
    %1345 = vmatpush1.msra.mxu0 %v1337
    %1346 = vmatprep.subr.mxu0 0.0
    %1347 = vmatpush1.msra.mxu0 0.0
    %1348 = vmatprep.subr.mxu0 0.0
    %1349 = vmatpush1.msra.mxu0 0.0
    %1350 = vmatprep.subr.mxu0 0.0
    %1351 = vmatpush1.msra.mxu0 0.0
    %1352 = vmatprep.subr.mxu0 0.0
    %1353 = vmatpush1.msra.mxu0 0.0
    %1354 = vmatprep.subr.mxu0 0.0
    %1355 = vmatpush1.msra.mxu0 0.0
    %1356 = vmatprep.subr.mxu0 0.0
    %1357 = vmatpush1.msra.mxu0 0.0
    %1358 = vmatprep.subr.mxu0 0.0
    %1359 = vmatpush1.msra.mxu0 0.0
    %1360 = vmatprep.subr.mxu0 0.0
    %1361 = vmatpush1.msra.mxu0 0.0
    %1362 = vmatprep.subr.mxu0 0.0
    %1363 = vmatpush1.msra.mxu0 0.0
    %1364 = vmatprep.subr.mxu0 0.0
    %1365 = vmatpush1.msra.mxu0 0.0
    %1366 = vmatprep.subr.mxu0 0.0
    %1367 = vmatpush1.msra.mxu0 0.0
    %1368 = vmatprep.subr.mxu0 0.0
    %1369 = vmatpush1.msra.mxu0 0.0
    %1370 = vmatprep.subr.mxu0 0.0
    %1371 = vmatpush1.msra.mxu0 0.0
    %1372 = vmatprep.subr.mxu0 0.0
    %1373 = vmatpush1.msra.mxu0 0.0
    %1374 = vmatprep.subr.mxu0 0.0
    %1375 = vmatpush1.msra.mxu0 0.0
    %1376 = vmatprep.subr.mxu0 0.0
    %1377 = vmatpush1.msra.mxu0 0.0
    %1378 = vmatprep.subr.mxu0 0.0
    %1379 = vmatpush1.msra.mxu0 0.0
    %1380 = vmatprep.subr.mxu0 0.0
    %1381 = vmatpush1.msra.mxu0 0.0
    %1382 = vmatprep.subr.mxu0 0.0
    %1383 = vmatpush1.msra.mxu0 0.0
    %1384 = vmatprep.subr.mxu0 0.0
    %1385 = vmatpush1.msra.mxu0 0.0
    %1386 = vmatprep.subr.mxu0 0.0
    %1387 = vmatpush1.msra.mxu0 0.0
    %1388 = vmatprep.subr.mxu0 0.0
    %1389 = vmatpush1.msra.mxu0 0.0
    %1390 = vmatprep.subr.mxu0 0.0
    %1391 = vmatpush1.msra.mxu0 0.0
    %1392 = vmatprep.subr.mxu0 0.0
    %1393 = vmatpush1.msra.mxu0 0.0
    %1394 = vmatprep.subr.mxu0 0.0
    %1395 = vmatpush1.msra.mxu0 0.0
    %1396 = vmatprep.subr.mxu0 0.0
    %1397 = vmatpush1.msra.mxu0 0.0
    %1398 = vmatprep.subr.mxu0 0.0
    %1399 = vmatpush1.msra.mxu0 0.0
    %1400 = vmatprep.subr.mxu0 0.0
    %1401 = vmatpush1.msra.mxu0 0.0
    %1402 = vmatprep.subr.mxu0 0.0
    %1403 = vmatpush1.msra.mxu0 0.0
    %1404 = vmatprep.subr.mxu0 0.0
    %1405 = vmatpush1.msra.mxu0 0.0
    %1406 = vmatprep.subr.mxu0 0.0
    %1407 = vmatpush1.msra.mxu0 0.0
    %1408 = vmatprep.mubr.f32.mxu0 0.0
    %1409 = vmatmul.mubr.f32.gmra.mrb[0].mxu0 %v1339
    %v1410 = vpop.f32.mrb[0].mxu0
    %v1411 = vadd.f32 0.0, %v1410
    %v1412 = vpop.f32.mrb[0].mxu0
    %1413 = vmatprep.mubr.f32.mxu0 0.0
    %1414 = vmatmul.mubr.f32.gmra.mrb[0].mxu0 %v1342
    %v1415 = vpop.f32.mrb[0].mxu0
    %v1416 = vadd.f32 0.0, %v1415
    %v1417 = vpop.f32.mrb[0].mxu0
    %1418 = vdwg.mxu0
    %v1419 = vadd.f32 %v903, %v1411
    %v1420 = vadd.f32 %v904, %v1416
    %v1421 = vld [vmem:[%s2 + $0x90] sm:$0xff]
    %v1422 = vld [vmem:[%s2 + $0x98] sm:$0xff]
    %v1423 = vld [vmem:[%s2 + $0xa0] sm:$0xff]
    %v1424 = vld [vmem:[%s2 + $0xa8] sm:$0xff]
    %v1425 = vld [vmem:[%s2 + $0xd2] sm:$0x1]
    %v1426 = vlaneseq
    %v1427 = vshrl.u32 %v1426, 7
    %v1428 = vsub.s32 0, %v1427
    %v1429 = vrot.slane %v1425, %v1428
    %1430 = vmatprep.subr.mxu0 0.0
    %1431 = vmatpush1.msra.mxu0 %v1421
    %1432 = vmatprep.subr.mxu0 0.0
    %1433 = vmatpush1.msra.mxu0 %v1422
    %1434 = vmatprep.subr.mxu0 0.0
    %1435 = vmatpush1.msra.mxu0 %v1423
    %1436 = vmatprep.subr.mxu0 0.0
    %1437 = vmatpush1.msra.mxu0 %v1424
    %1438 = vmatprep.subr.mxu0 0.0
    %1439 = vmatpush1.msra.mxu0 0.0
    %1440 = vmatprep.subr.mxu0 0.0
    %1441 = vmatpush1.msra.mxu0 0.0
    %1442 = vmatprep.subr.mxu0 0.0
    %1443 = vmatpush1.msra.mxu0 0.0
    %1444 = vmatprep.subr.mxu0 0.0
    %1445 = vmatpush1.msra.mxu0 0.0
    %1446 = vmatprep.subr.mxu0 0.0
    %1447 = vmatpush1.msra.mxu0 0.0
    %1448 = vmatprep.subr.mxu0 0.0
    %1449 = vmatpush1.msra.mxu0 0.0
    %1450 = vmatprep.subr.mxu0 0.0
    %1451 = vmatpush1.msra.mxu0 0.0
    %1452 = vmatprep.subr.mxu0 0.0
    %1453 = vmatpush1.msra.mxu0 0.0
    %1454 = vmatprep.subr.mxu0 0.0
    %1455 = vmatpush1.msra.mxu0 0.0
    %1456 = vmatprep.subr.mxu0 0.0
    %1457 = vmatpush1.msra.mxu0 0.0
    %1458 = vmatprep.subr.mxu0 0.0
    %1459 = vmatpush1.msra.mxu0 0.0
    %1460 = vmatprep.subr.mxu0 0.0
    %1461 = vmatpush1.msra.mxu0 0.0
    %1462 = vmatprep.subr.mxu0 0.0
    %1463 = vmatpush1.msra.mxu0 0.0
    %1464 = vmatprep.subr.mxu0 0.0
    %1465 = vmatpush1.msra.mxu0 0.0
    %1466 = vmatprep.subr.mxu0 0.0
    %1467 = vmatpush1.msra.mxu0 0.0
    %1468 = vmatprep.subr.mxu0 0.0
    %1469 = vmatpush1.msra.mxu0 0.0
    %1470 = vmatprep.subr.mxu0 0.0
    %1471 = vmatpush1.msra.mxu0 0.0
    %1472 = vmatprep.subr.mxu0 0.0
    %1473 = vmatpush1.msra.mxu0 0.0
    %1474 = vmatprep.subr.mxu0 0.0
    %1475 = vmatpush1.msra.mxu0 0.0
    %1476 = vmatprep.subr.mxu0 0.0
    %1477 = vmatpush1.msra.mxu0 0.0
    %1478 = vmatprep.subr.mxu0 0.0
    %1479 = vmatpush1.msra.mxu0 0.0
    %1480 = vmatprep.subr.mxu0 0.0
    %1481 = vmatpush1.msra.mxu0 0.0
    %1482 = vmatprep.subr.mxu0 0.0
    %1483 = vmatpush1.msra.mxu0 0.0
    %1484 = vmatprep.subr.mxu0 0.0
    %1485 = vmatpush1.msra.mxu0 0.0
    %1486 = vmatprep.subr.mxu0 0.0
    %1487 = vmatpush1.msra.mxu0 0.0
    %1488 = vmatprep.subr.mxu0 0.0
    %1489 = vmatpush1.msra.mxu0 0.0
    %1490 = vmatprep.subr.mxu0 0.0
    %1491 = vmatpush1.msra.mxu0 0.0
    %1492 = vmatprep.subr.mxu0 0.0
    %1493 = vmatpush1.msra.mxu0 0.0
    %1494 = vmatprep.mubr.f32.mxu0 0.0
    %1495 = vmatmul.mubr.f32.gmra.mrb[0].mxu0 %v389
    %v1496 = vpop.f32.mrb[0].mxu0
    %v1497 = vadd.f32 %v1429, %v1496
    %v1498 = vpop.f32.mrb[0].mxu0
    %1499 = vmatprep.mubr.f32.mxu0 0.0
    %1500 = vmatmul.mubr.f32.gmra.mrb[0].mxu0 %v392
    %v1501 = vpop.f32.mrb[0].mxu0
    %v1502 = vadd.f32 %v1429, %v1501
    %v1503 = vpop.f32.mrb[0].mxu0
    %1504 = vdwg.mxu0
    %v1505 = vld [vmem:[%s2 + $0x118] sm:$0xff]
    %v1506 = vld [vmem:[%s2 + $0x120] sm:$0xff]
    %v1507 = vld [vmem:[%s2 + $0x128] sm:$0xff]
    %v1508 = vld [vmem:[%s2 + $0x130] sm:$0xff]
    %1509 = vmatprep.subr.mxu0 0.0
    %1510 = vmatpush1.msra.mxu0 %v1505
    %1511 = vmatprep.subr.mxu0 0.0
    %1512 = vmatpush1.msra.mxu0 %v1506
    %1513 = vmatprep.subr.mxu0 0.0
    %1514 = vmatpush1.msra.mxu0 %v1507
    %1515 = vmatprep.subr.mxu0 0.0
    %1516 = vmatpush1.msra.mxu0 %v1508
    %1517 = vmatprep.subr.mxu0 0.0
    %1518 = vmatpush1.msra.mxu0 0.0
    %1519 = vmatprep.subr.mxu0 0.0
    %1520 = vmatpush1.msra.mxu0 0.0
    %1521 = vmatprep.subr.mxu0 0.0
    %1522 = vmatpush1.msra.mxu0 0.0
    %1523 = vmatprep.subr.mxu0 0.0
    %1524 = vmatpush1.msra.mxu0 0.0
    %1525 = vmatprep.subr.mxu0 0.0
    %1526 = vmatpush1.msra.mxu0 0.0
    %1527 = vmatprep.subr.mxu0 0.0
    %1528 = vmatpush1.msra.mxu0 0.0
    %1529 = vmatprep.subr.mxu0 0.0
    %1530 = vmatpush1.msra.mxu0 0.0
    %1531 = vmatprep.subr.mxu0 0.0
    %1532 = vmatpush1.msra.mxu0 0.0
    %1533 = vmatprep.subr.mxu0 0.0
    %1534 = vmatpush1.msra.mxu0 0.0
    %1535 = vmatprep.subr.mxu0 0.0
    %1536 = vmatpush1.msra.mxu0 0.0
    %1537 = vmatprep.subr.mxu0 0.0
    %1538 = vmatpush1.msra.mxu0 0.0
    %1539 = vmatprep.subr.mxu0 0.0
    %1540 = vmatpush1.msra.mxu0 0.0
    %1541 = vmatprep.subr.mxu0 0.0
    %1542 = vmatpush1.msra.mxu0 0.0
    %1543 = vmatprep.subr.mxu0 0.0
    %1544 = vmatpush1.msra.mxu0 0.0
    %1545 = vmatprep.subr.mxu0 0.0
    %1546 = vmatpush1.msra.mxu0 0.0
    %1547 = vmatprep.subr.mxu0 0.0
    %1548 = vmatpush1.msra.mxu0 0.0
    %1549 = vmatprep.subr.mxu0 0.0
    %1550 = vmatpush1.msra.mxu0 0.0
    %1551 = vmatprep.subr.mxu0 0.0
    %1552 = vmatpush1.msra.mxu0 0.0
    %1553 = vmatprep.subr.mxu0 0.0
    %1554 = vmatpush1.msra.mxu0 0.0
    %1555 = vmatprep.subr.mxu0 0.0
    %1556 = vmatpush1.msra.mxu0 0.0
    %1557 = vmatprep.subr.mxu0 0.0
    %1558 = vmatpush1.msra.mxu0 0.0
    %1559 = vmatprep.subr.mxu0 0.0
    %1560 = vmatpush1.msra.mxu0 0.0
    %1561 = vmatprep.subr.mxu0 0.0
    %1562 = vmatpush1.msra.mxu0 0.0
    %1563 = vmatprep.subr.mxu0 0.0
    %1564 = vmatpush1.msra.mxu0 0.0
    %1565 = vmatprep.subr.mxu0 0.0
    %1566 = vmatpush1.msra.mxu0 0.0
    %1567 = vmatprep.subr.mxu0 0.0
    %1568 = vmatpush1.msra.mxu0 0.0
    %1569 = vmatprep.subr.mxu0 0.0
    %1570 = vmatpush1.msra.mxu0 0.0
    %1571 = vmatprep.subr.mxu0 0.0
    %1572 = vmatpush1.msra.mxu0 0.0
    %1573 = vmatprep.mubr.f32.mxu0 0.0
    %1574 = vmatmul.mubr.f32.gmra.mrb[0].mxu0 %v389
    %v1575 = vpop.f32.mrb[0].mxu0
    %v1576 = vadd.f32 0.0, %v1575
    %v1577 = vpop.f32.mrb[0].mxu0
    %1578 = vmatprep.mubr.f32.mxu0 0.0
    %1579 = vmatmul.mubr.f32.gmra.mrb[0].mxu0 %v392
    %v1580 = vpop.f32.mrb[0].mxu0
    %v1581 = vadd.f32 0.0, %v1580
    %v1582 = vpop.f32.mrb[0].mxu0
    %1583 = vdwg.mxu0
    %v1584 = vld [vmem:[%s2 + $0x198] sm:$0xff]
    %v1585 = vld [vmem:[%s2 + $0x1a0] sm:$0xff]
    %v1586 = vld [vmem:[%s2 + $0x1a8] sm:$0xff]
    %v1587 = vld [vmem:[%s2 + $0x1b0] sm:$0xff]
    %1588 = vmatprep.subr.mxu0 0.0
    %1589 = vmatpush1.msra.mxu0 %v1584
    %1590 = vmatprep.subr.mxu0 0.0
    %1591 = vmatpush1.msra.mxu0 %v1585
    %1592 = vmatprep.subr.mxu0 0.0
    %1593 = vmatpush1.msra.mxu0 %v1586
    %1594 = vmatprep.subr.mxu0 0.0
    %1595 = vmatpush1.msra.mxu0 %v1587
    %1596 = vmatprep.subr.mxu0 0.0
    %1597 = vmatpush1.msra.mxu0 0.0
    %1598 = vmatprep.subr.mxu0 0.0
    %1599 = vmatpush1.msra.mxu0 0.0
    %1600 = vmatprep.subr.mxu0 0.0
    %1601 = vmatpush1.msra.mxu0 0.0
    %1602 = vmatprep.subr.mxu0 0.0
    %1603 = vmatpush1.msra.mxu0 0.0
    %1604 = vmatprep.subr.mxu0 0.0
    %1605 = vmatpush1.msra.mxu0 0.0
    %1606 = vmatprep.subr.mxu0 0.0
    %1607 = vmatpush1.msra.mxu0 0.0
    %1608 = vmatprep.subr.mxu0 0.0
    %1609 = vmatpush1.msra.mxu0 0.0
    %1610 = vmatprep.subr.mxu0 0.0
    %1611 = vmatpush1.msra.mxu0 0.0
    %1612 = vmatprep.subr.mxu0 0.0
    %1613 = vmatpush1.msra.mxu0 0.0
    %1614 = vmatprep.subr.mxu0 0.0
    %1615 = vmatpush1.msra.mxu0 0.0
    %1616 = vmatprep.subr.mxu0 0.0
    %1617 = vmatpush1.msra.mxu0 0.0
    %1618 = vmatprep.subr.mxu0 0.0
    %1619 = vmatpush1.msra.mxu0 0.0
    %1620 = vmatprep.subr.mxu0 0.0
    %1621 = vmatpush1.msra.mxu0 0.0
    %1622 = vmatprep.subr.mxu0 0.0
    %1623 = vmatpush1.msra.mxu0 0.0
    %1624 = vmatprep.subr.mxu0 0.0
    %1625 = vmatpush1.msra.mxu0 0.0
    %1626 = vmatprep.subr.mxu0 0.0
    %1627 = vmatpush1.msra.mxu0 0.0
    %1628 = vmatprep.subr.mxu0 0.0
    %1629 = vmatpush1.msra.mxu0 0.0
    %1630 = vmatprep.subr.mxu0 0.0
    %1631 = vmatpush1.msra.mxu0 0.0
    %1632 = vmatprep.subr.mxu0 0.0
    %1633 = vmatpush1.msra.mxu0 0.0
    %1634 = vmatprep.subr.mxu0 0.0
    %1635 = vmatpush1.msra.mxu0 0.0
    %1636 = vmatprep.subr.mxu0 0.0
    %1637 = vmatpush1.msra.mxu0 0.0
    %1638 = vmatprep.subr.mxu0 0.0
    %1639 = vmatpush1.msra.mxu0 0.0
    %1640 = vmatprep.subr.mxu0 0.0
    %1641 = vmatpush1.msra.mxu0 0.0
    %1642 = vmatprep.subr.mxu0 0.0
    %1643 = vmatpush1.msra.mxu0 0.0
    %1644 = vmatprep.subr.mxu0 0.0
    %1645 = vmatpush1.msra.mxu0 0.0
    %1646 = vmatprep.subr.mxu0 0.0
    %1647 = vmatpush1.msra.mxu0 0.0
    %1648 = vmatprep.subr.mxu0 0.0
    %1649 = vmatpush1.msra.mxu0 0.0
    %1650 = vmatprep.subr.mxu0 0.0
    %1651 = vmatpush1.msra.mxu0 0.0
    %1652 = vmatprep.mubr.f32.mxu0 0.0
    %1653 = vmatmul.mubr.f32.gmra.mrb[0].mxu0 %v389
    %v1654 = vpop.f32.mrb[0].mxu0
    %v1655 = vadd.f32 0.0, %v1654
    %v1656 = vpop.f32.mrb[0].mxu0
    %1657 = vmatprep.mubr.f32.mxu0 0.0
    %1658 = vmatmul.mubr.f32.gmra.mrb[0].mxu0 %v392
    %v1659 = vpop.f32.mrb[0].mxu0
    %v1660 = vadd.f32 0.0, %v1659
    %v1661 = vpop.f32.mrb[0].mxu0
    %1662 = vdwg.mxu0
    %v1664 = vsel %vm23, %v1497, 0
    %v1667 = vsel %vm23, %v1502, 0
    %v1670 = vsel %vm23, %v1576, 0
    %v1673 = vsel %vm23, %v1581, 0
    %1675 = vmatprep.subr.mxu0 0.0
    %1676 = vmatpush1.xpose.msra.mxu0 %v1670
    %1677 = vmatprep.subr.mxu0 0.0
    %1678 = vmatpush1.xpose.msra.mxu0 %v1673
    %1679 = vmatprep.subr.mxu0 0.0
    %1680 = vmatpush1.xpose.msra.mxu0 0.0
    %1681 = vmatprep.subr.mxu0 0.0
    %1682 = vmatpush1.xpose.msra.mxu0 0.0
    %1683 = vmatprep.subr.mxu0 0.0
    %1684 = vmatpush1.xpose.msra.mxu0 0.0
    %1685 = vmatprep.subr.mxu0 0.0
    %1686 = vmatpush1.xpose.msra.mxu0 0.0
    %1687 = vmatprep.subr.mxu0 0.0
    %1688 = vmatpush1.xpose.msra.mxu0 0.0
    %1689 = vmatprep.subr.mxu0 0.0
    %1690 = vmatpush1.xpose.msra.mxu0 0.0
    %1691 = vmatprep.subr.mxu0 0.0
    %1692 = vmatpush1.xpose.msra.mxu0 0.0
    %1693 = vmatprep.subr.mxu0 0.0
    %1694 = vmatpush1.xpose.msra.mxu0 0.0
    %1695 = vmatprep.subr.mxu0 0.0
    %1696 = vmatpush1.xpose.msra.mxu0 0.0
    %1697 = vmatprep.subr.mxu0 0.0
    %1698 = vmatpush1.xpose.msra.mxu0 0.0
    %1699 = vmatprep.subr.mxu0 0.0
    %1700 = vmatpush1.xpose.msra.mxu0 0.0
    %1701 = vmatprep.subr.mxu0 0.0
    %1702 = vmatpush1.xpose.msra.mxu0 0.0
    %1703 = vmatprep.subr.mxu0 0.0
    %1704 = vmatpush1.xpose.msra.mxu0 0.0
    %1705 = vmatprep.subr.mxu0 0.0
    %1706 = vmatpush1.xpose.msra.mxu0 0.0
    %1707 = vmatprep.subr.mxu0 0.0
    %1708 = vmatpush1.xpose.msra.mxu0 0.0
    %1709 = vmatprep.subr.mxu0 0.0
    %1710 = vmatpush1.xpose.msra.mxu0 0.0
    %1711 = vmatprep.subr.mxu0 0.0
    %1712 = vmatpush1.xpose.msra.mxu0 0.0
    %1713 = vmatprep.subr.mxu0 0.0
    %1714 = vmatpush1.xpose.msra.mxu0 0.0
    %1715 = vmatprep.subr.mxu0 0.0
    %1716 = vmatpush1.xpose.msra.mxu0 0.0
    %1717 = vmatprep.subr.mxu0 0.0
    %1718 = vmatpush1.xpose.msra.mxu0 0.0
    %1719 = vmatprep.subr.mxu0 0.0
    %1720 = vmatpush1.xpose.msra.mxu0 0.0
    %1721 = vmatprep.subr.mxu0 0.0
    %1722 = vmatpush1.xpose.msra.mxu0 0.0
    %1723 = vmatprep.subr.mxu0 0.0
    %1724 = vmatpush1.xpose.msra.mxu0 0.0
    %1725 = vmatprep.subr.mxu0 0.0
    %1726 = vmatpush1.xpose.msra.mxu0 0.0
    %1727 = vmatprep.subr.mxu0 0.0
    %1728 = vmatpush1.xpose.msra.mxu0 0.0
    %1729 = vmatprep.subr.mxu0 0.0
    %1730 = vmatpush1.xpose.msra.mxu0 0.0
    %1731 = vmatprep.subr.mxu0 0.0
    %1732 = vmatpush1.xpose.msra.mxu0 0.0
    %1733 = vmatprep.subr.mxu0 0.0
    %1734 = vmatpush1.xpose.msra.mxu0 0.0
    %1735 = vmatprep.subr.mxu0 0.0
    %1736 = vmatpush1.xpose.msra.mxu0 0.0
    %1737 = vmatprep.subr.mxu0 0.0
    %1738 = vmatpush1.xpose.msra.mxu0 0.0
    %1739 = vmatprep.mubr.f32.mxu0 0.0
    %1740 = vmatmul.mubr.f32.gmra.mrb[0].mxu0 %v1664
    %v1741 = vpop.f32.mrb[0].mxu0
    %v1742 = vadd.f32 0.0, %v1741
    %v1743 = vpop.f32.mrb[0].mxu0
    %1744 = vmatprep.mubr.f32.mxu0 0.0
    %1745 = vmatmul.mubr.f32.gmra.mrb[0].mxu0 %v1667
    %v1746 = vpop.f32.mrb[0].mxu0
    %v1747 = vadd.f32 0.0, %v1746
    %v1748 = vpop.f32.mrb[0].mxu0
    %1749 = vdwg.mxu0
    %v1750 = vsel %vm119, %v1742, -inf
    %1751 = vmax.xlane.f32.xlu0 %v1750
    %v1752 = vpop.xlane.xlu0 %1751
    %v1753 = vsel %vm119, %v1747, -inf
    %1754 = vmax.xlane.f32.xlu0 %v1753
    %v1755 = vpop.xlane.xlu0 %1754
    %v1756 = vsub.f32 %v1742, %v1752
    %v1757 = vsub.f32 %v1747, %v1755
    %v1758 = vmul.f32 %v1756, 1.442695
    %v1759 = vpow.pop %v1758
    %v1760 = vmul.f32 %v1757, 1.442695
    %v1761 = vpow.pop %v1760
    %v1762 = vsel %vm119, %v1759, 0.0
    %1763 = vadd.xlane.f32.xlu0 %v1762
    %v1764 = vpop.xlane.xlu0 %1763
    %v1765 = vsel %vm119, %v1761, 0.0
    %1766 = vadd.xlane.f32.xlu0 %v1765
    %v1767 = vpop.xlane.xlu0 %1766
    %v1768 = vrcp.pop %v1764
    %v1769 = vrcp.pop %v1767
    %v1770 = vmul.f32 %v1759, %v1768
    %v1771 = vmul.f32 %v1761, %v1769
    %v1773 = vsel %vm119, %v1770, 0
    %v1776 = vsel %vm119, %v1771, 0
    %1778 = vmatprep.subr.mxu0 0.0
    %1779 = vmatpush1.msra.mxu0 %v1655
    %1780 = vmatprep.subr.mxu0 0.0
    %1781 = vmatpush1.msra.mxu0 %v1660
    %1782 = vmatprep.subr.mxu0 0.0
    %1783 = vmatpush1.msra.mxu0 0.0
    %1784 = vmatprep.subr.mxu0 0.0
    %1785 = vmatpush1.msra.mxu0 0.0
    %1786 = vmatprep.subr.mxu0 0.0
    %1787 = vmatpush1.msra.mxu0 0.0
    %1788 = vmatprep.subr.mxu0 0.0
    %1789 = vmatpush1.msra.mxu0 0.0
    %1790 = vmatprep.subr.mxu0 0.0
    %1791 = vmatpush1.msra.mxu0 0.0
    %1792 = vmatprep.subr.mxu0 0.0
    %1793 = vmatpush1.msra.mxu0 0.0
    %1794 = vmatprep.subr.mxu0 0.0
    %1795 = vmatpush1.msra.mxu0 0.0
    %1796 = vmatprep.subr.mxu0 0.0
    %1797 = vmatpush1.msra.mxu0 0.0
    %1798 = vmatprep.subr.mxu0 0.0
    %1799 = vmatpush1.msra.mxu0 0.0
    %1800 = vmatprep.subr.mxu0 0.0
    %1801 = vmatpush1.msra.mxu0 0.0
    %1802 = vmatprep.subr.mxu0 0.0
    %1803 = vmatpush1.msra.mxu0 0.0
    %1804 = vmatprep.subr.mxu0 0.0
    %1805 = vmatpush1.msra.mxu0 0.0
    %1806 = vmatprep.subr.mxu0 0.0
    %1807 = vmatpush1.msra.mxu0 0.0
    %1808 = vmatprep.subr.mxu0 0.0
    %1809 = vmatpush1.msra.mxu0 0.0
    %1810 = vmatprep.subr.mxu0 0.0
    %1811 = vmatpush1.msra.mxu0 0.0
    %1812 = vmatprep.subr.mxu0 0.0
    %1813 = vmatpush1.msra.mxu0 0.0
    %1814 = vmatprep.subr.mxu0 0.0
    %1815 = vmatpush1.msra.mxu0 0.0
    %1816 = vmatprep.subr.mxu0 0.0
    %1817 = vmatpush1.msra.mxu0 0.0
    %1818 = vmatprep.subr.mxu0 0.0
    %1819 = vmatpush1.msra.mxu0 0.0
    %1820 = vmatprep.subr.mxu0 0.0
    %1821 = vmatpush1.msra.mxu0 0.0
    %1822 = vmatprep.subr.mxu0 0.0
    %1823 = vmatpush1.msra.mxu0 0.0
    %1824 = vmatprep.subr.mxu0 0.0
    %1825 = vmatpush1.msra.mxu0 0.0
    %1826 = vmatprep.subr.mxu0 0.0
    %1827 = vmatpush1.msra.mxu0 0.0
    %1828 = vmatprep.subr.mxu0 0.0
    %1829 = vmatpush1.msra.mxu0 0.0
    %1830 = vmatprep.subr.mxu0 0.0
    %1831 = vmatpush1.msra.mxu0 0.0
    %1832 = vmatprep.subr.mxu0 0.0
    %1833 = vmatpush1.msra.mxu0 0.0
    %1834 = vmatprep.subr.mxu0 0.0
    %1835 = vmatpush1.msra.mxu0 0.0
    %1836 = vmatprep.subr.mxu0 0.0
    %1837 = vmatpush1.msra.mxu0 0.0
    %1838 = vmatprep.subr.mxu0 0.0
    %1839 = vmatpush1.msra.mxu0 0.0
    %1840 = vmatprep.subr.mxu0 0.0
    %1841 = vmatpush1.msra.mxu0 0.0
    %1842 = vmatprep.mubr.f32.mxu0 0.0
    %1843 = vmatmul.mubr.f32.gmra.mrb[0].mxu0 %v1773
    %v1844 = vpop.f32.mrb[0].mxu0
    %v1845 = vadd.f32 0.0, %v1844
    %v1846 = vpop.f32.mrb[0].mxu0
    %1847 = vmatprep.mubr.f32.mxu0 0.0
    %1848 = vmatmul.mubr.f32.gmra.mrb[0].mxu0 %v1776
    %v1849 = vpop.f32.mrb[0].mxu0
    %v1850 = vadd.f32 0.0, %v1849
    %v1851 = vpop.f32.mrb[0].mxu0
    %1852 = vdwg.mxu0
    %v1853 = vld [vmem:[%s2 + $0x1e8] sm:$0xff]
    %v1855 = vsel %vm23, %v1845, 0
    %v1858 = vsel %vm23, %v1850, 0
    %1860 = vmatprep.subr.mxu0 0.0
    %1861 = vmatpush1.msra.mxu0 %v1853
    %1862 = vmatprep.subr.mxu0 0.0
    %1863 = vmatpush1.msra.mxu0 0.0
    %1864 = vmatprep.subr.mxu0 0.0
    %1865 = vmatpush1.msra.mxu0 0.0
    %1866 = vmatprep.subr.mxu0 0.0
    %1867 = vmatpush1.msra.mxu0 0.0
    %1868 = vmatprep.subr.mxu0 0.0
    %1869 = vmatpush1.msra.mxu0 0.0
    %1870 = vmatprep.subr.mxu0 0.0
    %1871 = vmatpush1.msra.mxu0 0.0
    %1872 = vmatprep.subr.mxu0 0.0
    %1873 = vmatpush1.msra.mxu0 0.0
    %1874 = vmatprep.subr.mxu0 0.0
    %1875 = vmatpush1.msra.mxu0 0.0
    %1876 = vmatprep.subr.mxu0 0.0
    %1877 = vmatpush1.msra.mxu0 0.0
    %1878 = vmatprep.subr.mxu0 0.0
    %1879 = vmatpush1.msra.mxu0 0.0
    %1880 = vmatprep.subr.mxu0 0.0
    %1881 = vmatpush1.msra.mxu0 0.0
    %1882 = vmatprep.subr.mxu0 0.0
    %1883 = vmatpush1.msra.mxu0 0.0
    %1884 = vmatprep.subr.mxu0 0.0
    %1885 = vmatpush1.msra.mxu0 0.0
    %1886 = vmatprep.subr.mxu0 0.0
    %1887 = vmatpush1.msra.mxu0 0.0
    %1888 = vmatprep.subr.mxu0 0.0
    %1889 = vmatpush1.msra.mxu0 0.0
    %1890 = vmatprep.subr.mxu0 0.0
    %1891 = vmatpush1.msra.mxu0 0.0
    %1892 = vmatprep.subr.mxu0 0.0
    %1893 = vmatpush1.msra.mxu0 0.0
    %1894 = vmatprep.subr.mxu0 0.0
    %1895 = vmatpush1.msra.mxu0 0.0
    %1896 = vmatprep.subr.mxu0 0.0
    %1897 = vmatpush1.msra.mxu0 0.0
    %1898 = vmatprep.subr.mxu0 0.0
    %1899 = vmatpush1.msra.mxu0 0.0
    %1900 = vmatprep.subr.mxu0 0.0
    %1901 = vmatpush1.msra.mxu0 0.0
    %1902 = vmatprep.subr.mxu0 0.0
    %1903 = vmatpush1.msra.mxu0 0.0
    %1904 = vmatprep.subr.mxu0 0.0
    %1905 = vmatpush1.msra.mxu0 0.0
    %1906 = vmatprep.subr.mxu0 0.0
    %1907 = vmatpush1.msra.mxu0 0.0
    %1908 = vmatprep.subr.mxu0 0.0
    %1909 = vmatpush1.msra.mxu0 0.0
    %1910 = vmatprep.subr.mxu0 0.0
    %1911 = vmatpush1.msra.mxu0 0.0
    %1912 = vmatprep.subr.mxu0 0.0
    %1913 = vmatpush1.msra.mxu0 0.0
    %1914 = vmatprep.subr.mxu0 0.0
    %1915 = vmatpush1.msra.mxu0 0.0
    %1916 = vmatprep.subr.mxu0 0.0
    %1917 = vmatpush1.msra.mxu0 0.0
    %1918 = vmatprep.subr.mxu0 0.0
    %1919 = vmatpush1.msra.mxu0 0.0
    %1920 = vmatprep.subr.mxu0 0.0
    %1921 = vmatpush1.msra.mxu0 0.0
    %1922 = vmatprep.subr.mxu0 0.0
    %1923 = vmatpush1.msra.mxu0 0.0
    %1924 = vmatprep.mubr.f32.mxu0 0.0
    %1925 = vmatmul.mubr.f32.gmra.mrb[0].mxu0 %v1855
    %v1926 = vpop.f32.mrb[0].mxu0
    %v1927 = vadd.f32 0.0, %v1926
    %v1928 = vpop.f32.mrb[0].mxu0
    %1929 = vmatprep.mubr.f32.mxu0 0.0
    %1930 = vmatmul.mubr.f32.gmra.mrb[0].mxu0 %v1858
    %v1931 = vpop.f32.mrb[0].mxu0
    %v1932 = vadd.f32 0.0, %v1931
    %v1933 = vpop.f32.mrb[0].mxu0
    %1934 = vdwg.mxu0
    %v1935 = vadd.f32 %v1419, %v1927
    %v1936 = vadd.f32 %v1420, %v1932
    %v1937 = vld [vmem:[%s2 + $0xb0] sm:$0xff]
    %v1938 = vld [vmem:[%s2 + $0xb8] sm:$0xff]
    %v1939 = vld [vmem:[%s2 + $0xc0] sm:$0xff]
    %v1940 = vld [vmem:[%s2 + $0xc8] sm:$0xff]
    %v1941 = vld [vmem:[%s2 + $0xd3] sm:$0x1]
    %v1942 = vlaneseq
    %v1943 = vshrl.u32 %v1942, 7
    %v1944 = vsub.s32 0, %v1943
    %v1945 = vrot.slane %v1941, %v1944
    %1946 = vmatprep.subr.mxu0 0.0
    %1947 = vmatpush1.msra.mxu0 %v1937
    %1948 = vmatprep.subr.mxu0 0.0
    %1949 = vmatpush1.msra.mxu0 %v1938
    %1950 = vmatprep.subr.mxu0 0.0
    %1951 = vmatpush1.msra.mxu0 %v1939
    %1952 = vmatprep.subr.mxu0 0.0
    %1953 = vmatpush1.msra.mxu0 %v1940
    %1954 = vmatprep.subr.mxu0 0.0
    %1955 = vmatpush1.msra.mxu0 0.0
    %1956 = vmatprep.subr.mxu0 0.0
    %1957 = vmatpush1.msra.mxu0 0.0
    %1958 = vmatprep.subr.mxu0 0.0
    %1959 = vmatpush1.msra.mxu0 0.0
    %1960 = vmatprep.subr.mxu0 0.0
    %1961 = vmatpush1.msra.mxu0 0.0
    %1962 = vmatprep.subr.mxu0 0.0
    %1963 = vmatpush1.msra.mxu0 0.0
    %1964 = vmatprep.subr.mxu0 0.0
    %1965 = vmatpush1.msra.mxu0 0.0
    %1966 = vmatprep.subr.mxu0 0.0
    %1967 = vmatpush1.msra.mxu0 0.0
    %1968 = vmatprep.subr.mxu0 0.0
    %1969 = vmatpush1.msra.mxu0 0.0
    %1970 = vmatprep.subr.mxu0 0.0
    %1971 = vmatpush1.msra.mxu0 0.0
    %1972 = vmatprep.subr.mxu0 0.0
    %1973 = vmatpush1.msra.mxu0 0.0
    %1974 = vmatprep.subr.mxu0 0.0
    %1975 = vmatpush1.msra.mxu0 0.0
    %1976 = vmatprep.subr.mxu0 0.0
    %1977 = vmatpush1.msra.mxu0 0.0
    %1978 = vmatprep.subr.mxu0 0.0
    %1979 = vmatpush1.msra.mxu0 0.0
    %1980 = vmatprep.subr.mxu0 0.0
    %1981 = vmatpush1.msra.mxu0 0.0
    %1982 = vmatprep.subr.mxu0 0.0
    %1983 = vmatpush1.msra.mxu0 0.0
    %1984 = vmatprep.subr.mxu0 0.0
    %1985 = vmatpush1.msra.mxu0 0.0
    %1986 = vmatprep.subr.mxu0 0.0
    %1987 = vmatpush1.msra.mxu0 0.0
    %1988 = vmatprep.subr.mxu0 0.0
    %1989 = vmatpush1.msra.mxu0 0.0
    %1990 = vmatprep.subr.mxu0 0.0
    %1991 = vmatpush1.msra.mxu0 0.0
    %1992 = vmatprep.subr.mxu0 0.0
    %1993 = vmatpush1.msra.mxu0 0.0
    %1994 = vmatprep.subr.mxu0 0.0
    %1995 = vmatpush1.msra.mxu0 0.0
    %1996 = vmatprep.subr.mxu0 0.0
    %1997 = vmatpush1.msra.mxu0 0.0
    %1998 = vmatprep.subr.mxu0 0.0
    %1999 = vmatpush1.msra.mxu0 0.0
    %2000 = vmatprep.subr.mxu0 0.0
    %2001 = vmatpush1.msra.mxu0 0.0
    %2002 = vmatprep.subr.mxu0 0.0
    %2003 = vmatpush1.msra.mxu0 0.0
    %2004 = vmatprep.subr.mxu0 0.0
    %2005 = vmatpush1.msra.mxu0 0.0
    %2006 = vmatprep.subr.mxu0 0.0
    %2007 = vmatpush1.msra.mxu0 0.0
    %2008 = vmatprep.subr.mxu0 0.0
    %2009 = vmatpush1.msra.mxu0 0.0
    %2010 = vmatprep.mubr.f32.mxu0 0.0
    %2011 = vmatmul.mubr.f32.gmra.mrb[0].mxu0 %v389
    %v2012 = vpop.f32.mrb[0].mxu0
    %v2013 = vadd.f32 %v1945, %v2012
    %v2014 = vpop.f32.mrb[0].mxu0
    %2015 = vmatprep.mubr.f32.mxu0 0.0
    %2016 = vmatmul.mubr.f32.gmra.mrb[0].mxu0 %v392
    %v2017 = vpop.f32.mrb[0].mxu0
    %v2018 = vadd.f32 %v1945, %v2017
    %v2019 = vpop.f32.mrb[0].mxu0
    %2020 = vdwg.mxu0
    %v2021 = vld [vmem:[%s2 + $0x138] sm:$0xff]
    %v2022 = vld [vmem:[%s2 + $0x140] sm:$0xff]
    %v2023 = vld [vmem:[%s2 + $0x148] sm:$0xff]
    %v2024 = vld [vmem:[%s2 + $0x150] sm:$0xff]
    %2025 = vmatprep.subr.mxu0 0.0
    %2026 = vmatpush1.msra.mxu0 %v2021
    %2027 = vmatprep.subr.mxu0 0.0
    %2028 = vmatpush1.msra.mxu0 %v2022
    %2029 = vmatprep.subr.mxu0 0.0
    %2030 = vmatpush1.msra.mxu0 %v2023
    %2031 = vmatprep.subr.mxu0 0.0
    %2032 = vmatpush1.msra.mxu0 %v2024
    %2033 = vmatprep.subr.mxu0 0.0
    %2034 = vmatpush1.msra.mxu0 0.0
    %2035 = vmatprep.subr.mxu0 0.0
    %2036 = vmatpush1.msra.mxu0 0.0
    %2037 = vmatprep.subr.mxu0 0.0
    %2038 = vmatpush1.msra.mxu0 0.0
    %2039 = vmatprep.subr.mxu0 0.0
    %2040 = vmatpush1.msra.mxu0 0.0
    %2041 = vmatprep.subr.mxu0 0.0
    %2042 = vmatpush1.msra.mxu0 0.0
    %2043 = vmatprep.subr.mxu0 0.0
    %2044 = vmatpush1.msra.mxu0 0.0
    %2045 = vmatprep.subr.mxu0 0.0
    %2046 = vmatpush1.msra.mxu0 0.0
    %2047 = vmatprep.subr.mxu0 0.0
    %2048 = vmatpush1.msra.mxu0 0.0
    %2049 = vmatprep.subr.mxu0 0.0
    %2050 = vmatpush1.msra.mxu0 0.0
    %2051 = vmatprep.subr.mxu0 0.0
    %2052 = vmatpush1.msra.mxu0 0.0
    %2053 = vmatprep.subr.mxu0 0.0
    %2054 = vmatpush1.msra.mxu0 0.0
    %2055 = vmatprep.subr.mxu0 0.0
    %2056 = vmatpush1.msra.mxu0 0.0
    %2057 = vmatprep.subr.mxu0 0.0
    %2058 = vmatpush1.msra.mxu0 0.0
    %2059 = vmatprep.subr.mxu0 0.0
    %2060 = vmatpush1.msra.mxu0 0.0
    %2061 = vmatprep.subr.mxu0 0.0
    %2062 = vmatpush1.msra.mxu0 0.0
    %2063 = vmatprep.subr.mxu0 0.0
    %2064 = vmatpush1.msra.mxu0 0.0
    %2065 = vmatprep.subr.mxu0 0.0
    %2066 = vmatpush1.msra.mxu0 0.0
    %2067 = vmatprep.subr.mxu0 0.0
    %2068 = vmatpush1.msra.mxu0 0.0
    %2069 = vmatprep.subr.mxu0 0.0
    %2070 = vmatpush1.msra.mxu0 0.0
    %2071 = vmatprep.subr.mxu0 0.0
    %2072 = vmatpush1.msra.mxu0 0.0
    %2073 = vmatprep.subr.mxu0 0.0
    %2074 = vmatpush1.msra.mxu0 0.0
    %2075 = vmatprep.subr.mxu0 0.0
    %2076 = vmatpush1.msra.mxu0 0.0
    %2077 = vmatprep.subr.mxu0 0.0
    %2078 = vmatpush1.msra.mxu0 0.0
    %2079 = vmatprep.subr.mxu0 0.0
    %2080 = vmatpush1.msra.mxu0 0.0
    %2081 = vmatprep.subr.mxu0 0.0
    %2082 = vmatpush1.msra.mxu0 0.0
    %2083 = vmatprep.subr.mxu0 0.0
    %2084 = vmatpush1.msra.mxu0 0.0
    %2085 = vmatprep.subr.mxu0 0.0
    %2086 = vmatpush1.msra.mxu0 0.0
    %2087 = vmatprep.subr.mxu0 0.0
    %2088 = vmatpush1.msra.mxu0 0.0
    %2089 = vmatprep.mubr.f32.mxu0 0.0
    %2090 = vmatmul.mubr.f32.gmra.mrb[0].mxu0 %v389
    %v2091 = vpop.f32.mrb[0].mxu0
    %v2092 = vadd.f32 0.0, %v2091
    %v2093 = vpop.f32.mrb[0].mxu0
    %2094 = vmatprep.mubr.f32.mxu0 0.0
    %2095 = vmatmul.mubr.f32.gmra.mrb[0].mxu0 %v392
    %v2096 = vpop.f32.mrb[0].mxu0
    %v2097 = vadd.f32 0.0, %v2096
    %v2098 = vpop.f32.mrb[0].mxu0
    %2099 = vdwg.mxu0
    %v2100 = vld [vmem:[%s2 + $0x1b8] sm:$0xff]
    %v2101 = vld [vmem:[%s2 + $0x1c0] sm:$0xff]
    %v2102 = vld [vmem:[%s2 + $0x1c8] sm:$0xff]
    %v2103 = vld [vmem:[%s2 + $0x1d0] sm:$0xff]
    %2104 = vmatprep.subr.mxu0 0.0
    %2105 = vmatpush1.msra.mxu0 %v2100
    %2106 = vmatprep.subr.mxu0 0.0
    %2107 = vmatpush1.msra.mxu0 %v2101
    %2108 = vmatprep.subr.mxu0 0.0
    %2109 = vmatpush1.msra.mxu0 %v2102
    %2110 = vmatprep.subr.mxu0 0.0
    %2111 = vmatpush1.msra.mxu0 %v2103
    %2112 = vmatprep.subr.mxu0 0.0
    %2113 = vmatpush1.msra.mxu0 0.0
    %2114 = vmatprep.subr.mxu0 0.0
    %2115 = vmatpush1.msra.mxu0 0.0
    %2116 = vmatprep.subr.mxu0 0.0
    %2117 = vmatpush1.msra.mxu0 0.0
    %2118 = vmatprep.subr.mxu0 0.0
    %2119 = vmatpush1.msra.mxu0 0.0
    %2120 = vmatprep.subr.mxu0 0.0
    %2121 = vmatpush1.msra.mxu0 0.0
    %2122 = vmatprep.subr.mxu0 0.0
    %2123 = vmatpush1.msra.mxu0 0.0
    %2124 = vmatprep.subr.mxu0 0.0
    %2125 = vmatpush1.msra.mxu0 0.0
    %2126 = vmatprep.subr.mxu0 0.0
    %2127 = vmatpush1.msra.mxu0 0.0
    %2128 = vmatprep.subr.mxu0 0.0
    %2129 = vmatpush1.msra.mxu0 0.0
    %2130 = vmatprep.subr.mxu0 0.0
    %2131 = vmatpush1.msra.mxu0 0.0
    %2132 = vmatprep.subr.mxu0 0.0
    %2133 = vmatpush1.msra.mxu0 0.0
    %2134 = vmatprep.subr.mxu0 0.0
    %2135 = vmatpush1.msra.mxu0 0.0
    %2136 = vmatprep.subr.mxu0 0.0
    %2137 = vmatpush1.msra.mxu0 0.0
    %2138 = vmatprep.subr.mxu0 0.0
    %2139 = vmatpush1.msra.mxu0 0.0
    %2140 = vmatprep.subr.mxu0 0.0
    %2141 = vmatpush1.msra.mxu0 0.0
    %2142 = vmatprep.subr.mxu0 0.0
    %2143 = vmatpush1.msra.mxu0 0.0
    %2144 = vmatprep.subr.mxu0 0.0
    %2145 = vmatpush1.msra.mxu0 0.0
    %2146 = vmatprep.subr.mxu0 0.0
    %2147 = vmatpush1.msra.mxu0 0.0
    %2148 = vmatprep.subr.mxu0 0.0
    %2149 = vmatpush1.msra.mxu0 0.0
    %2150 = vmatprep.subr.mxu0 0.0
    %2151 = vmatpush1.msra.mxu0 0.0
    %2152 = vmatprep.subr.mxu0 0.0
    %2153 = vmatpush1.msra.mxu0 0.0
    %2154 = vmatprep.subr.mxu0 0.0
    %2155 = vmatpush1.msra.mxu0 0.0
    %2156 = vmatprep.subr.mxu0 0.0
    %2157 = vmatpush1.msra.mxu0 0.0
    %2158 = vmatprep.subr.mxu0 0.0
    %2159 = vmatpush1.msra.mxu0 0.0
    %2160 = vmatprep.subr.mxu0 0.0
    %2161 = vmatpush1.msra.mxu0 0.0
    %2162 = vmatprep.subr.mxu0 0.0
    %2163 = vmatpush1.msra.mxu0 0.0
    %2164 = vmatprep.subr.mxu0 0.0
    %2165 = vmatpush1.msra.mxu0 0.0
    %2166 = vmatprep.subr.mxu0 0.0
    %2167 = vmatpush1.msra.mxu0 0.0
    %2168 = vmatprep.mubr.f32.mxu0 0.0
    %2169 = vmatmul.mubr.f32.gmra.mrb[0].mxu0 %v389
    %v2170 = vpop.f32.mrb[0].mxu0
    %v2171 = vadd.f32 0.0, %v2170
    %v2172 = vpop.f32.mrb[0].mxu0
    %2173 = vmatprep.mubr.f32.mxu0 0.0
    %2174 = vmatmul.mubr.f32.gmra.mrb[0].mxu0 %v392
    %v2175 = vpop.f32.mrb[0].mxu0
    %v2176 = vadd.f32 0.0, %v2175
    %v2177 = vpop.f32.mrb[0].mxu0
    %2178 = vdwg.mxu0
    %v2180 = vsel %vm23, %v2013, 0
    %v2183 = vsel %vm23, %v2018, 0
    %v2186 = vsel %vm23, %v2092, 0
    %v2189 = vsel %vm23, %v2097, 0
    %2191 = vmatprep.subr.mxu0 0.0
    %2192 = vmatpush1.xpose.msra.mxu0 %v2186
    %2193 = vmatprep.subr.mxu0 0.0
    %2194 = vmatpush1.xpose.msra.mxu0 %v2189
    %2195 = vmatprep.subr.mxu0 0.0
    %2196 = vmatpush1.xpose.msra.mxu0 0.0
    %2197 = vmatprep.subr.mxu0 0.0
    %2198 = vmatpush1.xpose.msra.mxu0 0.0
    %2199 = vmatprep.subr.mxu0 0.0
    %2200 = vmatpush1.xpose.msra.mxu0 0.0
    %2201 = vmatprep.subr.mxu0 0.0
    %2202 = vmatpush1.xpose.msra.mxu0 0.0
    %2203 = vmatprep.subr.mxu0 0.0
    %2204 = vmatpush1.xpose.msra.mxu0 0.0
    %2205 = vmatprep.subr.mxu0 0.0
    %2206 = vmatpush1.xpose.msra.mxu0 0.0
    %2207 = vmatprep.subr.mxu0 0.0
    %2208 = vmatpush1.xpose.msra.mxu0 0.0
    %2209 = vmatprep.subr.mxu0 0.0
    %2210 = vmatpush1.xpose.msra.mxu0 0.0
    %2211 = vmatprep.subr.mxu0 0.0
    %2212 = vmatpush1.xpose.msra.mxu0 0.0
    %2213 = vmatprep.subr.mxu0 0.0
    %2214 = vmatpush1.xpose.msra.mxu0 0.0
    %2215 = vmatprep.subr.mxu0 0.0
    %2216 = vmatpush1.xpose.msra.mxu0 0.0
    %2217 = vmatprep.subr.mxu0 0.0
    %2218 = vmatpush1.xpose.msra.mxu0 0.0
    %2219 = vmatprep.subr.mxu0 0.0
    %2220 = vmatpush1.xpose.msra.mxu0 0.0
    %2221 = vmatprep.subr.mxu0 0.0
    %2222 = vmatpush1.xpose.msra.mxu0 0.0
    %2223 = vmatprep.subr.mxu0 0.0
    %2224 = vmatpush1.xpose.msra.mxu0 0.0
    %2225 = vmatprep.subr.mxu0 0.0
    %2226 = vmatpush1.xpose.msra.mxu0 0.0
    %2227 = vmatprep.subr.mxu0 0.0
    %2228 = vmatpush1.xpose.msra.mxu0 0.0
    %2229 = vmatprep.subr.mxu0 0.0
    %2230 = vmatpush1.xpose.msra.mxu0 0.0
    %2231 = vmatprep.subr.mxu0 0.0
    %2232 = vmatpush1.xpose.msra.mxu0 0.0
    %2233 = vmatprep.subr.mxu0 0.0
    %2234 = vmatpush1.xpose.msra.mxu0 0.0
    %2235 = vmatprep.subr.mxu0 0.0
    %2236 = vmatpush1.xpose.msra.mxu0 0.0
    %2237 = vmatprep.subr.mxu0 0.0
    %2238 = vmatpush1.xpose.msra.mxu0 0.0
    %2239 = vmatprep.subr.mxu0 0.0
    %2240 = vmatpush1.xpose.msra.mxu0 0.0
    %2241 = vmatprep.subr.mxu0 0.0
    %2242 = vmatpush1.xpose.msra.mxu0 0.0
    %2243 = vmatprep.subr.mxu0 0.0
    %2244 = vmatpush1.xpose.msra.mxu0 0.0
    %2245 = vmatprep.subr.mxu0 0.0
    %2246 = vmatpush1.xpose.msra.mxu0 0.0
    %2247 = vmatprep.subr.mxu0 0.0
    %2248 = vmatpush1.xpose.msra.mxu0 0.0
    %2249 = vmatprep.subr.mxu0 0.0
    %2250 = vmatpush1.xpose.msra.mxu0 0.0
    %2251 = vmatprep.subr.mxu0 0.0
    %2252 = vmatpush1.xpose.msra.mxu0 0.0
    %2253 = vmatprep.subr.mxu0 0.0
    %2254 = vmatpush1.xpose.msra.mxu0 0.0
    %2255 = vmatprep.mubr.f32.mxu0 0.0
    %2256 = vmatmul.mubr.f32.gmra.mrb[0].mxu0 %v2180
    %v2257 = vpop.f32.mrb[0].mxu0
    %v2258 = vadd.f32 0.0, %v2257
    %v2259 = vpop.f32.mrb[0].mxu0
    %2260 = vmatprep.mubr.f32.mxu0 0.0
    %2261 = vmatmul.mubr.f32.gmra.mrb[0].mxu0 %v2183
    %v2262 = vpop.f32.mrb[0].mxu0
    %v2263 = vadd.f32 0.0, %v2262
    %v2264 = vpop.f32.mrb[0].mxu0
    %2265 = vdwg.mxu0
    %v2266 = vsel %vm119, %v2258, -inf
    %2267 = vmax.xlane.f32.xlu0 %v2266
    %v2268 = vpop.xlane.xlu0 %2267
    %v2269 = vsel %vm119, %v2263, -inf
    %2270 = vmax.xlane.f32.xlu0 %v2269
    %v2271 = vpop.xlane.xlu0 %2270
    %v2272 = vsub.f32 %v2258, %v2268
    %v2273 = vsub.f32 %v2263, %v2271
    %v2274 = vmul.f32 %v2272, 1.442695
    %v2275 = vpow.pop %v2274
    %v2276 = vmul.f32 %v2273, 1.442695
    %v2277 = vpow.pop %v2276
    %v2278 = vsel %vm119, %v2275, 0.0
    %2279 = vadd.xlane.f32.xlu0 %v2278
    %v2280 = vpop.xlane.xlu0 %2279
    %v2281 = vsel %vm119, %v2277, 0.0
    %2282 = vadd.xlane.f32.xlu0 %v2281
    %v2283 = vpop.xlane.xlu0 %2282
    %v2284 = vrcp.pop %v2280
    %v2285 = vrcp.pop %v2283
    %v2286 = vmul.f32 %v2275, %v2284
    %v2287 = vmul.f32 %v2277, %v2285
    %v2289 = vsel %vm119, %v2286, 0
    %v2292 = vsel %vm119, %v2287, 0
    %2294 = vmatprep.subr.mxu0 0.0
    %2295 = vmatpush1.msra.mxu0 %v2171
    %2296 = vmatprep.subr.mxu0 0.0
    %2297 = vmatpush1.msra.mxu0 %v2176
    %2298 = vmatprep.subr.mxu0 0.0
    %2299 = vmatpush1.msra.mxu0 0.0
    %2300 = vmatprep.subr.mxu0 0.0
    %2301 = vmatpush1.msra.mxu0 0.0
    %2302 = vmatprep.subr.mxu0 0.0
    %2303 = vmatpush1.msra.mxu0 0.0
    %2304 = vmatprep.subr.mxu0 0.0
    %2305 = vmatpush1.msra.mxu0 0.0
    %2306 = vmatprep.subr.mxu0 0.0
    %2307 = vmatpush1.msra.mxu0 0.0
    %2308 = vmatprep.subr.mxu0 0.0
    %2309 = vmatpush1.msra.mxu0 0.0
    %2310 = vmatprep.subr.mxu0 0.0
    %2311 = vmatpush1.msra.mxu0 0.0
    %2312 = vmatprep.subr.mxu0 0.0
    %2313 = vmatpush1.msra.mxu0 0.0
    %2314 = vmatprep.subr.mxu0 0.0
    %2315 = vmatpush1.msra.mxu0 0.0
    %2316 = vmatprep.subr.mxu0 0.0
    %2317 = vmatpush1.msra.mxu0 0.0
    %2318 = vmatprep.subr.mxu0 0.0
    %2319 = vmatpush1.msra.mxu0 0.0
    %2320 = vmatprep.subr.mxu0 0.0
    %2321 = vmatpush1.msra.mxu0 0.0
    %2322 = vmatprep.subr.mxu0 0.0
    %2323 = vmatpush1.msra.mxu0 0.0
    %2324 = vmatprep.subr.mxu0 0.0
    %2325 = vmatpush1.msra.mxu0 0.0
    %2326 = vmatprep.subr.mxu0 0.0
    %2327 = vmatpush1.msra.mxu0 0.0
    %2328 = vmatprep.subr.mxu0 0.0
    %2329 = vmatpush1.msra.mxu0 0.0
    %2330 = vmatprep.subr.mxu0 0.0
    %2331 = vmatpush1.msra.mxu0 0.0
    %2332 = vmatprep.subr.mxu0 0.0
    %2333 = vmatpush1.msra.mxu0 0.0
    %2334 = vmatprep.subr.mxu0 0.0
    %2335 = vmatpush1.msra.mxu0 0.0
    %2336 = vmatprep.subr.mxu0 0.0
    %2337 = vmatpush1.msra.mxu0 0.0
    %2338 = vmatprep.subr.mxu0 0.0
    %2339 = vmatpush1.msra.mxu0 0.0
    %2340 = vmatprep.subr.mxu0 0.0
    %2341 = vmatpush1.msra.mxu0 0.0
    %2342 = vmatprep.subr.mxu0 0.0
    %2343 = vmatpush1.msra.mxu0 0.0
    %2344 = vmatprep.subr.mxu0 0.0
    %2345 = vmatpush1.msra.mxu0 0.0
    %2346 = vmatprep.subr.mxu0 0.0
    %2347 = vmatpush1.msra.mxu0 0.0
    %2348 = vmatprep.subr.mxu0 0.0
    %2349 = vmatpush1.msra.mxu0 0.0
    %2350 = vmatprep.subr.mxu0 0.0
    %2351 = vmatpush1.msra.mxu0 0.0
    %2352 = vmatprep.subr.mxu0 0.0
    %2353 = vmatpush1.msra.mxu0 0.0
    %2354 = vmatprep.subr.mxu0 0.0
    %2355 = vmatpush1.msra.mxu0 0.0
    %2356 = vmatprep.subr.mxu0 0.0
    %2357 = vmatpush1.msra.mxu0 0.0
    %2358 = vmatprep.mubr.f32.mxu0 0.0
    %2359 = vmatmul.mubr.f32.gmra.mrb[0].mxu0 %v2289
    %v2360 = vpop.f32.mrb[0].mxu0
    %v2361 = vadd.f32 0.0, %v2360
    %v2362 = vpop.f32.mrb[0].mxu0
    %2363 = vmatprep.mubr.f32.mxu0 0.0
    %2364 = vmatmul.mubr.f32.gmra.mrb[0].mxu0 %v2292
    %v2365 = vpop.f32.mrb[0].mxu0
    %v2366 = vadd.f32 0.0, %v2365
    %v2367 = vpop.f32.mrb[0].mxu0
    %2368 = vdwg.mxu0
    %v2369 = vld [vmem:[%s2 + $0x1f0] sm:$0xff]
    %v2371 = vsel %vm23, %v2361, 0
    %v2374 = vsel %vm23, %v2366, 0
    %2376 = vmatprep.subr.mxu0 0.0
    %2377 = vmatpush1.msra.mxu0 %v2369
    %2378 = vmatprep.subr.mxu0 0.0
    %2379 = vmatpush1.msra.mxu0 0.0
    %2380 = vmatprep.subr.mxu0 0.0
    %2381 = vmatpush1.msra.mxu0 0.0
    %2382 = vmatprep.subr.mxu0 0.0
    %2383 = vmatpush1.msra.mxu0 0.0
    %2384 = vmatprep.subr.mxu0 0.0
    %2385 = vmatpush1.msra.mxu0 0.0
    %2386 = vmatprep.subr.mxu0 0.0
    %2387 = vmatpush1.msra.mxu0 0.0
    %2388 = vmatprep.subr.mxu0 0.0
    %2389 = vmatpush1.msra.mxu0 0.0
    %2390 = vmatprep.subr.mxu0 0.0
    %2391 = vmatpush1.msra.mxu0 0.0
    %2392 = vmatprep.subr.mxu0 0.0
    %2393 = vmatpush1.msra.mxu0 0.0
    %2394 = vmatprep.subr.mxu0 0.0
    %2395 = vmatpush1.msra.mxu0 0.0
    %2396 = vmatprep.subr.mxu0 0.0
    %2397 = vmatpush1.msra.mxu0 0.0
    %2398 = vmatprep.subr.mxu0 0.0
    %2399 = vmatpush1.msra.mxu0 0.0
    %2400 = vmatprep.subr.mxu0 0.0
    %2401 = vmatpush1.msra.mxu0 0.0
    %2402 = vmatprep.subr.mxu0 0.0
    %2403 = vmatpush1.msra.mxu0 0.0
    %2404 = vmatprep.subr.mxu0 0.0
    %2405 = vmatpush1.msra.mxu0 0.0
    %2406 = vmatprep.subr.mxu0 0.0
    %2407 = vmatpush1.msra.mxu0 0.0
    %2408 = vmatprep.subr.mxu0 0.0
    %2409 = vmatpush1.msra.mxu0 0.0
    %2410 = vmatprep.subr.mxu0 0.0
    %2411 = vmatpush1.msra.mxu0 0.0
    %2412 = vmatprep.subr.mxu0 0.0
    %2413 = vmatpush1.msra.mxu0 0.0
    %2414 = vmatprep.subr.mxu0 0.0
    %2415 = vmatpush1.msra.mxu0 0.0
    %2416 = vmatprep.subr.mxu0 0.0
    %2417 = vmatpush1.msra.mxu0 0.0
    %2418 = vmatprep.subr.mxu0 0.0
    %2419 = vmatpush1.msra.mxu0 0.0
    %2420 = vmatprep.subr.mxu0 0.0
    %2421 = vmatpush1.msra.mxu0 0.0
    %2422 = vmatprep.subr.mxu0 0.0
    %2423 = vmatpush1.msra.mxu0 0.0
    %2424 = vmatprep.subr.mxu0 0.0
    %2425 = vmatpush1.msra.mxu0 0.0
    %2426 = vmatprep.subr.mxu0 0.0
    %2427 = vmatpush1.msra.mxu0 0.0
    %2428 = vmatprep.subr.mxu0 0.0
    %2429 = vmatpush1.msra.mxu0 0.0
    %2430 = vmatprep.subr.mxu0 0.0
    %2431 = vmatpush1.msra.mxu0 0.0
    %2432 = vmatprep.subr.mxu0 0.0
    %2433 = vmatpush1.msra.mxu0 0.0
    %2434 = vmatprep.subr.mxu0 0.0
    %2435 = vmatpush1.msra.mxu0 0.0
    %2436 = vmatprep.subr.mxu0 0.0
    %2437 = vmatpush1.msra.mxu0 0.0
    %2438 = vmatprep.subr.mxu0 0.0
    %2439 = vmatpush1.msra.mxu0 0.0
    %2440 = vmatprep.mubr.f32.mxu0 0.0
    %2441 = vmatmul.mubr.f32.gmra.mrb[0].mxu0 %v2371
    %v2442 = vpop.f32.mrb[0].mxu0
    %v2443 = vadd.f32 0.0, %v2442
    %v2444 = vpop.f32.mrb[0].mxu0
    %2445 = vmatprep.mubr.f32.mxu0 0.0
    %2446 = vmatmul.mubr.f32.gmra.mrb[0].mxu0 %v2374
    %v2447 = vpop.f32.mrb[0].mxu0
    %v2448 = vadd.f32 0.0, %v2447
    %v2449 = vpop.f32.mrb[0].mxu0
    %2450 = vdwg.mxu0
    %v2451 = vadd.f32 %v1935, %v2443
    %v2452 = vadd.f32 %v1936, %v2448
    %v2453 = vadd.f32 %v376, %v2451
    %v2454 = vadd.f32 %v377, %v2452
    %v2455 = vld [vmem:[%s2 + $0x270] sm:$0x1]
    %v2456 = vld [vmem:[%s2 + $0x278] sm:$0x1]
    %v2457 = vsel %vm289, %v2453, 0.0
    %2458 = vadd.xlane.f32.xlu0 %v2457
    %v2459 = vpop.xlane.xlu0 %2458
    %v2460 = vsel %vm289, %v2454, 0.0
    %2461 = vadd.xlane.f32.xlu0 %v2460
    %v2462 = vpop.xlane.xlu0 %2461
    %v2463 = vrcp.pop 32.0
    %v2464 = vmul.f32 %v2459, %v2463
    %v2465 = vmul.f32 %v2462, %v2463
    %v2466 = vsub.f32 %v2453, %v2464
    %v2467 = vsub.f32 %v2454, %v2465
    %v2468 = vmul.f32 %v2466, %v2466
    %v2469 = vmul.f32 %v2467, %v2467
    %v2470 = vsel %vm289, %v2468, 0.0
    %2471 = vadd.xlane.f32.xlu0 %v2470
    %v2472 = vpop.xlane.xlu0 %2471
    %v2473 = vsel %vm289, %v2469, 0.0
    %2474 = vadd.xlane.f32.xlu0 %v2473
    %v2475 = vpop.xlane.xlu0 %2474
    %v2476 = vmul.f32 %v2472, %v2463
    %v2477 = vmul.f32 %v2475, %v2463
    %v2478 = vadd.f32 %v2476, 1e-05
    %v2479 = vadd.f32 %v2477, 1e-05
    %v2480 = vrsqrt.pop %v2478
    %v2481 = vrsqrt.pop %v2479
    %v2482 = vmul.f32 %v2466, %v2480
    %v2483 = vmul.f32 %v2467, %v2481
    %v2484 = vlaneseq
    %v2485 = vshrl.u32 %v2484, 7
    %v2486 = vsub.s32 0, %v2485
    %v2487 = vrot.slane %v2455, %v2486
    %v2488 = vmul.f32 %v2482, %v2487
    %v2489 = vmul.f32 %v2483, %v2487
    %v2490 = vlaneseq
    %v2491 = vshrl.u32 %v2490, 7
    %v2492 = vsub.s32 0, %v2491
    %v2493 = vrot.slane %v2456, %v2492
    %v2494 = vadd.f32 %v2488, %v2493
    %v2495 = vadd.f32 %v2489, %v2493
    %v2496 = vld [vmem:[%s2 + $0x200] sm:$0xff]
    %v2497 = vld [vmem:[%s2 + $0x208] sm:$0xff]
    %v2498 = vld [vmem:[%s2 + $0x210] sm:$0xff]
    %v2499 = vld [vmem:[%s2 + $0x218] sm:$0xff]
    %v2500 = vld [vmem:[%s2 + $0x220] sm:$0x1]
    %v2501 = vlaneseq
    %v2502 = vshrl.u32 %v2501, 7
    %v2503 = vsub.s32 0, %v2502
    %v2504 = vrot.slane %v2500, %v2503
    %v2506 = vsel %vm289, %v2494, 0
    %v2509 = vsel %vm289, %v2495, 0
    %2511 = vmatprep.subr.mxu0 0.0
    %2512 = vmatpush1.msra.mxu0 %v2496
    %2513 = vmatprep.subr.mxu0 0.0
    %2514 = vmatpush1.msra.mxu0 %v2497
    %2515 = vmatprep.subr.mxu0 0.0
    %2516 = vmatpush1.msra.mxu0 %v2498
    %2517 = vmatprep.subr.mxu0 0.0
    %2518 = vmatpush1.msra.mxu0 %v2499
    %2519 = vmatprep.subr.mxu0 0.0
    %2520 = vmatpush1.msra.mxu0 0.0
    %2521 = vmatprep.subr.mxu0 0.0
    %2522 = vmatpush1.msra.mxu0 0.0
    %2523 = vmatprep.subr.mxu0 0.0
    %2524 = vmatpush1.msra.mxu0 0.0
    %2525 = vmatprep.subr.mxu0 0.0
    %2526 = vmatpush1.msra.mxu0 0.0
    %2527 = vmatprep.subr.mxu0 0.0
    %2528 = vmatpush1.msra.mxu0 0.0
    %2529 = vmatprep.subr.mxu0 0.0
    %2530 = vmatpush1.msra.mxu0 0.0
    %2531 = vmatprep.subr.mxu0 0.0
    %2532 = vmatpush1.msra.mxu0 0.0
    %2533 = vmatprep.subr.mxu0 0.0
    %2534 = vmatpush1.msra.mxu0 0.0
    %2535 = vmatprep.subr.mxu0 0.0
    %2536 = vmatpush1.msra.mxu0 0.0
    %2537 = vmatprep.subr.mxu0 0.0
    %2538 = vmatpush1.msra.mxu0 0.0
    %2539 = vmatprep.subr.mxu0 0.0
    %2540 = vmatpush1.msra.mxu0 0.0
    %2541 = vmatprep.subr.mxu0 0.0
    %2542 = vmatpush1.msra.mxu0 0.0
    %2543 = vmatprep.subr.mxu0 0.0
    %2544 = vmatpush1.msra.mxu0 0.0
    %2545 = vmatprep.subr.mxu0 0.0
    %2546 = vmatpush1.msra.mxu0 0.0
    %2547 = vmatprep.subr.mxu0 0.0
    %2548 = vmatpush1.msra.mxu0 0.0
    %2549 = vmatprep.subr.mxu0 0.0
    %2550 = vmatpush1.msra.mxu0 0.0
    %2551 = vmatprep.subr.mxu0 0.0
    %2552 = vmatpush1.msra.mxu0 0.0
    %2553 = vmatprep.subr.mxu0 0.0
    %2554 = vmatpush1.msra.mxu0 0.0
    %2555 = vmatprep.subr.mxu0 0.0
    %2556 = vmatpush1.msra.mxu0 0.0
    %2557 = vmatprep.subr.mxu0 0.0
    %2558 = vmatpush1.msra.mxu0 0.0
    %2559 = vmatprep.subr.mxu0 0.0
    %2560 = vmatpush1.msra.mxu0 0.0
    %2561 = vmatprep.subr.mxu0 0.0
    %2562 = vmatpush1.msra.mxu0 0.0
    %2563 = vmatprep.subr.mxu0 0.0
    %2564 = vmatpush1.msra.mxu0 0.0
    %2565 = vmatprep.subr.mxu0 0.0
    %2566 = vmatpush1.msra.mxu0 0.0
    %2567 = vmatprep.subr.mxu0 0.0
    %2568 = vmatpush1.msra.mxu0 0.0
    %2569 = vmatprep.subr.mxu0 0.0
    %2570 = vmatpush1.msra.mxu0 0.0
    %2571 = vmatprep.subr.mxu0 0.0
    %2572 = vmatpush1.msra.mxu0 0.0
    %2573 = vmatprep.subr.mxu0 0.0
    %2574 = vmatpush1.msra.mxu0 0.0
    %2575 = vmatprep.mubr.f32.mxu0 0.0
    %2576 = vmatmul.mubr.f32.gmra.mrb[0].mxu0 %v2506
    %v2577 = vpop.f32.mrb[0].mxu0
    %v2578 = vadd.f32 %v2504, %v2577
    %v2579 = vpop.f32.mrb[0].mxu0
    %2580 = vmatprep.mubr.f32.mxu0 0.0
    %2581 = vmatmul.mubr.f32.gmra.mrb[0].mxu0 %v2509
    %v2582 = vpop.f32.mrb[0].mxu0
    %v2583 = vadd.f32 %v2504, %v2582
    %v2584 = vpop.f32.mrb[0].mxu0
    %2585 = vdwg.mxu0
    %v2586 = vmax.f32 %v2578, 0.0
    %v2587 = vmax.f32 %v2583, 0.0
    %v2588 = vld [vmem:[%s2 + $0x228] sm:$0xff]
    %v2589 = vld [vmem:[%s2 + $0x230] sm:$0xff]
    %v2590 = vld [vmem:[%s2 + $0x238] sm:$0xff]
    %v2591 = vld [vmem:[%s2 + $0x240] sm:$0xff]
    %v2592 = vld [vmem:[%s2 + $0x248] sm:$0xff]
    %v2593 = vld [vmem:[%s2 + $0x250] sm:$0xff]
    %v2594 = vld [vmem:[%s2 + $0x258] sm:$0xff]
    %v2595 = vld [vmem:[%s2 + $0x260] sm:$0xff]
    %v2596 = vld [vmem:[%s2 + $0x268] sm:$0x1]
    %v2597 = vlaneseq
    %v2598 = vshrl.u32 %v2597, 7
    %v2599 = vsub.s32 0, %v2598
    %v2600 = vrot.slane %v2596, %v2599
    %vm2601 = vcmask 523264
    %v2603 = vsel %vm2601, %v2586, 0
    %v2606 = vsel %vm2601, %v2587, 0
    %2608 = vmatprep.subr.mxu0 0.0
    %2609 = vmatpush1.msra.mxu0 %v2588
    %2610 = vmatprep.subr.mxu0 0.0
    %2611 = vmatpush1.msra.mxu0 %v2589
    %2612 = vmatprep.subr.mxu0 0.0
    %2613 = vmatpush1.msra.mxu0 %v2590
    %2614 = vmatprep.subr.mxu0 0.0
    %2615 = vmatpush1.msra.mxu0 %v2591
    %2616 = vmatprep.subr.mxu0 0.0
    %2617 = vmatpush1.msra.mxu0 %v2592
    %2618 = vmatprep.subr.mxu0 0.0
    %2619 = vmatpush1.msra.mxu0 %v2593
    %2620 = vmatprep.subr.mxu0 0.0
    %2621 = vmatpush1.msra.mxu0 %v2594
    %2622 = vmatprep.subr.mxu0 0.0
    %2623 = vmatpush1.msra.mxu0 %v2595
    %2624 = vmatprep.subr.mxu0 0.0
    %2625 = vmatpush1.msra.mxu0 0.0
    %2626 = vmatprep.subr.mxu0 0.0
    %2627 = vmatpush1.msra.mxu0 0.0
    %2628 = vmatprep.subr.mxu0 0.0
    %2629 = vmatpush1.msra.mxu0 0.0
    %2630 = vmatprep.subr.mxu0 0.0
    %2631 = vmatpush1.msra.mxu0 0.0
    %2632 = vmatprep.subr.mxu0 0.0
    %2633 = vmatpush1.msra.mxu0 0.0
    %2634 = vmatprep.subr.mxu0 0.0
    %2635 = vmatpush1.msra.mxu0 0.0
    %2636 = vmatprep.subr.mxu0 0.0
    %2637 = vmatpush1.msra.mxu0 0.0
    %2638 = vmatprep.subr.mxu0 0.0
    %2639 = vmatpush1.msra.mxu0 0.0
    %2640 = vmatprep.subr.mxu0 0.0
    %2641 = vmatpush1.msra.mxu0 0.0
    %2642 = vmatprep.subr.mxu0 0.0
    %2643 = vmatpush1.msra.mxu0 0.0
    %2644 = vmatprep.subr.mxu0 0.0
    %2645 = vmatpush1.msra.mxu0 0.0
    %2646 = vmatprep.subr.mxu0 0.0
    %2647 = vmatpush1.msra.mxu0 0.0
    %2648 = vmatprep.subr.mxu0 0.0
    %2649 = vmatpush1.msra.mxu0 0.0
    %2650 = vmatprep.subr.mxu0 0.0
    %2651 = vmatpush1.msra.mxu0 0.0
    %2652 = vmatprep.subr.mxu0 0.0
    %2653 = vmatpush1.msra.mxu0 0.0
    %2654 = vmatprep.subr.mxu0 0.0
    %2655 = vmatpush1.msra.mxu0 0.0
    %2656 = vmatprep.subr.mxu0 0.0
    %2657 = vmatpush1.msra.mxu0 0.0
    %2658 = vmatprep.subr.mxu0 0.0
    %2659 = vmatpush1.msra.mxu0 0.0
    %2660 = vmatprep.subr.mxu0 0.0
    %2661 = vmatpush1.msra.mxu0 0.0
    %2662 = vmatprep.subr.mxu0 0.0
    %2663 = vmatpush1.msra.mxu0 0.0
    %2664 = vmatprep.subr.mxu0 0.0
    %2665 = vmatpush1.msra.mxu0 0.0
    %2666 = vmatprep.subr.mxu0 0.0
    %2667 = vmatpush1.msra.mxu0 0.0
    %2668 = vmatprep.subr.mxu0 0.0
    %2669 = vmatpush1.msra.mxu0 0.0
    %2670 = vmatprep.subr.mxu0 0.0
    %2671 = vmatpush1.msra.mxu0 0.0
    %2672 = vmatprep.mubr.f32.mxu0 0.0
    %2673 = vmatmul.mubr.f32.gmra.mrb[0].mxu0 %v2603
    %v2674 = vpop.f32.mrb[0].mxu0
    %v2675 = vadd.f32 %v2600, %v2674
    %v2676 = vpop.f32.mrb[0].mxu0
    %2677 = vmatprep.mubr.f32.mxu0 0.0
    %2678 = vmatmul.mubr.f32.gmra.mrb[0].mxu0 %v2606
    %v2679 = vpop.f32.mrb[0].mxu0
    %v2680 = vadd.f32 %v2600, %v2679
    %v2681 = vpop.f32.mrb[0].mxu0
    %2682 = vdwg.mxu0
    %v2683 = vadd.f32 %v2494, %v2675
    %v2684 = vadd.f32 %v2495, %v2680
    %v2685 = vld [vmem:[%s2 + $0x280] sm:$0x1]
    %v2686 = vld [vmem:[%s2 + $0x288] sm:$0x1]
    %v2687 = vsel %vm289, %v2683, 0.0
    %2688 = vadd.xlane.f32.xlu0 %v2687
    %v2689 = vpop.xlane.xlu0 %2688
    %v2690 = vsel %vm289, %v2684, 0.0
    %2691 = vadd.xlane.f32.xlu0 %v2690
    %v2692 = vpop.xlane.xlu0 %2691
    %v2693 = vmul.f32 %v2689, %v2463
    %v2694 = vmul.f32 %v2692, %v2463
    %v2695 = vsub.f32 %v2683, %v2693
    %v2696 = vsub.f32 %v2684, %v2694
    %v2697 = vmul.f32 %v2695, %v2695
    %v2698 = vmul.f32 %v2696, %v2696
    %v2699 = vsel %vm289, %v2697, 0.0
    %2700 = vadd.xlane.f32.xlu0 %v2699
    %v2701 = vpop.xlane.xlu0 %2700
    %v2702 = vsel %vm289, %v2698, 0.0
    %2703 = vadd.xlane.f32.xlu0 %v2702
    %v2704 = vpop.xlane.xlu0 %2703
    %v2705 = vmul.f32 %v2701, %v2463
    %v2706 = vmul.f32 %v2704, %v2463
    %v2707 = vadd.f32 %v2705, 1e-05
    %v2708 = vadd.f32 %v2706, 1e-05
    %v2709 = vrsqrt.pop %v2707
    %v2710 = vrsqrt.pop %v2708
    %v2711 = vmul.f32 %v2695, %v2709
    %v2712 = vmul.f32 %v2696, %v2710
    %v2713 = vlaneseq
    %v2714 = vshrl.u32 %v2713, 7
    %v2715 = vsub.s32 0, %v2714
    %v2716 = vrot.slane %v2685, %v2715
    %v2717 = vmul.f32 %v2711, %v2716
    %v2718 = vmul.f32 %v2712, %v2716
    %v2719 = vlaneseq
    %v2720 = vshrl.u32 %v2719, 7
    %v2721 = vsub.s32 0, %v2720
    %v2722 = vrot.slane %v2686, %v2721
    %v2723 = vadd.f32 %v2717, %v2722
    %v2724 = vadd.f32 %v2718, %v2722
    %v2725 = vld [vmem:[%s2 + $0x438] sm:$0x1]
    %v2726 = vld [vmem:[%s2 + $0x290] sm:$0xff]
    %v2727 = vld [vmem:[%s2 + $0x298] sm:$0xff]
    %v2728 = vld [vmem:[%s2 + $0x2a0] sm:$0xff]
    %v2729 = vld [vmem:[%s2 + $0x2a8] sm:$0xff]
    %v2730 = vld [vmem:[%s2 + $0x310] sm:$0x1]
    %v2731 = vlaneseq
    %v2732 = vshrl.u32 %v2731, 7
    %v2733 = vsub.s32 0, %v2732
    %v2734 = vrot.slane %v2730, %v2733
    %v2736 = vsel %vm289, %v2723, 0
    %v2739 = vsel %vm289, %v2724, 0
    %2741 = vmatprep.subr.mxu0 0.0
    %2742 = vmatpush1.msra.mxu0 %v2726
    %2743 = vmatprep.subr.mxu0 0.0
    %2744 = vmatpush1.msra.mxu0 %v2727
    %2745 = vmatprep.subr.mxu0 0.0
    %2746 = vmatpush1.msra.mxu0 %v2728
    %2747 = vmatprep.subr.mxu0 0.0
    %2748 = vmatpush1.msra.mxu0 %v2729
    %2749 = vmatprep.subr.mxu0 0.0
    %2750 = vmatpush1.msra.mxu0 0.0
    %2751 = vmatprep.subr.mxu0 0.0
    %2752 = vmatpush1.msra.mxu0 0.0
    %2753 = vmatprep.subr.mxu0 0.0
    %2754 = vmatpush1.msra.mxu0 0.0
    %2755 = vmatprep.subr.mxu0 0.0
    %2756 = vmatpush1.msra.mxu0 0.0
    %2757 = vmatprep.subr.mxu0 0.0
    %2758 = vmatpush1.msra.mxu0 0.0
    %2759 = vmatprep.subr.mxu0 0.0
    %2760 = vmatpush1.msra.mxu0 0.0
    %2761 = vmatprep.subr.mxu0 0.0
    %2762 = vmatpush1.msra.mxu0 0.0
    %2763 = vmatprep.subr.mxu0 0.0
    %2764 = vmatpush1.msra.mxu0 0.0
    %2765 = vmatprep.subr.mxu0 0.0
    %2766 = vmatpush1.msra.mxu0 0.0
    %2767 = vmatprep.subr.mxu0 0.0
    %2768 = vmatpush1.msra.mxu0 0.0
    %2769 = vmatprep.subr.mxu0 0.0
    %2770 = vmatpush1.msra.mxu0 0.0
    %2771 = vmatprep.subr.mxu0 0.0
    %2772 = vmatpush1.msra.mxu0 0.0
    %2773 = vmatprep.subr.mxu0 0.0
    %2774 = vmatpush1.msra.mxu0 0.0
    %2775 = vmatprep.subr.mxu0 0.0
    %2776 = vmatpush1.msra.mxu0 0.0
    %2777 = vmatprep.subr.mxu0 0.0
    %2778 = vmatpush1.msra.mxu0 0.0
    %2779 = vmatprep.subr.mxu0 0.0
    %2780 = vmatpush1.msra.mxu0 0.0
    %2781 = vmatprep.subr.mxu0 0.0
    %2782 = vmatpush1.msra.mxu0 0.0
    %2783 = vmatprep.subr.mxu0 0.0
    %2784 = vmatpush1.msra.mxu0 0.0
    %2785 = vmatprep.subr.mxu0 0.0
    %2786 = vmatpush1.msra.mxu0 0.0
    %2787 = vmatprep.subr.mxu0 0.0
    %2788 = vmatpush1.msra.mxu0 0.0
    %2789 = vmatprep.subr.mxu0 0.0
    %2790 = vmatpush1.msra.mxu0 0.0
    %2791 = vmatprep.subr.mxu0 0.0
    %2792 = vmatpush1.msra.mxu0 0.0
    %2793 = vmatprep.subr.mxu0 0.0
    %2794 = vmatpush1.msra.mxu0 0.0
    %2795 = vmatprep.subr.mxu0 0.0
    %2796 = vmatpush1.msra.mxu0 0.0
    %2797 = vmatprep.subr.mxu0 0.0
    %2798 = vmatpush1.msra.mxu0 0.0
    %2799 = vmatprep.subr.mxu0 0.0
    %2800 = vmatpush1.msra.mxu0 0.0
    %2801 = vmatprep.subr.mxu0 0.0
    %2802 = vmatpush1.msra.mxu0 0.0
    %2803 = vmatprep.subr.mxu0 0.0
    %2804 = vmatpush1.msra.mxu0 0.0
    %2805 = vmatprep.mubr.f32.mxu0 0.0
    %2806 = vmatmul.mubr.f32.gmra.mrb[0].mxu0 %v2736
    %v2807 = vpop.f32.mrb[0].mxu0
    %v2808 = vadd.f32 %v2734, %v2807
    %v2809 = vpop.f32.mrb[0].mxu0
    %2810 = vmatprep.mubr.f32.mxu0 0.0
    %2811 = vmatmul.mubr.f32.gmra.mrb[0].mxu0 %v2739
    %v2812 = vpop.f32.mrb[0].mxu0
    %v2813 = vadd.f32 %v2734, %v2812
    %v2814 = vpop.f32.mrb[0].mxu0
    %2815 = vdwg.mxu0
    %v2816 = vld [vmem:[%s2 + $0x318] sm:$0xff]
    %v2817 = vld [vmem:[%s2 + $0x320] sm:$0xff]
    %v2818 = vld [vmem:[%s2 + $0x328] sm:$0xff]
    %v2819 = vld [vmem:[%s2 + $0x330] sm:$0xff]
    %2820 = vmatprep.subr.mxu0 0.0
    %2821 = vmatpush1.msra.mxu0 %v2816
    %2822 = vmatprep.subr.mxu0 0.0
    %2823 = vmatpush1.msra.mxu0 %v2817
    %2824 = vmatprep.subr.mxu0 0.0
    %2825 = vmatpush1.msra.mxu0 %v2818
    %2826 = vmatprep.subr.mxu0 0.0
    %2827 = vmatpush1.msra.mxu0 %v2819
    %2828 = vmatprep.subr.mxu0 0.0
    %2829 = vmatpush1.msra.mxu0 0.0
    %2830 = vmatprep.subr.mxu0 0.0
    %2831 = vmatpush1.msra.mxu0 0.0
    %2832 = vmatprep.subr.mxu0 0.0
    %2833 = vmatpush1.msra.mxu0 0.0
    %2834 = vmatprep.subr.mxu0 0.0
    %2835 = vmatpush1.msra.mxu0 0.0
    %2836 = vmatprep.subr.mxu0 0.0
    %2837 = vmatpush1.msra.mxu0 0.0
    %2838 = vmatprep.subr.mxu0 0.0
    %2839 = vmatpush1.msra.mxu0 0.0
    %2840 = vmatprep.subr.mxu0 0.0
    %2841 = vmatpush1.msra.mxu0 0.0
    %2842 = vmatprep.subr.mxu0 0.0
    %2843 = vmatpush1.msra.mxu0 0.0
    %2844 = vmatprep.subr.mxu0 0.0
    %2845 = vmatpush1.msra.mxu0 0.0
    %2846 = vmatprep.subr.mxu0 0.0
    %2847 = vmatpush1.msra.mxu0 0.0
    %2848 = vmatprep.subr.mxu0 0.0
    %2849 = vmatpush1.msra.mxu0 0.0
    %2850 = vmatprep.subr.mxu0 0.0
    %2851 = vmatpush1.msra.mxu0 0.0
    %2852 = vmatprep.subr.mxu0 0.0
    %2853 = vmatpush1.msra.mxu0 0.0
    %2854 = vmatprep.subr.mxu0 0.0
    %2855 = vmatpush1.msra.mxu0 0.0
    %2856 = vmatprep.subr.mxu0 0.0
    %2857 = vmatpush1.msra.mxu0 0.0
    %2858 = vmatprep.subr.mxu0 0.0
    %2859 = vmatpush1.msra.mxu0 0.0
    %2860 = vmatprep.subr.mxu0 0.0
    %2861 = vmatpush1.msra.mxu0 0.0
    %2862 = vmatprep.subr.mxu0 0.0
    %2863 = vmatpush1.msra.mxu0 0.0
    %2864 = vmatprep.subr.mxu0 0.0
    %2865 = vmatpush1.msra.mxu0 0.0
    %2866 = vmatprep.subr.mxu0 0.0
    %2867 = vmatpush1.msra.mxu0 0.0
    %2868 = vmatprep.subr.mxu0 0.0
    %2869 = vmatpush1.msra.mxu0 0.0
    %2870 = vmatprep.subr.mxu0 0.0
    %2871 = vmatpush1.msra.mxu0 0.0
    %2872 = vmatprep.subr.mxu0 0.0
    %2873 = vmatpush1.msra.mxu0 0.0
    %2874 = vmatprep.subr.mxu0 0.0
    %2875 = vmatpush1.msra.mxu0 0.0
    %2876 = vmatprep.subr.mxu0 0.0
    %2877 = vmatpush1.msra.mxu0 0.0
    %2878 = vmatprep.subr.mxu0 0.0
    %2879 = vmatpush1.msra.mxu0 0.0
    %2880 = vmatprep.subr.mxu0 0.0
    %2881 = vmatpush1.msra.mxu0 0.0
    %2882 = vmatprep.subr.mxu0 0.0
    %2883 = vmatpush1.msra.mxu0 0.0
    %2884 = vmatprep.mubr.f32.mxu0 0.0
    %2885 = vmatmul.mubr.f32.gmra.mrb[0].mxu0 %v2736
    %v2886 = vpop.f32.mrb[0].mxu0
    %v2887 = vadd.f32 0.0, %v2886
    %v2888 = vpop.f32.mrb[0].mxu0
    %2889 = vmatprep.mubr.f32.mxu0 0.0
    %2890 = vmatmul.mubr.f32.gmra.mrb[0].mxu0 %v2739
    %v2891 = vpop.f32.mrb[0].mxu0
    %v2892 = vadd.f32 0.0, %v2891
    %v2893 = vpop.f32.mrb[0].mxu0
    %2894 = vdwg.mxu0
    %v2895 = vld [vmem:[%s2 + $0x398] sm:$0xff]
    %v2896 = vld [vmem:[%s2 + $0x3a0] sm:$0xff]
    %v2897 = vld [vmem:[%s2 + $0x3a8] sm:$0xff]
    %v2898 = vld [vmem:[%s2 + $0x3b0] sm:$0xff]
    %2899 = vmatprep.subr.mxu0 0.0
    %2900 = vmatpush1.msra.mxu0 %v2895
    %2901 = vmatprep.subr.mxu0 0.0
    %2902 = vmatpush1.msra.mxu0 %v2896
    %2903 = vmatprep.subr.mxu0 0.0
    %2904 = vmatpush1.msra.mxu0 %v2897
    %2905 = vmatprep.subr.mxu0 0.0
    %2906 = vmatpush1.msra.mxu0 %v2898
    %2907 = vmatprep.subr.mxu0 0.0
    %2908 = vmatpush1.msra.mxu0 0.0
    %2909 = vmatprep.subr.mxu0 0.0
    %2910 = vmatpush1.msra.mxu0 0.0
    %2911 = vmatprep.subr.mxu0 0.0
    %2912 = vmatpush1.msra.mxu0 0.0
    %2913 = vmatprep.subr.mxu0 0.0
    %2914 = vmatpush1.msra.mxu0 0.0
    %2915 = vmatprep.subr.mxu0 0.0
    %2916 = vmatpush1.msra.mxu0 0.0
    %2917 = vmatprep.subr.mxu0 0.0
    %2918 = vmatpush1.msra.mxu0 0.0
    %2919 = vmatprep.subr.mxu0 0.0
    %2920 = vmatpush1.msra.mxu0 0.0
    %2921 = vmatprep.subr.mxu0 0.0
    %2922 = vmatpush1.msra.mxu0 0.0
    %2923 = vmatprep.subr.mxu0 0.0
    %2924 = vmatpush1.msra.mxu0 0.0
    %2925 = vmatprep.subr.mxu0 0.0
    %2926 = vmatpush1.msra.mxu0 0.0
    %2927 = vmatprep.subr.mxu0 0.0
    %2928 = vmatpush1.msra.mxu0 0.0
    %2929 = vmatprep.subr.mxu0 0.0
    %2930 = vmatpush1.msra.mxu0 0.0
    %2931 = vmatprep.subr.mxu0 0.0
    %2932 = vmatpush1.msra.mxu0 0.0
    %2933 = vmatprep.subr.mxu0 0.0
    %2934 = vmatpush1.msra.mxu0 0.0
    %2935 = vmatprep.subr.mxu0 0.0
    %2936 = vmatpush1.msra.mxu0 0.0
    %2937 = vmatprep.subr.mxu0 0.0
    %2938 = vmatpush1.msra.mxu0 0.0
    %2939 = vmatprep.subr.mxu0 0.0
    %2940 = vmatpush1.msra.mxu0 0.0
    %2941 = vmatprep.subr.mxu0 0.0
    %2942 = vmatpush1.msra.mxu0 0.0
    %2943 = vmatprep.subr.mxu0 0.0
    %2944 = vmatpush1.msra.mxu0 0.0
    %2945 = vmatprep.subr.mxu0 0.0
    %2946 = vmatpush1.msra.mxu0 0.0
    %2947 = vmatprep.subr.mxu0 0.0
    %2948 = vmatpush1.msra.mxu0 0.0
    %2949 = vmatprep.subr.mxu0 0.0
    %2950 = vmatpush1.msra.mxu0 0.0
    %2951 = vmatprep.subr.mxu0 0.0
    %2952 = vmatpush1.msra.mxu0 0.0
    %2953 = vmatprep.subr.mxu0 0.0
    %2954 = vmatpush1.msra.mxu0 0.0
    %2955 = vmatprep.subr.mxu0 0.0
    %2956 = vmatpush1.msra.mxu0 0.0
    %2957 = vmatprep.subr.mxu0 0.0
    %2958 = vmatpush1.msra.mxu0 0.0
    %2959 = vmatprep.subr.mxu0 0.0
    %2960 = vmatpush1.msra.mxu0 0.0
    %2961 = vmatprep.subr.mxu0 0.0
    %2962 = vmatpush1.msra.mxu0 0.0
    %2963 = vmatprep.mubr.f32.mxu0 0.0
    %2964 = vmatmul.mubr.f32.gmra.mrb[0].mxu0 %v2736
    %v2965 = vpop.f32.mrb[0].mxu0
    %v2966 = vadd.f32 0.0, %v2965
    %v2967 = vpop.f32.mrb[0].mxu0
    %2968 = vmatprep.mubr.f32.mxu0 0.0
    %2969 = vmatmul.mubr.f32.gmra.mrb[0].mxu0 %v2739
    %v2970 = vpop.f32.mrb[0].mxu0
    %v2971 = vadd.f32 0.0, %v2970
    %v2972 = vpop.f32.mrb[0].mxu0
    %2973 = vdwg.mxu0
    %v2975 = vsel %vm23, %v2808, 0
    %v2978 = vsel %vm23, %v2813, 0
    %v2981 = vsel %vm23, %v2887, 0
    %v2984 = vsel %vm23, %v2892, 0
    %2986 = vmatprep.subr.mxu0 0.0
    %2987 = vmatpush1.xpose.msra.mxu0 %v2981
    %2988 = vmatprep.subr.mxu0 0.0
    %2989 = vmatpush1.xpose.msra.mxu0 %v2984
    %2990 = vmatprep.subr.mxu0 0.0
    %2991 = vmatpush1.xpose.msra.mxu0 0.0
    %2992 = vmatprep.subr.mxu0 0.0
    %2993 = vmatpush1.xpose.msra.mxu0 0.0
    %2994 = vmatprep.subr.mxu0 0.0
    %2995 = vmatpush1.xpose.msra.mxu0 0.0
    %2996 = vmatprep.subr.mxu0 0.0
    %2997 = vmatpush1.xpose.msra.mxu0 0.0
    %2998 = vmatprep.subr.mxu0 0.0
    %2999 = vmatpush1.xpose.msra.mxu0 0.0
    %3000 = vmatprep.subr.mxu0 0.0
    %3001 = vmatpush1.xpose.msra.mxu0 0.0
    %3002 = vmatprep.subr.mxu0 0.0
    %3003 = vmatpush1.xpose.msra.mxu0 0.0
    %3004 = vmatprep.subr.mxu0 0.0
    %3005 = vmatpush1.xpose.msra.mxu0 0.0
    %3006 = vmatprep.subr.mxu0 0.0
    %3007 = vmatpush1.xpose.msra.mxu0 0.0
    %3008 = vmatprep.subr.mxu0 0.0
    %3009 = vmatpush1.xpose.msra.mxu0 0.0
    %3010 = vmatprep.subr.mxu0 0.0
    %3011 = vmatpush1.xpose.msra.mxu0 0.0
    %3012 = vmatprep.subr.mxu0 0.0
    %3013 = vmatpush1.xpose.msra.mxu0 0.0
    %3014 = vmatprep.subr.mxu0 0.0
    %3015 = vmatpush1.xpose.msra.mxu0 0.0
    %3016 = vmatprep.subr.mxu0 0.0
    %3017 = vmatpush1.xpose.msra.mxu0 0.0
    %3018 = vmatprep.subr.mxu0 0.0
    %3019 = vmatpush1.xpose.msra.mxu0 0.0
    %3020 = vmatprep.subr.mxu0 0.0
    %3021 = vmatpush1.xpose.msra.mxu0 0.0
    %3022 = vmatprep.subr.mxu0 0.0
    %3023 = vmatpush1.xpose.msra.mxu0 0.0
    %3024 = vmatprep.subr.mxu0 0.0
    %3025 = vmatpush1.xpose.msra.mxu0 0.0
    %3026 = vmatprep.subr.mxu0 0.0
    %3027 = vmatpush1.xpose.msra.mxu0 0.0
    %3028 = vmatprep.subr.mxu0 0.0
    %3029 = vmatpush1.xpose.msra.mxu0 0.0
    %3030 = vmatprep.subr.mxu0 0.0
    %3031 = vmatpush1.xpose.msra.mxu0 0.0
    %3032 = vmatprep.subr.mxu0 0.0
    %3033 = vmatpush1.xpose.msra.mxu0 0.0
    %3034 = vmatprep.subr.mxu0 0.0
    %3035 = vmatpush1.xpose.msra.mxu0 0.0
    %3036 = vmatprep.subr.mxu0 0.0
    %3037 = vmatpush1.xpose.msra.mxu0 0.0
    %3038 = vmatprep.subr.mxu0 0.0
    %3039 = vmatpush1.xpose.msra.mxu0 0.0
    %3040 = vmatprep.subr.mxu0 0.0
    %3041 = vmatpush1.xpose.msra.mxu0 0.0
    %3042 = vmatprep.subr.mxu0 0.0
    %3043 = vmatpush1.xpose.msra.mxu0 0.0
    %3044 = vmatprep.subr.mxu0 0.0
    %3045 = vmatpush1.xpose.msra.mxu0 0.0
    %3046 = vmatprep.subr.mxu0 0.0
    %3047 = vmatpush1.xpose.msra.mxu0 0.0
    %3048 = vmatprep.subr.mxu0 0.0
    %3049 = vmatpush1.xpose.msra.mxu0 0.0
    %3050 = vmatprep.mubr.f32.mxu0 0.0
    %3051 = vmatmul.mubr.f32.gmra.mrb[0].mxu0 %v2975
    %v3052 = vpop.f32.mrb[0].mxu0
    %v3053 = vadd.f32 0.0, %v3052
    %v3054 = vpop.f32.mrb[0].mxu0
    %3055 = vmatprep.mubr.f32.mxu0 0.0
    %3056 = vmatmul.mubr.f32.gmra.mrb[0].mxu0 %v2978
    %v3057 = vpop.f32.mrb[0].mxu0
    %v3058 = vadd.f32 0.0, %v3057
    %v3059 = vpop.f32.mrb[0].mxu0
    %3060 = vdwg.mxu0
    %v3061 = vsel %vm119, %v3053, -inf
    %3062 = vmax.xlane.f32.xlu0 %v3061
    %v3063 = vpop.xlane.xlu0 %3062
    %v3064 = vsel %vm119, %v3058, -inf
    %3065 = vmax.xlane.f32.xlu0 %v3064
    %v3066 = vpop.xlane.xlu0 %3065
    %v3067 = vsub.f32 %v3053, %v3063
    %v3068 = vsub.f32 %v3058, %v3066
    %v3069 = vmul.f32 %v3067, 1.442695
    %v3070 = vpow.pop %v3069
    %v3071 = vmul.f32 %v3068, 1.442695
    %v3072 = vpow.pop %v3071
    %v3073 = vsel %vm119, %v3070, 0.0
    %3074 = vadd.xlane.f32.xlu0 %v3073
    %v3075 = vpop.xlane.xlu0 %3074
    %v3076 = vsel %vm119, %v3072, 0.0
    %3077 = vadd.xlane.f32.xlu0 %v3076
    %v3078 = vpop.xlane.xlu0 %3077
    %v3079 = vrcp.pop %v3075
    %v3080 = vrcp.pop %v3078
    %v3081 = vmul.f32 %v3070, %v3079
    %v3082 = vmul.f32 %v3072, %v3080
    %v3084 = vsel %vm119, %v3081, 0
    %v3087 = vsel %vm119, %v3082, 0
    %3089 = vmatprep.subr.mxu0 0.0
    %3090 = vmatpush1.msra.mxu0 %v2966
    %3091 = vmatprep.subr.mxu0 0.0
    %3092 = vmatpush1.msra.mxu0 %v2971
    %3093 = vmatprep.subr.mxu0 0.0
    %3094 = vmatpush1.msra.mxu0 0.0
    %3095 = vmatprep.subr.mxu0 0.0
    %3096 = vmatpush1.msra.mxu0 0.0
    %3097 = vmatprep.subr.mxu0 0.0
    %3098 = vmatpush1.msra.mxu0 0.0
    %3099 = vmatprep.subr.mxu0 0.0
    %3100 = vmatpush1.msra.mxu0 0.0
    %3101 = vmatprep.subr.mxu0 0.0
    %3102 = vmatpush1.msra.mxu0 0.0
    %3103 = vmatprep.subr.mxu0 0.0
    %3104 = vmatpush1.msra.mxu0 0.0
    %3105 = vmatprep.subr.mxu0 0.0
    %3106 = vmatpush1.msra.mxu0 0.0
    %3107 = vmatprep.subr.mxu0 0.0
    %3108 = vmatpush1.msra.mxu0 0.0
    %3109 = vmatprep.subr.mxu0 0.0
    %3110 = vmatpush1.msra.mxu0 0.0
    %3111 = vmatprep.subr.mxu0 0.0
    %3112 = vmatpush1.msra.mxu0 0.0
    %3113 = vmatprep.subr.mxu0 0.0
    %3114 = vmatpush1.msra.mxu0 0.0
    %3115 = vmatprep.subr.mxu0 0.0
    %3116 = vmatpush1.msra.mxu0 0.0
    %3117 = vmatprep.subr.mxu0 0.0
    %3118 = vmatpush1.msra.mxu0 0.0
    %3119 = vmatprep.subr.mxu0 0.0
    %3120 = vmatpush1.msra.mxu0 0.0
    %3121 = vmatprep.subr.mxu0 0.0
    %3122 = vmatpush1.msra.mxu0 0.0
    %3123 = vmatprep.subr.mxu0 0.0
    %3124 = vmatpush1.msra.mxu0 0.0
    %3125 = vmatprep.subr.mxu0 0.0
    %3126 = vmatpush1.msra.mxu0 0.0
    %3127 = vmatprep.subr.mxu0 0.0
    %3128 = vmatpush1.msra.mxu0 0.0
    %3129 = vmatprep.subr.mxu0 0.0
    %3130 = vmatpush1.msra.mxu0 0.0
    %3131 = vmatprep.subr.mxu0 0.0
    %3132 = vmatpush1.msra.mxu0 0.0
    %3133 = vmatprep.subr.mxu0 0.0
    %3134 = vmatpush1.msra.mxu0 0.0
    %3135 = vmatprep.subr.mxu0 0.0
    %3136 = vmatpush1.msra.mxu0 0.0
    %3137 = vmatprep.subr.mxu0 0.0
    %3138 = vmatpush1.msra.mxu0 0.0
    %3139 = vmatprep.subr.mxu0 0.0
    %3140 = vmatpush1.msra.mxu0 0.0
    %3141 = vmatprep.subr.mxu0 0.0
    %3142 = vmatpush1.msra.mxu0 0.0
    %3143 = vmatprep.subr.mxu0 0.0
    %3144 = vmatpush1.msra.mxu0 0.0
    %3145 = vmatprep.subr.mxu0 0.0
    %3146 = vmatpush1.msra.mxu0 0.0
    %3147 = vmatprep.subr.mxu0 0.0
    %3148 = vmatpush1.msra.mxu0 0.0
    %3149 = vmatprep.subr.mxu0 0.0
    %3150 = vmatpush1.msra.mxu0 0.0
    %3151 = vmatprep.subr.mxu0 0.0
    %3152 = vmatpush1.msra.mxu0 0.0
    %3153 = vmatprep.mubr.f32.mxu0 0.0
    %3154 = vmatmul.mubr.f32.gmra.mrb[0].mxu0 %v3084
    %v3155 = vpop.f32.mrb[0].mxu0
    %v3156 = vadd.f32 0.0, %v3155
    %v3157 = vpop.f32.mrb[0].mxu0
    %3158 = vmatprep.mubr.f32.mxu0 0.0
    %3159 = vmatmul.mubr.f32.gmra.mrb[0].mxu0 %v3087
    %v3160 = vpop.f32.mrb[0].mxu0
    %v3161 = vadd.f32 0.0, %v3160
    %v3162 = vpop.f32.mrb[0].mxu0
    %3163 = vdwg.mxu0
    %v3164 = vld [vmem:[%s2 + $0x418] sm:$0xff]
    %v3166 = vsel %vm23, %v3156, 0
    %v3169 = vsel %vm23, %v3161, 0
    %3171 = vmatprep.subr.mxu0 0.0
    %3172 = vmatpush1.msra.mxu0 %v3164
    %3173 = vmatprep.subr.mxu0 0.0
    %3174 = vmatpush1.msra.mxu0 0.0
    %3175 = vmatprep.subr.mxu0 0.0
    %3176 = vmatpush1.msra.mxu0 0.0
    %3177 = vmatprep.subr.mxu0 0.0
    %3178 = vmatpush1.msra.mxu0 0.0
    %3179 = vmatprep.subr.mxu0 0.0
    %3180 = vmatpush1.msra.mxu0 0.0
    %3181 = vmatprep.subr.mxu0 0.0
    %3182 = vmatpush1.msra.mxu0 0.0
    %3183 = vmatprep.subr.mxu0 0.0
    %3184 = vmatpush1.msra.mxu0 0.0
    %3185 = vmatprep.subr.mxu0 0.0
    %3186 = vmatpush1.msra.mxu0 0.0
    %3187 = vmatprep.subr.mxu0 0.0
    %3188 = vmatpush1.msra.mxu0 0.0
    %3189 = vmatprep.subr.mxu0 0.0
    %3190 = vmatpush1.msra.mxu0 0.0
    %3191 = vmatprep.subr.mxu0 0.0
    %3192 = vmatpush1.msra.mxu0 0.0
    %3193 = vmatprep.subr.mxu0 0.0
    %3194 = vmatpush1.msra.mxu0 0.0
    %3195 = vmatprep.subr.mxu0 0.0
    %3196 = vmatpush1.msra.mxu0 0.0
    %3197 = vmatprep.subr.mxu0 0.0
    %3198 = vmatpush1.msra.mxu0 0.0
    %3199 = vmatprep.subr.mxu0 0.0
    %3200 = vmatpush1.msra.mxu0 0.0
    %3201 = vmatprep.subr.mxu0 0.0
    %3202 = vmatpush1.msra.mxu0 0.0
    %3203 = vmatprep.subr.mxu0 0.0
    %3204 = vmatpush1.msra.mxu0 0.0
    %3205 = vmatprep.subr.mxu0 0.0
    %3206 = vmatpush1.msra.mxu0 0.0
    %3207 = vmatprep.subr.mxu0 0.0
    %3208 = vmatpush1.msra.mxu0 0.0
    %3209 = vmatprep.subr.mxu0 0.0
    %3210 = vmatpush1.msra.mxu0 0.0
    %3211 = vmatprep.subr.mxu0 0.0
    %3212 = vmatpush1.msra.mxu0 0.0
    %3213 = vmatprep.subr.mxu0 0.0
    %3214 = vmatpush1.msra.mxu0 0.0
    %3215 = vmatprep.subr.mxu0 0.0
    %3216 = vmatpush1.msra.mxu0 0.0
    %3217 = vmatprep.subr.mxu0 0.0
    %3218 = vmatpush1.msra.mxu0 0.0
    %3219 = vmatprep.subr.mxu0 0.0
    %3220 = vmatpush1.msra.mxu0 0.0
    %3221 = vmatprep.subr.mxu0 0.0
    %3222 = vmatpush1.msra.mxu0 0.0
    %3223 = vmatprep.subr.mxu0 0.0
    %3224 = vmatpush1.msra.mxu0 0.0
    %3225 = vmatprep.subr.mxu0 0.0
    %3226 = vmatpush1.msra.mxu0 0.0
    %3227 = vmatprep.subr.mxu0 0.0
    %3228 = vmatpush1.msra.mxu0 0.0
    %3229 = vmatprep.subr.mxu0 0.0
    %3230 = vmatpush1.msra.mxu0 0.0
    %3231 = vmatprep.subr.mxu0 0.0
    %3232 = vmatpush1.msra.mxu0 0.0
    %3233 = vmatprep.subr.mxu0 0.0
    %3234 = vmatpush1.msra.mxu0 0.0
    %3235 = vmatprep.mubr.f32.mxu0 0.0
    %3236 = vmatmul.mubr.f32.gmra.mrb[0].mxu0 %v3166
    %v3237 = vpop.f32.mrb[0].mxu0
    %v3238 = vadd.f32 0.0, %v3237
    %v3239 = vpop.f32.mrb[0].mxu0
    %3240 = vmatprep.mubr.f32.mxu0 0.0
    %3241 = vmatmul.mubr.f32.gmra.mrb[0].mxu0 %v3169
    %v3242 = vpop.f32.mrb[0].mxu0
    %v3243 = vadd.f32 0.0, %v3242
    %v3244 = vpop.f32.mrb[0].mxu0
    %3245 = vdwg.mxu0
    %v3246 = vlaneseq
    %v3247 = vshrl.u32 %v3246, 7
    %v3248 = vsub.s32 0, %v3247
    %v3249 = vrot.slane %v2725, %v3248
    %v3250 = vadd.f32 %v3249, %v3238
    %v3251 = vadd.f32 %v3249, %v3243
    %v3252 = vld [vmem:[%s2 + $0x2b0] sm:$0xff]
    %v3253 = vld [vmem:[%s2 + $0x2b8] sm:$0xff]
    %v3254 = vld [vmem:[%s2 + $0x2c0] sm:$0xff]
    %v3255 = vld [vmem:[%s2 + $0x2c8] sm:$0xff]
    %v3256 = vld [vmem:[%s2 + $0x311] sm:$0x1]
    %v3257 = vlaneseq
    %v3258 = vshrl.u32 %v3257, 7
    %v3259 = vsub.s32 0, %v3258
    %v3260 = vrot.slane %v3256, %v3259
    %3261 = vmatprep.subr.mxu0 0.0
    %3262 = vmatpush1.msra.mxu0 %v3252
    %3263 = vmatprep.subr.mxu0 0.0
    %3264 = vmatpush1.msra.mxu0 %v3253
    %3265 = vmatprep.subr.mxu0 0.0
    %3266 = vmatpush1.msra.mxu0 %v3254
    %3267 = vmatprep.subr.mxu0 0.0
    %3268 = vmatpush1.msra.mxu0 %v3255
    %3269 = vmatprep.subr.mxu0 0.0
    %3270 = vmatpush1.msra.mxu0 0.0
    %3271 = vmatprep.subr.mxu0 0.0
    %3272 = vmatpush1.msra.mxu0 0.0
    %3273 = vmatprep.subr.mxu0 0.0
    %3274 = vmatpush1.msra.mxu0 0.0
    %3275 = vmatprep.subr.mxu0 0.0
    %3276 = vmatpush1.msra.mxu0 0.0
    %3277 = vmatprep.subr.mxu0 0.0
    %3278 = vmatpush1.msra.mxu0 0.0
    %3279 = vmatprep.subr.mxu0 0.0
    %3280 = vmatpush1.msra.mxu0 0.0
    %3281 = vmatprep.subr.mxu0 0.0
    %3282 = vmatpush1.msra.mxu0 0.0
    %3283 = vmatprep.subr.mxu0 0.0
    %3284 = vmatpush1.msra.mxu0 0.0
    %3285 = vmatprep.subr.mxu0 0.0
    %3286 = vmatpush1.msra.mxu0 0.0
    %3287 = vmatprep.subr.mxu0 0.0
    %3288 = vmatpush1.msra.mxu0 0.0
    %3289 = vmatprep.subr.mxu0 0.0
    %3290 = vmatpush1.msra.mxu0 0.0
    %3291 = vmatprep.subr.mxu0 0.0
    %3292 = vmatpush1.msra.mxu0 0.0
    %3293 = vmatprep.subr.mxu0 0.0
    %3294 = vmatpush1.msra.mxu0 0.0
    %3295 = vmatprep.subr.mxu0 0.0
    %3296 = vmatpush1.msra.mxu0 0.0
    %3297 = vmatprep.subr.mxu0 0.0
    %3298 = vmatpush1.msra.mxu0 0.0
    %3299 = vmatprep.subr.mxu0 0.0
    %3300 = vmatpush1.msra.mxu0 0.0
    %3301 = vmatprep.subr.mxu0 0.0
    %3302 = vmatpush1.msra.mxu0 0.0
    %3303 = vmatprep.subr.mxu0 0.0
    %3304 = vmatpush1.msra.mxu0 0.0
    %3305 = vmatprep.subr.mxu0 0.0
    %3306 = vmatpush1.msra.mxu0 0.0
    %3307 = vmatprep.subr.mxu0 0.0
    %3308 = vmatpush1.msra.mxu0 0.0
    %3309 = vmatprep.subr.mxu0 0.0
    %3310 = vmatpush1.msra.mxu0 0.0
    %3311 = vmatprep.subr.mxu0 0.0
    %3312 = vmatpush1.msra.mxu0 0.0
    %3313 = vmatprep.subr.mxu0 0.0
    %3314 = vmatpush1.msra.mxu0 0.0
    %3315 = vmatprep.subr.mxu0 0.0
    %3316 = vmatpush1.msra.mxu0 0.0
    %3317 = vmatprep.subr.mxu0 0.0
    %3318 = vmatpush1.msra.mxu0 0.0
    %3319 = vmatprep.subr.mxu0 0.0
    %3320 = vmatpush1.msra.mxu0 0.0
    %3321 = vmatprep.subr.mxu0 0.0
    %3322 = vmatpush1.msra.mxu0 0.0
    %3323 = vmatprep.subr.mxu0 0.0
    %3324 = vmatpush1.msra.mxu0 0.0
    %3325 = vmatprep.mubr.f32.mxu0 0.0
    %3326 = vmatmul.mubr.f32.gmra.mrb[0].mxu0 %v2736
    %v3327 = vpop.f32.mrb[0].mxu0
    %v3328 = vadd.f32 %v3260, %v3327
    %v3329 = vpop.f32.mrb[0].mxu0
    %3330 = vmatprep.mubr.f32.mxu0 0.0
    %3331 = vmatmul.mubr.f32.gmra.mrb[0].mxu0 %v2739
    %v3332 = vpop.f32.mrb[0].mxu0
    %v3333 = vadd.f32 %v3260, %v3332
    %v3334 = vpop.f32.mrb[0].mxu0
    %3335 = vdwg.mxu0
    %v3336 = vld [vmem:[%s2 + $0x338] sm:$0xff]
    %v3337 = vld [vmem:[%s2 + $0x340] sm:$0xff]
    %v3338 = vld [vmem:[%s2 + $0x348] sm:$0xff]
    %v3339 = vld [vmem:[%s2 + $0x350] sm:$0xff]
    %3340 = vmatprep.subr.mxu0 0.0
    %3341 = vmatpush1.msra.mxu0 %v3336
    %3342 = vmatprep.subr.mxu0 0.0
    %3343 = vmatpush1.msra.mxu0 %v3337
    %3344 = vmatprep.subr.mxu0 0.0
    %3345 = vmatpush1.msra.mxu0 %v3338
    %3346 = vmatprep.subr.mxu0 0.0
    %3347 = vmatpush1.msra.mxu0 %v3339
    %3348 = vmatprep.subr.mxu0 0.0
    %3349 = vmatpush1.msra.mxu0 0.0
    %3350 = vmatprep.subr.mxu0 0.0
    %3351 = vmatpush1.msra.mxu0 0.0
    %3352 = vmatprep.subr.mxu0 0.0
    %3353 = vmatpush1.msra.mxu0 0.0
    %3354 = vmatprep.subr.mxu0 0.0
    %3355 = vmatpush1.msra.mxu0 0.0
    %3356 = vmatprep.subr.mxu0 0.0
    %3357 = vmatpush1.msra.mxu0 0.0
    %3358 = vmatprep.subr.mxu0 0.0
    %3359 = vmatpush1.msra.mxu0 0.0
    %3360 = vmatprep.subr.mxu0 0.0
    %3361 = vmatpush1.msra.mxu0 0.0
    %3362 = vmatprep.subr.mxu0 0.0
    %3363 = vmatpush1.msra.mxu0 0.0
    %3364 = vmatprep.subr.mxu0 0.0
    %3365 = vmatpush1.msra.mxu0 0.0
    %3366 = vmatprep.subr.mxu0 0.0
    %3367 = vmatpush1.msra.mxu0 0.0
    %3368 = vmatprep.subr.mxu0 0.0
    %3369 = vmatpush1.msra.mxu0 0.0
    %3370 = vmatprep.subr.mxu0 0.0
    %3371 = vmatpush1.msra.mxu0 0.0
    %3372 = vmatprep.subr.mxu0 0.0
    %3373 = vmatpush1.msra.mxu0 0.0
    %3374 = vmatprep.subr.mxu0 0.0
    %3375 = vmatpush1.msra.mxu0 0.0
    %3376 = vmatprep.subr.mxu0 0.0
    %3377 = vmatpush1.msra.mxu0 0.0
    %3378 = vmatprep.subr.mxu0 0.0
    %3379 = vmatpush1.msra.mxu0 0.0
    %3380 = vmatprep.subr.mxu0 0.0
    %3381 = vmatpush1.msra.mxu0 0.0
    %3382 = vmatprep.subr.mxu0 0.0
    %3383 = vmatpush1.msra.mxu0 0.0
    %3384 = vmatprep.subr.mxu0 0.0
    %3385 = vmatpush1.msra.mxu0 0.0
    %3386 = vmatprep.subr.mxu0 0.0
    %3387 = vmatpush1.msra.mxu0 0.0
    %3388 = vmatprep.subr.mxu0 0.0
    %3389 = vmatpush1.msra.mxu0 0.0
    %3390 = vmatprep.subr.mxu0 0.0
    %3391 = vmatpush1.msra.mxu0 0.0
    %3392 = vmatprep.subr.mxu0 0.0
    %3393 = vmatpush1.msra.mxu0 0.0
    %3394 = vmatprep.subr.mxu0 0.0
    %3395 = vmatpush1.msra.mxu0 0.0
    %3396 = vmatprep.subr.mxu0 0.0
    %3397 = vmatpush1.msra.mxu0 0.0
    %3398 = vmatprep.subr.mxu0 0.0
    %3399 = vmatpush1.msra.mxu0 0.0
    %3400 = vmatprep.subr.mxu0 0.0
    %3401 = vmatpush1.msra.mxu0 0.0
    %3402 = vmatprep.subr.mxu0 0.0
    %3403 = vmatpush1.msra.mxu0 0.0
    %3404 = vmatprep.mubr.f32.mxu0 0.0
    %3405 = vmatmul.mubr.f32.gmra.mrb[0].mxu0 %v2736
    %v3406 = vpop.f32.mrb[0].mxu0
    %v3407 = vadd.f32 0.0, %v3406
    %v3408 = vpop.f32.mrb[0].mxu0
    %3409 = vmatprep.mubr.f32.mxu0 0.0
    %3410 = vmatmul.mubr.f32.gmra.mrb[0].mxu0 %v2739
    %v3411 = vpop.f32.mrb[0].mxu0
    %v3412 = vadd.f32 0.0, %v3411
    %v3413 = vpop.f32.mrb[0].mxu0
    %3414 = vdwg.mxu0
    %v3415 = vld [vmem:[%s2 + $0x3b8] sm:$0xff]
    %v3416 = vld [vmem:[%s2 + $0x3c0] sm:$0xff]
    %v3417 = vld [vmem:[%s2 + $0x3c8] sm:$0xff]
    %v3418 = vld [vmem:[%s2 + $0x3d0] sm:$0xff]
    %3419 = vmatprep.subr.mxu0 0.0
    %3420 = vmatpush1.msra.mxu0 %v3415
    %3421 = vmatprep.subr.mxu0 0.0
    %3422 = vmatpush1.msra.mxu0 %v3416
    %3423 = vmatprep.subr.mxu0 0.0
    %3424 = vmatpush1.msra.mxu0 %v3417
    %3425 = vmatprep.subr.mxu0 0.0
    %3426 = vmatpush1.msra.mxu0 %v3418
    %3427 = vmatprep.subr.mxu0 0.0
    %3428 = vmatpush1.msra.mxu0 0.0
    %3429 = vmatprep.subr.mxu0 0.0
    %3430 = vmatpush1.msra.mxu0 0.0
    %3431 = vmatprep.subr.mxu0 0.0
    %3432 = vmatpush1.msra.mxu0 0.0
    %3433 = vmatprep.subr.mxu0 0.0
    %3434 = vmatpush1.msra.mxu0 0.0
    %3435 = vmatprep.subr.mxu0 0.0
    %3436 = vmatpush1.msra.mxu0 0.0
    %3437 = vmatprep.subr.mxu0 0.0
    %3438 = vmatpush1.msra.mxu0 0.0
    %3439 = vmatprep.subr.mxu0 0.0
    %3440 = vmatpush1.msra.mxu0 0.0
    %3441 = vmatprep.subr.mxu0 0.0
    %3442 = vmatpush1.msra.mxu0 0.0
    %3443 = vmatprep.subr.mxu0 0.0
    %3444 = vmatpush1.msra.mxu0 0.0
    %3445 = vmatprep.subr.mxu0 0.0
    %3446 = vmatpush1.msra.mxu0 0.0
    %3447 = vmatprep.subr.mxu0 0.0
    %3448 = vmatpush1.msra.mxu0 0.0
    %3449 = vmatprep.subr.mxu0 0.0
    %3450 = vmatpush1.msra.mxu0 0.0
    %3451 = vmatprep.subr.mxu0 0.0
    %3452 = vmatpush1.msra.mxu0 0.0
    %3453 = vmatprep.subr.mxu0 0.0
    %3454 = vmatpush1.msra.mxu0 0.0
    %3455 = vmatprep.subr.mxu0 0.0
    %3456 = vmatpush1.msra.mxu0 0.0
    %3457 = vmatprep.subr.mxu0 0.0
    %3458 = vmatpush1.msra.mxu0 0.0
    %3459 = vmatprep.subr.mxu0 0.0
    %3460 = vmatpush1.msra.mxu0 0.0
    %3461 = vmatprep.subr.mxu0 0.0
    %3462 = vmatpush1.msra.mxu0 0.0
    %3463 = vmatprep.subr.mxu0 0.0
    %3464 = vmatpush1.msra.mxu0 0.0
    %3465 = vmatprep.subr.mxu0 0.0
    %3466 = vmatpush1.msra.mxu0 0.0
    %3467 = vmatprep.subr.mxu0 0.0
    %3468 = vmatpush1.msra.mxu0 0.0
    %3469 = vmatprep.subr.mxu0 0.0
    %3470 = vmatpush1.msra.mxu0 0.0
    %3471 = vmatprep.subr.mxu0 0.0
    %3472 = vmatpush1.msra.mxu0 0.0
    %3473 = vmatprep.subr.mxu0 0.0
    %3474 = vmatpush1.msra.mxu0 0.0
    %3475 = vmatprep.subr.mxu0 0.0
    %3476 = vmatpush1.msra.mxu0 0.0
    %3477 = vmatprep.subr.mxu0 0.0
    %3478 = vmatpush1.msra.mxu0 0.0
    %3479 = vmatprep.subr.mxu0 0.0
    %3480 = vmatpush1.msra.mxu0 0.0
    %3481 = vmatprep.subr.mxu0 0.0
    %3482 = vmatpush1.msra.mxu0 0.0
    %3483 = vmatprep.mubr.f32.mxu0 0.0
    %3484 = vmatmul.mubr.f32.gmra.mrb[0].mxu0 %v2736
    %v3485 = vpop.f32.mrb[0].mxu0
    %v3486 = vadd.f32 0.0, %v3485
    %v3487 = vpop.f32.mrb[0].mxu0
    %3488 = vmatprep.mubr.f32.mxu0 0.0
    %3489 = vmatmul.mubr.f32.gmra.mrb[0].mxu0 %v2739
    %v3490 = vpop.f32.mrb[0].mxu0
    %v3491 = vadd.f32 0.0, %v3490
    %v3492 = vpop.f32.mrb[0].mxu0
    %3493 = vdwg.mxu0
    %v3495 = vsel %vm23, %v3328, 0
    %v3498 = vsel %vm23, %v3333, 0
    %v3501 = vsel %vm23, %v3407, 0
    %v3504 = vsel %vm23, %v3412, 0
    %3506 = vmatprep.subr.mxu0 0.0
    %3507 = vmatpush1.xpose.msra.mxu0 %v3501
    %3508 = vmatprep.subr.mxu0 0.0
    %3509 = vmatpush1.xpose.msra.mxu0 %v3504
    %3510 = vmatprep.subr.mxu0 0.0
    %3511 = vmatpush1.xpose.msra.mxu0 0.0
    %3512 = vmatprep.subr.mxu0 0.0
    %3513 = vmatpush1.xpose.msra.mxu0 0.0
    %3514 = vmatprep.subr.mxu0 0.0
    %3515 = vmatpush1.xpose.msra.mxu0 0.0
    %3516 = vmatprep.subr.mxu0 0.0
    %3517 = vmatpush1.xpose.msra.mxu0 0.0
    %3518 = vmatprep.subr.mxu0 0.0
    %3519 = vmatpush1.xpose.msra.mxu0 0.0
    %3520 = vmatprep.subr.mxu0 0.0
    %3521 = vmatpush1.xpose.msra.mxu0 0.0
    %3522 = vmatprep.subr.mxu0 0.0
    %3523 = vmatpush1.xpose.msra.mxu0 0.0
    %3524 = vmatprep.subr.mxu0 0.0
    %3525 = vmatpush1.xpose.msra.mxu0 0.0
    %3526 = vmatprep.subr.mxu0 0.0
    %3527 = vmatpush1.xpose.msra.mxu0 0.0
    %3528 = vmatprep.subr.mxu0 0.0
    %3529 = vmatpush1.xpose.msra.mxu0 0.0
    %3530 = vmatprep.subr.mxu0 0.0
    %3531 = vmatpush1.xpose.msra.mxu0 0.0
    %3532 = vmatprep.subr.mxu0 0.0
    %3533 = vmatpush1.xpose.msra.mxu0 0.0
    %3534 = vmatprep.subr.mxu0 0.0
    %3535 = vmatpush1.xpose.msra.mxu0 0.0
    %3536 = vmatprep.subr.mxu0 0.0
    %3537 = vmatpush1.xpose.msra.mxu0 0.0
    %3538 = vmatprep.subr.mxu0 0.0
    %3539 = vmatpush1.xpose.msra.mxu0 0.0
    %3540 = vmatprep.subr.mxu0 0.0
    %3541 = vmatpush1.xpose.msra.mxu0 0.0
    %3542 = vmatprep.subr.mxu0 0.0
    %3543 = vmatpush1.xpose.msra.mxu0 0.0
    %3544 = vmatprep.subr.mxu0 0.0
    %3545 = vmatpush1.xpose.msra.mxu0 0.0
    %3546 = vmatprep.subr.mxu0 0.0
    %3547 = vmatpush1.xpose.msra.mxu0 0.0
    %3548 = vmatprep.subr.mxu0 0.0
    %3549 = vmatpush1.xpose.msra.mxu0 0.0
    %3550 = vmatprep.subr.mxu0 0.0
    %3551 = vmatpush1.xpose.msra.mxu0 0.0
    %3552 = vmatprep.subr.mxu0 0.0
    %3553 = vmatpush1.xpose.msra.mxu0 0.0
    %3554 = vmatprep.subr.mxu0 0.0
    %3555 = vmatpush1.xpose.msra.mxu0 0.0
    %3556 = vmatprep.subr.mxu0 0.0
    %3557 = vmatpush1.xpose.msra.mxu0 0.0
    %3558 = vmatprep.subr.mxu0 0.0
    %3559 = vmatpush1.xpose.msra.mxu0 0.0
    %3560 = vmatprep.subr.mxu0 0.0
    %3561 = vmatpush1.xpose.msra.mxu0 0.0
    %3562 = vmatprep.subr.mxu0 0.0
    %3563 = vmatpush1.xpose.msra.mxu0 0.0
    %3564 = vmatprep.subr.mxu0 0.0
    %3565 = vmatpush1.xpose.msra.mxu0 0.0
    %3566 = vmatprep.subr.mxu0 0.0
    %3567 = vmatpush1.xpose.msra.mxu0 0.0
    %3568 = vmatprep.subr.mxu0 0.0
    %3569 = vmatpush1.xpose.msra.mxu0 0.0
    %3570 = vmatprep.mubr.f32.mxu0 0.0
    %3571 = vmatmul.mubr.f32.gmra.mrb[0].mxu0 %v3495
    %v3572 = vpop.f32.mrb[0].mxu0
    %v3573 = vadd.f32 0.0, %v3572
    %v3574 = vpop.f32.mrb[0].mxu0
    %3575 = vmatprep.mubr.f32.mxu0 0.0
    %3576 = vmatmul.mubr.f32.gmra.mrb[0].mxu0 %v3498
    %v3577 = vpop.f32.mrb[0].mxu0
    %v3578 = vadd.f32 0.0, %v3577
    %v3579 = vpop.f32.mrb[0].mxu0
    %3580 = vdwg.mxu0
    %v3581 = vsel %vm119, %v3573, -inf
    %3582 = vmax.xlane.f32.xlu0 %v3581
    %v3583 = vpop.xlane.xlu0 %3582
    %v3584 = vsel %vm119, %v3578, -inf
    %3585 = vmax.xlane.f32.xlu0 %v3584
    %v3586 = vpop.xlane.xlu0 %3585
    %v3587 = vsub.f32 %v3573, %v3583
    %v3588 = vsub.f32 %v3578, %v3586
    %v3589 = vmul.f32 %v3587, 1.442695
    %v3590 = vpow.pop %v3589
    %v3591 = vmul.f32 %v3588, 1.442695
    %v3592 = vpow.pop %v3591
    %v3593 = vsel %vm119, %v3590, 0.0
    %3594 = vadd.xlane.f32.xlu0 %v3593
    %v3595 = vpop.xlane.xlu0 %3594
    %v3596 = vsel %vm119, %v3592, 0.0
    %3597 = vadd.xlane.f32.xlu0 %v3596
    %v3598 = vpop.xlane.xlu0 %3597
    %v3599 = vrcp.pop %v3595
    %v3600 = vrcp.pop %v3598
    %v3601 = vmul.f32 %v3590, %v3599
    %v3602 = vmul.f32 %v3592, %v3600
    %v3604 = vsel %vm119, %v3601, 0
    %v3607 = vsel %vm119, %v3602, 0
    %3609 = vmatprep.subr.mxu0 0.0
    %3610 = vmatpush1.msra.mxu0 %v3486
    %3611 = vmatprep.subr.mxu0 0.0
    %3612 = vmatpush1.msra.mxu0 %v3491
    %3613 = vmatprep.subr.mxu0 0.0
    %3614 = vmatpush1.msra.mxu0 0.0
    %3615 = vmatprep.subr.mxu0 0.0
    %3616 = vmatpush1.msra.mxu0 0.0
    %3617 = vmatprep.subr.mxu0 0.0
    %3618 = vmatpush1.msra.mxu0 0.0
    %3619 = vmatprep.subr.mxu0 0.0
    %3620 = vmatpush1.msra.mxu0 0.0
    %3621 = vmatprep.subr.mxu0 0.0
    %3622 = vmatpush1.msra.mxu0 0.0
    %3623 = vmatprep.subr.mxu0 0.0
    %3624 = vmatpush1.msra.mxu0 0.0
    %3625 = vmatprep.subr.mxu0 0.0
    %3626 = vmatpush1.msra.mxu0 0.0
    %3627 = vmatprep.subr.mxu0 0.0
    %3628 = vmatpush1.msra.mxu0 0.0
    %3629 = vmatprep.subr.mxu0 0.0
    %3630 = vmatpush1.msra.mxu0 0.0
    %3631 = vmatprep.subr.mxu0 0.0
    %3632 = vmatpush1.msra.mxu0 0.0
    %3633 = vmatprep.subr.mxu0 0.0
    %3634 = vmatpush1.msra.mxu0 0.0
    %3635 = vmatprep.subr.mxu0 0.0
    %3636 = vmatpush1.msra.mxu0 0.0
    %3637 = vmatprep.subr.mxu0 0.0
    %3638 = vmatpush1.msra.mxu0 0.0
    %3639 = vmatprep.subr.mxu0 0.0
    %3640 = vmatpush1.msra.mxu0 0.0
    %3641 = vmatprep.subr.mxu0 0.0
    %3642 = vmatpush1.msra.mxu0 0.0
    %3643 = vmatprep.subr.mxu0 0.0
    %3644 = vmatpush1.msra.mxu0 0.0
    %3645 = vmatprep.subr.mxu0 0.0
    %3646 = vmatpush1.msra.mxu0 0.0
    %3647 = vmatprep.subr.mxu0 0.0
    %3648 = vmatpush1.msra.mxu0 0.0
    %3649 = vmatprep.subr.mxu0 0.0
    %3650 = vmatpush1.msra.mxu0 0.0
    %3651 = vmatprep.subr.mxu0 0.0
    %3652 = vmatpush1.msra.mxu0 0.0
    %3653 = vmatprep.subr.mxu0 0.0
    %3654 = vmatpush1.msra.mxu0 0.0
    %3655 = vmatprep.subr.mxu0 0.0
    %3656 = vmatpush1.msra.mxu0 0.0
    %3657 = vmatprep.subr.mxu0 0.0
    %3658 = vmatpush1.msra.mxu0 0.0
    %3659 = vmatprep.subr.mxu0 0.0
    %3660 = vmatpush1.msra.mxu0 0.0
    %3661 = vmatprep.subr.mxu0 0.0
    %3662 = vmatpush1.msra.mxu0 0.0
    %3663 = vmatprep.subr.mxu0 0.0
    %3664 = vmatpush1.msra.mxu0 0.0
    %3665 = vmatprep.subr.mxu0 0.0
    %3666 = vmatpush1.msra.mxu0 0.0
    %3667 = vmatprep.subr.mxu0 0.0
    %3668 = vmatpush1.msra.mxu0 0.0
    %3669 = vmatprep.subr.mxu0 0.0
    %3670 = vmatpush1.msra.mxu0 0.0
    %3671 = vmatprep.subr.mxu0 0.0
    %3672 = vmatpush1.msra.mxu0 0.0
    %3673 = vmatprep.mubr.f32.mxu0 0.0
    %3674 = vmatmul.mubr.f32.gmra.mrb[0].mxu0 %v3604
    %v3675 = vpop.f32.mrb[0].mxu0
    %v3676 = vadd.f32 0.0, %v3675
    %v3677 = vpop.f32.mrb[0].mxu0
    %3678 = vmatprep.mubr.f32.mxu0 0.0
    %3679 = vmatmul.mubr.f32.gmra.mrb[0].mxu0 %v3607
    %v3680 = vpop.f32.mrb[0].mxu0
    %v3681 = vadd.f32 0.0, %v3680
    %v3682 = vpop.f32.mrb[0].mxu0
    %3683 = vdwg.mxu0
    %v3684 = vld [vmem:[%s2 + $0x420] sm:$0xff]
    %v3686 = vsel %vm23, %v3676, 0
    %v3689 = vsel %vm23, %v3681, 0
    %3691 = vmatprep.subr.mxu0 0.0
    %3692 = vmatpush1.msra.mxu0 %v3684
    %3693 = vmatprep.subr.mxu0 0.0
    %3694 = vmatpush1.msra.mxu0 0.0
    %3695 = vmatprep.subr.mxu0 0.0
    %3696 = vmatpush1.msra.mxu0 0.0
    %3697 = vmatprep.subr.mxu0 0.0
    %3698 = vmatpush1.msra.mxu0 0.0
    %3699 = vmatprep.subr.mxu0 0.0
    %3700 = vmatpush1.msra.mxu0 0.0
    %3701 = vmatprep.subr.mxu0 0.0
    %3702 = vmatpush1.msra.mxu0 0.0
    %3703 = vmatprep.subr.mxu0 0.0
    %3704 = vmatpush1.msra.mxu0 0.0
    %3705 = vmatprep.subr.mxu0 0.0
    %3706 = vmatpush1.msra.mxu0 0.0
    %3707 = vmatprep.subr.mxu0 0.0
    %3708 = vmatpush1.msra.mxu0 0.0
    %3709 = vmatprep.subr.mxu0 0.0
    %3710 = vmatpush1.msra.mxu0 0.0
    %3711 = vmatprep.subr.mxu0 0.0
    %3712 = vmatpush1.msra.mxu0 0.0
    %3713 = vmatprep.subr.mxu0 0.0
    %3714 = vmatpush1.msra.mxu0 0.0
    %3715 = vmatprep.subr.mxu0 0.0
    %3716 = vmatpush1.msra.mxu0 0.0
    %3717 = vmatprep.subr.mxu0 0.0
    %3718 = vmatpush1.msra.mxu0 0.0
    %3719 = vmatprep.subr.mxu0 0.0
    %3720 = vmatpush1.msra.mxu0 0.0
    %3721 = vmatprep.subr.mxu0 0.0
    %3722 = vmatpush1.msra.mxu0 0.0
    %3723 = vmatprep.subr.mxu0 0.0
    %3724 = vmatpush1.msra.mxu0 0.0
    %3725 = vmatprep.subr.mxu0 0.0
    %3726 = vmatpush1.msra.mxu0 0.0
    %3727 = vmatprep.subr.mxu0 0.0
    %3728 = vmatpush1.msra.mxu0 0.0
    %3729 = vmatprep.subr.mxu0 0.0
    %3730 = vmatpush1.msra.mxu0 0.0
    %3731 = vmatprep.subr.mxu0 0.0
    %3732 = vmatpush1.msra.mxu0 0.0
    %3733 = vmatprep.subr.mxu0 0.0
    %3734 = vmatpush1.msra.mxu0 0.0
    %3735 = vmatprep.subr.mxu0 0.0
    %3736 = vmatpush1.msra.mxu0 0.0
    %3737 = vmatprep.subr.mxu0 0.0
    %3738 = vmatpush1.msra.mxu0 0.0
    %3739 = vmatprep.subr.mxu0 0.0
    %3740 = vmatpush1.msra.mxu0 0.0
    %3741 = vmatprep.subr.mxu0 0.0
    %3742 = vmatpush1.msra.mxu0 0.0
    %3743 = vmatprep.subr.mxu0 0.0
    %3744 = vmatpush1.msra.mxu0 0.0
    %3745 = vmatprep.subr.mxu0 0.0
    %3746 = vmatpush1.msra.mxu0 0.0
    %3747 = vmatprep.subr.mxu0 0.0
    %3748 = vmatpush1.msra.mxu0 0.0
    %3749 = vmatprep.subr.mxu0 0.0
    %3750 = vmatpush1.msra.mxu0 0.0
    %3751 = vmatprep.subr.mxu0 0.0
    %3752 = vmatpush1.msra.mxu0 0.0
    %3753 = vmatprep.subr.mxu0 0.0
    %3754 = vmatpush1.msra.mxu0 0.0
    %3755 = vmatprep.mubr.f32.mxu0 0.0
    %3756 = vmatmul.mubr.f32.gmra.mrb[0].mxu0 %v3686
    %v3757 = vpop.f32.mrb[0].mxu0
    %v3758 = vadd.f32 0.0, %v3757
    %v3759 = vpop.f32.mrb[0].mxu0
    %3760 = vmatprep.mubr.f32.mxu0 0.0
    %3761 = vmatmul.mubr.f32.gmra.mrb[0].mxu0 %v3689
    %v3762 = vpop.f32.mrb[0].mxu0
    %v3763 = vadd.f32 0.0, %v3762
    %v3764 = vpop.f32.mrb[0].mxu0
    %3765 = vdwg.mxu0
    %v3766 = vadd.f32 %v3250, %v3758
    %v3767 = vadd.f32 %v3251, %v3763
    %v3768 = vld [vmem:[%s2 + $0x2d0] sm:$0xff]
    %v3769 = vld [vmem:[%s2 + $0x2d8] sm:$0xff]
    %v3770 = vld [vmem:[%s2 + $0x2e0] sm:$0xff]
    %v3771 = vld [vmem:[%s2 + $0x2e8] sm:$0xff]
    %v3772 = vld [vmem:[%s2 + $0x312] sm:$0x1]
    %v3773 = vlaneseq
    %v3774 = vshrl.u32 %v3773, 7
    %v3775 = vsub.s32 0, %v3774
    %v3776 = vrot.slane %v3772, %v3775
    %3777 = vmatprep.subr.mxu0 0.0
    %3778 = vmatpush1.msra.mxu0 %v3768
    %3779 = vmatprep.subr.mxu0 0.0
    %3780 = vmatpush1.msra.mxu0 %v3769
    %3781 = vmatprep.subr.mxu0 0.0
    %3782 = vmatpush1.msra.mxu0 %v3770
    %3783 = vmatprep.subr.mxu0 0.0
    %3784 = vmatpush1.msra.mxu0 %v3771
    %3785 = vmatprep.subr.mxu0 0.0
    %3786 = vmatpush1.msra.mxu0 0.0
    %3787 = vmatprep.subr.mxu0 0.0
    %3788 = vmatpush1.msra.mxu0 0.0
    %3789 = vmatprep.subr.mxu0 0.0
    %3790 = vmatpush1.msra.mxu0 0.0
    %3791 = vmatprep.subr.mxu0 0.0
    %3792 = vmatpush1.msra.mxu0 0.0
    %3793 = vmatprep.subr.mxu0 0.0
    %3794 = vmatpush1.msra.mxu0 0.0
    %3795 = vmatprep.subr.mxu0 0.0
    %3796 = vmatpush1.msra.mxu0 0.0
    %3797 = vmatprep.subr.mxu0 0.0
    %3798 = vmatpush1.msra.mxu0 0.0
    %3799 = vmatprep.subr.mxu0 0.0
    %3800 = vmatpush1.msra.mxu0 0.0
    %3801 = vmatprep.subr.mxu0 0.0
    %3802 = vmatpush1.msra.mxu0 0.0
    %3803 = vmatprep.subr.mxu0 0.0
    %3804 = vmatpush1.msra.mxu0 0.0
    %3805 = vmatprep.subr.mxu0 0.0
    %3806 = vmatpush1.msra.mxu0 0.0
    %3807 = vmatprep.subr.mxu0 0.0
    %3808 = vmatpush1.msra.mxu0 0.0
    %3809 = vmatprep.subr.mxu0 0.0
    %3810 = vmatpush1.msra.mxu0 0.0
    %3811 = vmatprep.subr.mxu0 0.0
    %3812 = vmatpush1.msra.mxu0 0.0
    %3813 = vmatprep.subr.mxu0 0.0
    %3814 = vmatpush1.msra.mxu0 0.0
    %3815 = vmatprep.subr.mxu0 0.0
    %3816 = vmatpush1.msra.mxu0 0.0
    %3817 = vmatprep.subr.mxu0 0.0
    %3818 = vmatpush1.msra.mxu0 0.0
    %3819 = vmatprep.subr.mxu0 0.0
    %3820 = vmatpush1.msra.mxu0 0.0
    %3821 = vmatprep.subr.mxu0 0.0
    %3822 = vmatpush1.msra.mxu0 0.0
    %3823 = vmatprep.subr.mxu0 0.0
    %3824 = vmatpush1.msra.mxu0 0.0
    %3825 = vmatprep.subr.mxu0 0.0
    %3826 = vmatpush1.msra.mxu0 0.0
    %3827 = vmatprep.subr.mxu0 0.0
    %3828 = vmatpush1.msra.mxu0 0.0
    %3829 = vmatprep.subr.mxu0 0.0
    %3830 = vmatpush1.msra.mxu0 0.0
    %3831 = vmatprep.subr.mxu0 0.0
    %3832 = vmatpush1.msra.mxu0 0.0
    %3833 = vmatprep.subr.mxu0 0.0
    %3834 = vmatpush1.msra.mxu0 0.0
    %3835 = vmatprep.subr.mxu0 0.0
    %3836 = vmatpush1.msra.mxu0 0.0
    %3837 = vmatprep.subr.mxu0 0.0
    %3838 = vmatpush1.msra.mxu0 0.0
    %3839 = vmatprep.subr.mxu0 0.0
    %3840 = vmatpush1.msra.mxu0 0.0
    %3841 = vmatprep.mubr.f32.mxu0 0.0
    %3842 = vmatmul.mubr.f32.gmra.mrb[0].mxu0 %v2736
    %v3843 = vpop.f32.mrb[0].mxu0
    %v3844 = vadd.f32 %v3776, %v3843
    %v3845 = vpop.f32.mrb[0].mxu0
    %3846 = vmatprep.mubr.f32.mxu0 0.0
    %3847 = vmatmul.mubr.f32.gmra.mrb[0].mxu0 %v2739
    %v3848 = vpop.f32.mrb[0].mxu0
    %v3849 = vadd.f32 %v3776, %v3848
    %v3850 = vpop.f32.mrb[0].mxu0
    %3851 = vdwg.mxu0
    %v3852 = vld [vmem:[%s2 + $0x358] sm:$0xff]
    %v3853 = vld [vmem:[%s2 + $0x360] sm:$0xff]
    %v3854 = vld [vmem:[%s2 + $0x368] sm:$0xff]
    %v3855 = vld [vmem:[%s2 + $0x370] sm:$0xff]
    %3856 = vmatprep.subr.mxu0 0.0
    %3857 = vmatpush1.msra.mxu0 %v3852
    %3858 = vmatprep.subr.mxu0 0.0
    %3859 = vmatpush1.msra.mxu0 %v3853
    %3860 = vmatprep.subr.mxu0 0.0
    %3861 = vmatpush1.msra.mxu0 %v3854
    %3862 = vmatprep.subr.mxu0 0.0
    %3863 = vmatpush1.msra.mxu0 %v3855
    %3864 = vmatprep.subr.mxu0 0.0
    %3865 = vmatpush1.msra.mxu0 0.0
    %3866 = vmatprep.subr.mxu0 0.0
    %3867 = vmatpush1.msra.mxu0 0.0
    %3868 = vmatprep.subr.mxu0 0.0
    %3869 = vmatpush1.msra.mxu0 0.0
    %3870 = vmatprep.subr.mxu0 0.0
    %3871 = vmatpush1.msra.mxu0 0.0
    %3872 = vmatprep.subr.mxu0 0.0
    %3873 = vmatpush1.msra.mxu0 0.0
    %3874 = vmatprep.subr.mxu0 0.0
    %3875 = vmatpush1.msra.mxu0 0.0
    %3876 = vmatprep.subr.mxu0 0.0
    %3877 = vmatpush1.msra.mxu0 0.0
    %3878 = vmatprep.subr.mxu0 0.0
    %3879 = vmatpush1.msra.mxu0 0.0
    %3880 = vmatprep.subr.mxu0 0.0
    %3881 = vmatpush1.msra.mxu0 0.0
    %3882 = vmatprep.subr.mxu0 0.0
    %3883 = vmatpush1.msra.mxu0 0.0
    %3884 = vmatprep.subr.mxu0 0.0
    %3885 = vmatpush1.msra.mxu0 0.0
    %3886 = vmatprep.subr.mxu0 0.0
    %3887 = vmatpush1.msra.mxu0 0.0
    %3888 = vmatprep.subr.mxu0 0.0
    %3889 = vmatpush1.msra.mxu0 0.0
    %3890 = vmatprep.subr.mxu0 0.0
    %3891 = vmatpush1.msra.mxu0 0.0
    %3892 = vmatprep.subr.mxu0 0.0
    %3893 = vmatpush1.msra.mxu0 0.0
    %3894 = vmatprep.subr.mxu0 0.0
    %3895 = vmatpush1.msra.mxu0 0.0
    %3896 = vmatprep.subr.mxu0 0.0
    %3897 = vmatpush1.msra.mxu0 0.0
    %3898 = vmatprep.subr.mxu0 0.0
    %3899 = vmatpush1.msra.mxu0 0.0
    %3900 = vmatprep.subr.mxu0 0.0
    %3901 = vmatpush1.msra.mxu0 0.0
    %3902 = vmatprep.subr.mxu0 0.0
    %3903 = vmatpush1.msra.mxu0 0.0
    %3904 = vmatprep.subr.mxu0 0.0
    %3905 = vmatpush1.msra.mxu0 0.0
    %3906 = vmatprep.subr.mxu0 0.0
    %3907 = vmatpush1.msra.mxu0 0.0
    %3908 = vmatprep.subr.mxu0 0.0
    %3909 = vmatpush1.msra.mxu0 0.0
    %3910 = vmatprep.subr.mxu0 0.0
    %3911 = vmatpush1.msra.mxu0 0.0
    %3912 = vmatprep.subr.mxu0 0.0
    %3913 = vmatpush1.msra.mxu0 0.0
    %3914 = vmatprep.subr.mxu0 0.0
    %3915 = vmatpush1.msra.mxu0 0.0
    %3916 = vmatprep.subr.mxu0 0.0
    %3917 = vmatpush1.msra.mxu0 0.0
    %3918 = vmatprep.subr.mxu0 0.0
    %3919 = vmatpush1.msra.mxu0 0.0
    %3920 = vmatprep.mubr.f32.mxu0 0.0
    %3921 = vmatmul.mubr.f32.gmra.mrb[0].mxu0 %v2736
    %v3922 = vpop.f32.mrb[0].mxu0
    %v3923 = vadd.f32 0.0, %v3922
    %v3924 = vpop.f32.mrb[0].mxu0
    %3925 = vmatprep.mubr.f32.mxu0 0.0
    %3926 = vmatmul.mubr.f32.gmra.mrb[0].mxu0 %v2739
    %v3927 = vpop.f32.mrb[0].mxu0
    %v3928 = vadd.f32 0.0, %v3927
    %v3929 = vpop.f32.mrb[0].mxu0
    %3930 = vdwg.mxu0
    %v3931 = vld [vmem:[%s2 + $0x3d8] sm:$0xff]
    %v3932 = vld [vmem:[%s2 + $0x3e0] sm:$0xff]
    %v3933 = vld [vmem:[%s2 + $0x3e8] sm:$0xff]
    %v3934 = vld [vmem:[%s2 + $0x3f0] sm:$0xff]
    %3935 = vmatprep.subr.mxu0 0.0
    %3936 = vmatpush1.msra.mxu0 %v3931
    %3937 = vmatprep.subr.mxu0 0.0
    %3938 = vmatpush1.msra.mxu0 %v3932
    %3939 = vmatprep.subr.mxu0 0.0
    %3940 = vmatpush1.msra.mxu0 %v3933
    %3941 = vmatprep.subr.mxu0 0.0
    %3942 = vmatpush1.msra.mxu0 %v3934
    %3943 = vmatprep.subr.mxu0 0.0
    %3944 = vmatpush1.msra.mxu0 0.0
    %3945 = vmatprep.subr.mxu0 0.0
    %3946 = vmatpush1.msra.mxu0 0.0
    %3947 = vmatprep.subr.mxu0 0.0
    %3948 = vmatpush1.msra.mxu0 0.0
    %3949 = vmatprep.subr.mxu0 0.0
    %3950 = vmatpush1.msra.mxu0 0.0
    %3951 = vmatprep.subr.mxu0 0.0
    %3952 = vmatpush1.msra.mxu0 0.0
    %3953 = vmatprep.subr.mxu0 0.0
    %3954 = vmatpush1.msra.mxu0 0.0
    %3955 = vmatprep.subr.mxu0 0.0
    %3956 = vmatpush1.msra.mxu0 0.0
    %3957 = vmatprep.subr.mxu0 0.0
    %3958 = vmatpush1.msra.mxu0 0.0
    %3959 = vmatprep.subr.mxu0 0.0
    %3960 = vmatpush1.msra.mxu0 0.0
    %3961 = vmatprep.subr.mxu0 0.0
    %3962 = vmatpush1.msra.mxu0 0.0
    %3963 = vmatprep.subr.mxu0 0.0
    %3964 = vmatpush1.msra.mxu0 0.0
    %3965 = vmatprep.subr.mxu0 0.0
    %3966 = vmatpush1.msra.mxu0 0.0
    %3967 = vmatprep.subr.mxu0 0.0
    %3968 = vmatpush1.msra.mxu0 0.0
    %3969 = vmatprep.subr.mxu0 0.0
    %3970 = vmatpush1.msra.mxu0 0.0
    %3971 = vmatprep.subr.mxu0 0.0
    %3972 = vmatpush1.msra.mxu0 0.0
    %3973 = vmatprep.subr.mxu0 0.0
    %3974 = vmatpush1.msra.mxu0 0.0
    %3975 = vmatprep.subr.mxu0 0.0
    %3976 = vmatpush1.msra.mxu0 0.0
    %3977 = vmatprep.subr.mxu0 0.0
    %3978 = vmatpush1.msra.mxu0 0.0
    %3979 = vmatprep.subr.mxu0 0.0
    %3980 = vmatpush1.msra.mxu0 0.0
    %3981 = vmatprep.subr.mxu0 0.0
    %3982 = vmatpush1.msra.mxu0 0.0
    %3983 = vmatprep.subr.mxu0 0.0
    %3984 = vmatpush1.msra.mxu0 0.0
    %3985 = vmatprep.subr.mxu0 0.0
    %3986 = vmatpush1.msra.mxu0 0.0
    %3987 = vmatprep.subr.mxu0 0.0
    %3988 = vmatpush1.msra.mxu0 0.0
    %3989 = vmatprep.subr.mxu0 0.0
    %3990 = vmatpush1.msra.mxu0 0.0
    %3991 = vmatprep.subr.mxu0 0.0
    %3992 = vmatpush1.msra.mxu0 0.0
    %3993 = vmatprep.subr.mxu0 0.0
    %3994 = vmatpush1.msra.mxu0 0.0
    %3995 = vmatprep.subr.mxu0 0.0
    %3996 = vmatpush1.msra.mxu0 0.0
    %3997 = vmatprep.subr.mxu0 0.0
    %3998 = vmatpush1.msra.mxu0 0.0
    %3999 = vmatprep.mubr.f32.mxu0 0.0
    %4000 = vmatmul.mubr.f32.gmra.mrb[0].mxu0 %v2736
    %v4001 = vpop.f32.mrb[0].mxu0
    %v4002 = vadd.f32 0.0, %v4001
    %v4003 = vpop.f32.mrb[0].mxu0
    %4004 = vmatprep.mubr.f32.mxu0 0.0
    %4005 = vmatmul.mubr.f32.gmra.mrb[0].mxu0 %v2739
    %v4006 = vpop.f32.mrb[0].mxu0
    %v4007 = vadd.f32 0.0, %v4006
    %v4008 = vpop.f32.mrb[0].mxu0
    %4009 = vdwg.mxu0
    %v4011 = vsel %vm23, %v3844, 0
    %v4014 = vsel %vm23, %v3849, 0
    %v4017 = vsel %vm23, %v3923, 0
    %v4020 = vsel %vm23, %v3928, 0
    %4022 = vmatprep.subr.mxu0 0.0
    %4023 = vmatpush1.xpose.msra.mxu0 %v4017
    %4024 = vmatprep.subr.mxu0 0.0
    %4025 = vmatpush1.xpose.msra.mxu0 %v4020
    %4026 = vmatprep.subr.mxu0 0.0
    %4027 = vmatpush1.xpose.msra.mxu0 0.0
    %4028 = vmatprep.subr.mxu0 0.0
    %4029 = vmatpush1.xpose.msra.mxu0 0.0
    %4030 = vmatprep.subr.mxu0 0.0
    %4031 = vmatpush1.xpose.msra.mxu0 0.0
    %4032 = vmatprep.subr.mxu0 0.0
    %4033 = vmatpush1.xpose.msra.mxu0 0.0
    %4034 = vmatprep.subr.mxu0 0.0
    %4035 = vmatpush1.xpose.msra.mxu0 0.0
    %4036 = vmatprep.subr.mxu0 0.0
    %4037 = vmatpush1.xpose.msra.mxu0 0.0
    %4038 = vmatprep.subr.mxu0 0.0
    %4039 = vmatpush1.xpose.msra.mxu0 0.0
    %4040 = vmatprep.subr.mxu0 0.0
    %4041 = vmatpush1.xpose.msra.mxu0 0.0
    %4042 = vmatprep.subr.mxu0 0.0
    %4043 = vmatpush1.xpose.msra.mxu0 0.0
    %4044 = vmatprep.subr.mxu0 0.0
    %4045 = vmatpush1.xpose.msra.mxu0 0.0
    %4046 = vmatprep.subr.mxu0 0.0
    %4047 = vmatpush1.xpose.msra.mxu0 0.0
    %4048 = vmatprep.subr.mxu0 0.0
    %4049 = vmatpush1.xpose.msra.mxu0 0.0
    %4050 = vmatprep.subr.mxu0 0.0
    %4051 = vmatpush1.xpose.msra.mxu0 0.0
    %4052 = vmatprep.subr.mxu0 0.0
    %4053 = vmatpush1.xpose.msra.mxu0 0.0
    %4054 = vmatprep.subr.mxu0 0.0
    %4055 = vmatpush1.xpose.msra.mxu0 0.0
    %4056 = vmatprep.subr.mxu0 0.0
    %4057 = vmatpush1.xpose.msra.mxu0 0.0
    %4058 = vmatprep.subr.mxu0 0.0
    %4059 = vmatpush1.xpose.msra.mxu0 0.0
    %4060 = vmatprep.subr.mxu0 0.0
    %4061 = vmatpush1.xpose.msra.mxu0 0.0
    %4062 = vmatprep.subr.mxu0 0.0
    %4063 = vmatpush1.xpose.msra.mxu0 0.0
    %4064 = vmatprep.subr.mxu0 0.0
    %4065 = vmatpush1.xpose.msra.mxu0 0.0
    %4066 = vmatprep.subr.mxu0 0.0
    %4067 = vmatpush1.xpose.msra.mxu0 0.0
    %4068 = vmatprep.subr.mxu0 0.0
    %4069 = vmatpush1.xpose.msra.mxu0 0.0
    %4070 = vmatprep.subr.mxu0 0.0
    %4071 = vmatpush1.xpose.msra.mxu0 0.0
    %4072 = vmatprep.subr.mxu0 0.0
    %4073 = vmatpush1.xpose.msra.mxu0 0.0
    %4074 = vmatprep.subr.mxu0 0.0
    %4075 = vmatpush1.xpose.msra.mxu0 0.0
    %4076 = vmatprep.subr.mxu0 0.0
    %4077 = vmatpush1.xpose.msra.mxu0 0.0
    %4078 = vmatprep.subr.mxu0 0.0
    %4079 = vmatpush1.xpose.msra.mxu0 0.0
    %4080 = vmatprep.subr.mxu0 0.0
    %4081 = vmatpush1.xpose.msra.mxu0 0.0
    %4082 = vmatprep.subr.mxu0 0.0
    %4083 = vmatpush1.xpose.msra.mxu0 0.0
    %4084 = vmatprep.subr.mxu0 0.0
    %4085 = vmatpush1.xpose.msra.mxu0 0.0
    %4086 = vmatprep.mubr.f32.mxu0 0.0
    %4087 = vmatmul.mubr.f32.gmra.mrb[0].mxu0 %v4011
    %v4088 = vpop.f32.mrb[0].mxu0
    %v4089 = vadd.f32 0.0, %v4088
    %v4090 = vpop.f32.mrb[0].mxu0
    %4091 = vmatprep.mubr.f32.mxu0 0.0
    %4092 = vmatmul.mubr.f32.gmra.mrb[0].mxu0 %v4014
    %v4093 = vpop.f32.mrb[0].mxu0
    %v4094 = vadd.f32 0.0, %v4093
    %v4095 = vpop.f32.mrb[0].mxu0
    %4096 = vdwg.mxu0
    %v4097 = vsel %vm119, %v4089, -inf
    %4098 = vmax.xlane.f32.xlu0 %v4097
    %v4099 = vpop.xlane.xlu0 %4098
    %v4100 = vsel %vm119, %v4094, -inf
    %4101 = vmax.xlane.f32.xlu0 %v4100
    %v4102 = vpop.xlane.xlu0 %4101
    %v4103 = vsub.f32 %v4089, %v4099
    %v4104 = vsub.f32 %v4094, %v4102
    %v4105 = vmul.f32 %v4103, 1.442695
    %v4106 = vpow.pop %v4105
    %v4107 = vmul.f32 %v4104, 1.442695
    %v4108 = vpow.pop %v4107
    %v4109 = vsel %vm119, %v4106, 0.0
    %4110 = vadd.xlane.f32.xlu0 %v4109
    %v4111 = vpop.xlane.xlu0 %4110
    %v4112 = vsel %vm119, %v4108, 0.0
    %4113 = vadd.xlane.f32.xlu0 %v4112
    %v4114 = vpop.xlane.xlu0 %4113
    %v4115 = vrcp.pop %v4111
    %v4116 = vrcp.pop %v4114
    %v4117 = vmul.f32 %v4106, %v4115
    %v4118 = vmul.f32 %v4108, %v4116
    %v4120 = vsel %vm119, %v4117, 0
    %v4123 = vsel %vm119, %v4118, 0
    %4125 = vmatprep.subr.mxu0 0.0
    %4126 = vmatpush1.msra.mxu0 %v4002
    %4127 = vmatprep.subr.mxu0 0.0
    %4128 = vmatpush1.msra.mxu0 %v4007
    %4129 = vmatprep.subr.mxu0 0.0
    %4130 = vmatpush1.msra.mxu0 0.0
    %4131 = vmatprep.subr.mxu0 0.0
    %4132 = vmatpush1.msra.mxu0 0.0
    %4133 = vmatprep.subr.mxu0 0.0
    %4134 = vmatpush1.msra.mxu0 0.0
    %4135 = vmatprep.subr.mxu0 0.0
    %4136 = vmatpush1.msra.mxu0 0.0
    %4137 = vmatprep.subr.mxu0 0.0
    %4138 = vmatpush1.msra.mxu0 0.0
    %4139 = vmatprep.subr.mxu0 0.0
    %4140 = vmatpush1.msra.mxu0 0.0
    %4141 = vmatprep.subr.mxu0 0.0
    %4142 = vmatpush1.msra.mxu0 0.0
    %4143 = vmatprep.subr.mxu0 0.0
    %4144 = vmatpush1.msra.mxu0 0.0
    %4145 = vmatprep.subr.mxu0 0.0
    %4146 = vmatpush1.msra.mxu0 0.0
    %4147 = vmatprep.subr.mxu0 0.0
    %4148 = vmatpush1.msra.mxu0 0.0
    %4149 = vmatprep.subr.mxu0 0.0
    %4150 = vmatpush1.msra.mxu0 0.0
    %4151 = vmatprep.subr.mxu0 0.0
    %4152 = vmatpush1.msra.mxu0 0.0
    %4153 = vmatprep.subr.mxu0 0.0
    %4154 = vmatpush1.msra.mxu0 0.0
    %4155 = vmatprep.subr.mxu0 0.0
    %4156 = vmatpush1.msra.mxu0 0.0
    %4157 = vmatprep.subr.mxu0 0.0
    %4158 = vmatpush1.msra.mxu0 0.0
    %4159 = vmatprep.subr.mxu0 0.0
    %4160 = vmatpush1.msra.mxu0 0.0
    %4161 = vmatprep.subr.mxu0 0.0
    %4162 = vmatpush1.msra.mxu0 0.0
    %4163 = vmatprep.subr.mxu0 0.0
    %4164 = vmatpush1.msra.mxu0 0.0
    %4165 = vmatprep.subr.mxu0 0.0
    %4166 = vmatpush1.msra.mxu0 0.0
    %4167 = vmatprep.subr.mxu0 0.0
    %4168 = vmatpush1.msra.mxu0 0.0
    %4169 = vmatprep.subr.mxu0 0.0
    %4170 = vmatpush1.msra.mxu0 0.0
    %4171 = vmatprep.subr.mxu0 0.0
    %4172 = vmatpush1.msra.mxu0 0.0
    %4173 = vmatprep.subr.mxu0 0.0
    %4174 = vmatpush1.msra.mxu0 0.0
    %4175 = vmatprep.subr.mxu0 0.0
    %4176 = vmatpush1.msra.mxu0 0.0
    %4177 = vmatprep.subr.mxu0 0.0
    %4178 = vmatpush1.msra.mxu0 0.0
    %4179 = vmatprep.subr.mxu0 0.0
    %4180 = vmatpush1.msra.mxu0 0.0
    %4181 = vmatprep.subr.mxu0 0.0
    %4182 = vmatpush1.msra.mxu0 0.0
    %4183 = vmatprep.subr.mxu0 0.0
    %4184 = vmatpush1.msra.mxu0 0.0
    %4185 = vmatprep.subr.mxu0 0.0
    %4186 = vmatpush1.msra.mxu0 0.0
    %4187 = vmatprep.subr.mxu0 0.0
    %4188 = vmatpush1.msra.mxu0 0.0
    %4189 = vmatprep.mubr.f32.mxu0 0.0
    %4190 = vmatmul.mubr.f32.gmra.mrb[0].mxu0 %v4120
    %v4191 = vpop.f32.mrb[0].mxu0
    %v4192 = vadd.f32 0.0, %v4191
    %v4193 = vpop.f32.mrb[0].mxu0
    %4194 = vmatprep.mubr.f32.mxu0 0.0
    %4195 = vmatmul.mubr.f32.gmra.mrb[0].mxu0 %v4123
    %v4196 = vpop.f32.mrb[0].mxu0
    %v4197 = vadd.f32 0.0, %v4196
    %v4198 = vpop.f32.mrb[0].mxu0
    %4199 = vdwg.mxu0
    %v4200 = vld [vmem:[%s2 + $0x428] sm:$0xff]
    %v4202 = vsel %vm23, %v4192, 0
    %v4205 = vsel %vm23, %v4197, 0
    %4207 = vmatprep.subr.mxu0 0.0
    %4208 = vmatpush1.msra.mxu0 %v4200
    %4209 = vmatprep.subr.mxu0 0.0
    %4210 = vmatpush1.msra.mxu0 0.0
    %4211 = vmatprep.subr.mxu0 0.0
    %4212 = vmatpush1.msra.mxu0 0.0
    %4213 = vmatprep.subr.mxu0 0.0
    %4214 = vmatpush1.msra.mxu0 0.0
    %4215 = vmatprep.subr.mxu0 0.0
    %4216 = vmatpush1.msra.mxu0 0.0
    %4217 = vmatprep.subr.mxu0 0.0
    %4218 = vmatpush1.msra.mxu0 0.0
    %4219 = vmatprep.subr.mxu0 0.0
    %4220 = vmatpush1.msra.mxu0 0.0
    %4221 = vmatprep.subr.mxu0 0.0
    %4222 = vmatpush1.msra.mxu0 0.0
    %4223 = vmatprep.subr.mxu0 0.0
    %4224 = vmatpush1.msra.mxu0 0.0
    %4225 = vmatprep.subr.mxu0 0.0
    %4226 = vmatpush1.msra.mxu0 0.0
    %4227 = vmatprep.subr.mxu0 0.0
    %4228 = vmatpush1.msra.mxu0 0.0
    %4229 = vmatprep.subr.mxu0 0.0
    %4230 = vmatpush1.msra.mxu0 0.0
    %4231 = vmatprep.subr.mxu0 0.0
    %4232 = vmatpush1.msra.mxu0 0.0
    %4233 = vmatprep.subr.mxu0 0.0
    %4234 = vmatpush1.msra.mxu0 0.0
    %4235 = vmatprep.subr.mxu0 0.0
    %4236 = vmatpush1.msra.mxu0 0.0
    %4237 = vmatprep.subr.mxu0 0.0
    %4238 = vmatpush1.msra.mxu0 0.0
    %4239 = vmatprep.subr.mxu0 0.0
    %4240 = vmatpush1.msra.mxu0 0.0
    %4241 = vmatprep.subr.mxu0 0.0
    %4242 = vmatpush1.msra.mxu0 0.0
    %4243 = vmatprep.subr.mxu0 0.0
    %4244 = vmatpush1.msra.mxu0 0.0
    %4245 = vmatprep.subr.mxu0 0.0
    %4246 = vmatpush1.msra.mxu0 0.0
    %4247 = vmatprep.subr.mxu0 0.0
    %4248 = vmatpush1.msra.mxu0 0.0
    %4249 = vmatprep.subr.mxu0 0.0
    %4250 = vmatpush1.msra.mxu0 0.0
    %4251 = vmatprep.subr.mxu0 0.0
    %4252 = vmatpush1.msra.mxu0 0.0
    %4253 = vmatprep.subr.mxu0 0.0
    %4254 = vmatpush1.msra.mxu0 0.0
    %4255 = vmatprep.subr.mxu0 0.0
    %4256 = vmatpush1.msra.mxu0 0.0
    %4257 = vmatprep.subr.mxu0 0.0
    %4258 = vmatpush1.msra.mxu0 0.0
    %4259 = vmatprep.subr.mxu0 0.0
    %4260 = vmatpush1.msra.mxu0 0.0
    %4261 = vmatprep.subr.mxu0 0.0
    %4262 = vmatpush1.msra.mxu0 0.0
    %4263 = vmatprep.subr.mxu0 0.0
    %4264 = vmatpush1.msra.mxu0 0.0
    %4265 = vmatprep.subr.mxu0 0.0
    %4266 = vmatpush1.msra.mxu0 0.0
    %4267 = vmatprep.subr.mxu0 0.0
    %4268 = vmatpush1.msra.mxu0 0.0
    %4269 = vmatprep.subr.mxu0 0.0
    %4270 = vmatpush1.msra.mxu0 0.0
    %4271 = vmatprep.mubr.f32.mxu0 0.0
    %4272 = vmatmul.mubr.f32.gmra.mrb[0].mxu0 %v4202
    %v4273 = vpop.f32.mrb[0].mxu0
    %v4274 = vadd.f32 0.0, %v4273
    %v4275 = vpop.f32.mrb[0].mxu0
    %4276 = vmatprep.mubr.f32.mxu0 0.0
    %4277 = vmatmul.mubr.f32.gmra.mrb[0].mxu0 %v4205
    %v4278 = vpop.f32.mrb[0].mxu0
    %v4279 = vadd.f32 0.0, %v4278
    %v4280 = vpop.f32.mrb[0].mxu0
    %4281 = vdwg.mxu0
    %v4282 = vadd.f32 %v3766, %v4274
    %v4283 = vadd.f32 %v3767, %v4279
    %v4284 = vld [vmem:[%s2 + $0x2f0] sm:$0xff]
    %v4285 = vld [vmem:[%s2 + $0x2f8] sm:$0xff]
    %v4286 = vld [vmem:[%s2 + $0x300] sm:$0xff]
    %v4287 = vld [vmem:[%s2 + $0x308] sm:$0xff]
    %v4288 = vld [vmem:[%s2 + $0x313] sm:$0x1]
    %v4289 = vlaneseq
    %v4290 = vshrl.u32 %v4289, 7
    %v4291 = vsub.s32 0, %v4290
    %v4292 = vrot.slane %v4288, %v4291
    %4293 = vmatprep.subr.mxu0 0.0
    %4294 = vmatpush1.msra.mxu0 %v4284
    %4295 = vmatprep.subr.mxu0 0.0
    %4296 = vmatpush1.msra.mxu0 %v4285
    %4297 = vmatprep.subr.mxu0 0.0
    %4298 = vmatpush1.msra.mxu0 %v4286
    %4299 = vmatprep.subr.mxu0 0.0
    %4300 = vmatpush1.msra.mxu0 %v4287
    %4301 = vmatprep.subr.mxu0 0.0
    %4302 = vmatpush1.msra.mxu0 0.0
    %4303 = vmatprep.subr.mxu0 0.0
    %4304 = vmatpush1.msra.mxu0 0.0
    %4305 = vmatprep.subr.mxu0 0.0
    %4306 = vmatpush1.msra.mxu0 0.0
    %4307 = vmatprep.subr.mxu0 0.0
    %4308 = vmatpush1.msra.mxu0 0.0
    %4309 = vmatprep.subr.mxu0 0.0
    %4310 = vmatpush1.msra.mxu0 0.0
    %4311 = vmatprep.subr.mxu0 0.0
    %4312 = vmatpush1.msra.mxu0 0.0
    %4313 = vmatprep.subr.mxu0 0.0
    %4314 = vmatpush1.msra.mxu0 0.0
    %4315 = vmatprep.subr.mxu0 0.0
    %4316 = vmatpush1.msra.mxu0 0.0
    %4317 = vmatprep.subr.mxu0 0.0
    %4318 = vmatpush1.msra.mxu0 0.0
    %4319 = vmatprep.subr.mxu0 0.0
    %4320 = vmatpush1.msra.mxu0 0.0
    %4321 = vmatprep.subr.mxu0 0.0
    %4322 = vmatpush1.msra.mxu0 0.0
    %4323 = vmatprep.subr.mxu0 0.0
    %4324 = vmatpush1.msra.mxu0 0.0
    %4325 = vmatprep.subr.mxu0 0.0
    %4326 = vmatpush1.msra.mxu0 0.0
    %4327 = vmatprep.subr.mxu0 0.0
    %4328 = vmatpush1.msra.mxu0 0.0
    %4329 = vmatprep.subr.mxu0 0.0
    %4330 = vmatpush1.msra.mxu0 0.0
    %4331 = vmatprep.subr.mxu0 0.0
    %4332 = vmatpush1.msra.mxu0 0.0
    %4333 = vmatprep.subr.mxu0 0.0
    %4334 = vmatpush1.msra.mxu0 0.0
    %4335 = vmatprep.subr.mxu0 0.0
    %4336 = vmatpush1.msra.mxu0 0.0
    %4337 = vmatprep.subr.mxu0 0.0
    %4338 = vmatpush1.msra.mxu0 0.0
    %4339 = vmatprep.subr.mxu0 0.0
    %4340 = vmatpush1.msra.mxu0 0.0
    %4341 = vmatprep.subr.mxu0 0.0
    %4342 = vmatpush1.msra.mxu0 0.0
    %4343 = vmatprep.subr.mxu0 0.0
    %4344 = vmatpush1.msra.mxu0 0.0
    %4345 = vmatprep.subr.mxu0 0.0
    %4346 = vmatpush1.msra.mxu0 0.0
    %4347 = vmatprep.subr.mxu0 0.0
    %4348 = vmatpush1.msra.mxu0 0.0
    %4349 = vmatprep.subr.mxu0 0.0
    %4350 = vmatpush1.msra.mxu0 0.0
    %4351 = vmatprep.subr.mxu0 0.0
    %4352 = vmatpush1.msra.mxu0 0.0
    %4353 = vmatprep.subr.mxu0 0.0
    %4354 = vmatpush1.msra.mxu0 0.0
    %4355 = vmatprep.subr.mxu0 0.0
    %4356 = vmatpush1.msra.mxu0 0.0
    %4357 = vmatprep.mubr.f32.mxu0 0.0
    %4358 = vmatmul.mubr.f32.gmra.mrb[0].mxu0 %v2736
    %v4359 = vpop.f32.mrb[0].mxu0
    %v4360 = vadd.f32 %v4292, %v4359
    %v4361 = vpop.f32.mrb[0].mxu0
    %4362 = vmatprep.mubr.f32.mxu0 0.0
    %4363 = vmatmul.mubr.f32.gmra.mrb[0].mxu0 %v2739
    %v4364 = vpop.f32.mrb[0].mxu0
    %v4365 = vadd.f32 %v4292, %v4364
    %v4366 = vpop.f32.mrb[0].mxu0
    %4367 = vdwg.mxu0
    %v4368 = vld [vmem:[%s2 + $0x378] sm:$0xff]
    %v4369 = vld [vmem:[%s2 + $0x380] sm:$0xff]
    %v4370 = vld [vmem:[%s2 + $0x388] sm:$0xff]
    %v4371 = vld [vmem:[%s2 + $0x390] sm:$0xff]
    %4372 = vmatprep.subr.mxu0 0.0
    %4373 = vmatpush1.msra.mxu0 %v4368
    %4374 = vmatprep.subr.mxu0 0.0
    %4375 = vmatpush1.msra.mxu0 %v4369
    %4376 = vmatprep.subr.mxu0 0.0
    %4377 = vmatpush1.msra.mxu0 %v4370
    %4378 = vmatprep.subr.mxu0 0.0
    %4379 = vmatpush1.msra.mxu0 %v4371
    %4380 = vmatprep.subr.mxu0 0.0
    %4381 = vmatpush1.msra.mxu0 0.0
    %4382 = vmatprep.subr.mxu0 0.0
    %4383 = vmatpush1.msra.mxu0 0.0
    %4384 = vmatprep.subr.mxu0 0.0
    %4385 = vmatpush1.msra.mxu0 0.0
    %4386 = vmatprep.subr.mxu0 0.0
    %4387 = vmatpush1.msra.mxu0 0.0
    %4388 = vmatprep.subr.mxu0 0.0
    %4389 = vmatpush1.msra.mxu0 0.0
    %4390 = vmatprep.subr.mxu0 0.0
    %4391 = vmatpush1.msra.mxu0 0.0
    %4392 = vmatprep.subr.mxu0 0.0
    %4393 = vmatpush1.msra.mxu0 0.0
    %4394 = vmatprep.subr.mxu0 0.0
    %4395 = vmatpush1.msra.mxu0 0.0
    %4396 = vmatprep.subr.mxu0 0.0
    %4397 = vmatpush1.msra.mxu0 0.0
    %4398 = vmatprep.subr.mxu0 0.0
    %4399 = vmatpush1.msra.mxu0 0.0
    %4400 = vmatprep.subr.mxu0 0.0
    %4401 = vmatpush1.msra.mxu0 0.0
    %4402 = vmatprep.subr.mxu0 0.0
    %4403 = vmatpush1.msra.mxu0 0.0
    %4404 = vmatprep.subr.mxu0 0.0
    %4405 = vmatpush1.msra.mxu0 0.0
    %4406 = vmatprep.subr.mxu0 0.0
    %4407 = vmatpush1.msra.mxu0 0.0
    %4408 = vmatprep.subr.mxu0 0.0
    %4409 = vmatpush1.msra.mxu0 0.0
    %4410 = vmatprep.subr.mxu0 0.0
    %4411 = vmatpush1.msra.mxu0 0.0
    %4412 = vmatprep.subr.mxu0 0.0
    %4413 = vmatpush1.msra.mxu0 0.0
    %4414 = vmatprep.subr.mxu0 0.0
    %4415 = vmatpush1.msra.mxu0 0.0
    %4416 = vmatprep.subr.mxu0 0.0
    %4417 = vmatpush1.msra.mxu0 0.0
    %4418 = vmatprep.subr.mxu0 0.0
    %4419 = vmatpush1.msra.mxu0 0.0
    %4420 = vmatprep.subr.mxu0 0.0
    %4421 = vmatpush1.msra.mxu0 0.0
    %4422 = vmatprep.subr.mxu0 0.0
    %4423 = vmatpush1.msra.mxu0 0.0
    %4424 = vmatprep.subr.mxu0 0.0
    %4425 = vmatpush1.msra.mxu0 0.0
    %4426 = vmatprep.subr.mxu0 0.0
    %4427 = vmatpush1.msra.mxu0 0.0
    %4428 = vmatprep.subr.mxu0 0.0
    %4429 = vmatpush1.msra.mxu0 0.0
    %4430 = vmatprep.subr.mxu0 0.0
    %4431 = vmatpush1.msra.mxu0 0.0
    %4432 = vmatprep.subr.mxu0 0.0
    %4433 = vmatpush1.msra.mxu0 0.0
    %4434 = vmatprep.subr.mxu0 0.0
    %4435 = vmatpush1.msra.mxu0 0.0
    %4436 = vmatprep.mubr.f32.mxu0 0.0
    %4437 = vmatmul.mubr.f32.gmra.mrb[0].mxu0 %v2736
    %v4438 = vpop.f32.mrb[0].mxu0
    %v4439 = vadd.f32 0.0, %v4438
    %v4440 = vpop.f32.mrb[0].mxu0
    %4441 = vmatprep.mubr.f32.mxu0 0.0
    %4442 = vmatmul.mubr.f32.gmra.mrb[0].mxu0 %v2739
    %v4443 = vpop.f32.mrb[0].mxu0
    %v4444 = vadd.f32 0.0, %v4443
    %v4445 = vpop.f32.mrb[0].mxu0
    %4446 = vdwg.mxu0
    %v4447 = vld [vmem:[%s2 + $0x3f8] sm:$0xff]
    %v4448 = vld [vmem:[%s2 + $0x400] sm:$0xff]
    %v4449 = vld [vmem:[%s2 + $0x408] sm:$0xff]
    %v4450 = vld [vmem:[%s2 + $0x410] sm:$0xff]
    %4451 = vmatprep.subr.mxu0 0.0
    %4452 = vmatpush1.msra.mxu0 %v4447
    %4453 = vmatprep.subr.mxu0 0.0
    %4454 = vmatpush1.msra.mxu0 %v4448
    %4455 = vmatprep.subr.mxu0 0.0
    %4456 = vmatpush1.msra.mxu0 %v4449
    %4457 = vmatprep.subr.mxu0 0.0
    %4458 = vmatpush1.msra.mxu0 %v4450
    %4459 = vmatprep.subr.mxu0 0.0
    %4460 = vmatpush1.msra.mxu0 0.0
    %4461 = vmatprep.subr.mxu0 0.0
    %4462 = vmatpush1.msra.mxu0 0.0
    %4463 = vmatprep.subr.mxu0 0.0
    %4464 = vmatpush1.msra.mxu0 0.0
    %4465 = vmatprep.subr.mxu0 0.0
    %4466 = vmatpush1.msra.mxu0 0.0
    %4467 = vmatprep.subr.mxu0 0.0
    %4468 = vmatpush1.msra.mxu0 0.0
    %4469 = vmatprep.subr.mxu0 0.0
    %4470 = vmatpush1.msra.mxu0 0.0
    %4471 = vmatprep.subr.mxu0 0.0
    %4472 = vmatpush1.msra.mxu0 0.0
    %4473 = vmatprep.subr.mxu0 0.0
    %4474 = vmatpush1.msra.mxu0 0.0
    %4475 = vmatprep.subr.mxu0 0.0
    %4476 = vmatpush1.msra.mxu0 0.0
    %4477 = vmatprep.subr.mxu0 0.0
    %4478 = vmatpush1.msra.mxu0 0.0
    %4479 = vmatprep.subr.mxu0 0.0
    %4480 = vmatpush1.msra.mxu0 0.0
    %4481 = vmatprep.subr.mxu0 0.0
    %4482 = vmatpush1.msra.mxu0 0.0
    %4483 = vmatprep.subr.mxu0 0.0
    %4484 = vmatpush1.msra.mxu0 0.0
    %4485 = vmatprep.subr.mxu0 0.0
    %4486 = vmatpush1.msra.mxu0 0.0
    %4487 = vmatprep.subr.mxu0 0.0
    %4488 = vmatpush1.msra.mxu0 0.0
    %4489 = vmatprep.subr.mxu0 0.0
    %4490 = vmatpush1.msra.mxu0 0.0
    %4491 = vmatprep.subr.mxu0 0.0
    %4492 = vmatpush1.msra.mxu0 0.0
    %4493 = vmatprep.subr.mxu0 0.0
    %4494 = vmatpush1.msra.mxu0 0.0
    %4495 = vmatprep.subr.mxu0 0.0
    %4496 = vmatpush1.msra.mxu0 0.0
    %4497 = vmatprep.subr.mxu0 0.0
    %4498 = vmatpush1.msra.mxu0 0.0
    %4499 = vmatprep.subr.mxu0 0.0
    %4500 = vmatpush1.msra.mxu0 0.0
    %4501 = vmatprep.subr.mxu0 0.0
    %4502 = vmatpush1.msra.mxu0 0.0
    %4503 = vmatprep.subr.mxu0 0.0
    %4504 = vmatpush1.msra.mxu0 0.0
    %4505 = vmatprep.subr.mxu0 0.0
    %4506 = vmatpush1.msra.mxu0 0.0
    %4507 = vmatprep.subr.mxu0 0.0
    %4508 = vmatpush1.msra.mxu0 0.0
    %4509 = vmatprep.subr.mxu0 0.0
    %4510 = vmatpush1.msra.mxu0 0.0
    %4511 = vmatprep.subr.mxu0 0.0
    %4512 = vmatpush1.msra.mxu0 0.0
    %4513 = vmatprep.subr.mxu0 0.0
    %4514 = vmatpush1.msra.mxu0 0.0
    %4515 = vmatprep.mubr.f32.mxu0 0.0
    %4516 = vmatmul.mubr.f32.gmra.mrb[0].mxu0 %v2736
    %v4517 = vpop.f32.mrb[0].mxu0
    %v4518 = vadd.f32 0.0, %v4517
    %v4519 = vpop.f32.mrb[0].mxu0
    %4520 = vmatprep.mubr.f32.mxu0 0.0
    %4521 = vmatmul.mubr.f32.gmra.mrb[0].mxu0 %v2739
    %v4522 = vpop.f32.mrb[0].mxu0
    %v4523 = vadd.f32 0.0, %v4522
    %v4524 = vpop.f32.mrb[0].mxu0
    %4525 = vdwg.mxu0
    %v4527 = vsel %vm23, %v4360, 0
    %v4530 = vsel %vm23, %v4365, 0
    %v4533 = vsel %vm23, %v4439, 0
    %v4536 = vsel %vm23, %v4444, 0
    %4538 = vmatprep.subr.mxu0 0.0
    %4539 = vmatpush1.xpose.msra.mxu0 %v4533
    %4540 = vmatprep.subr.mxu0 0.0
    %4541 = vmatpush1.xpose.msra.mxu0 %v4536
    %4542 = vmatprep.subr.mxu0 0.0
    %4543 = vmatpush1.xpose.msra.mxu0 0.0
    %4544 = vmatprep.subr.mxu0 0.0
    %4545 = vmatpush1.xpose.msra.mxu0 0.0
    %4546 = vmatprep.subr.mxu0 0.0
    %4547 = vmatpush1.xpose.msra.mxu0 0.0
    %4548 = vmatprep.subr.mxu0 0.0
    %4549 = vmatpush1.xpose.msra.mxu0 0.0
    %4550 = vmatprep.subr.mxu0 0.0
    %4551 = vmatpush1.xpose.msra.mxu0 0.0
    %4552 = vmatprep.subr.mxu0 0.0
    %4553 = vmatpush1.xpose.msra.mxu0 0.0
    %4554 = vmatprep.subr.mxu0 0.0
    %4555 = vmatpush1.xpose.msra.mxu0 0.0
    %4556 = vmatprep.subr.mxu0 0.0
    %4557 = vmatpush1.xpose.msra.mxu0 0.0
    %4558 = vmatprep.subr.mxu0 0.0
    %4559 = vmatpush1.xpose.msra.mxu0 0.0
    %4560 = vmatprep.subr.mxu0 0.0
    %4561 = vmatpush1.xpose.msra.mxu0 0.0
    %4562 = vmatprep.subr.mxu0 0.0
    %4563 = vmatpush1.xpose.msra.mxu0 0.0
    %4564 = vmatprep.subr.mxu0 0.0
    %4565 = vmatpush1.xpose.msra.mxu0 0.0
    %4566 = vmatprep.subr.mxu0 0.0
    %4567 = vmatpush1.xpose.msra.mxu0 0.0
    %4568 = vmatprep.subr.mxu0 0.0
    %4569 = vmatpush1.xpose.msra.mxu0 0.0
    %4570 = vmatprep.subr.mxu0 0.0
    %4571 = vmatpush1.xpose.msra.mxu0 0.0
    %4572 = vmatprep.subr.mxu0 0.0
    %4573 = vmatpush1.xpose.msra.mxu0 0.0
    %4574 = vmatprep.subr.mxu0 0.0
    %4575 = vmatpush1.xpose.msra.mxu0 0.0
    %4576 = vmatprep.subr.mxu0 0.0
    %4577 = vmatpush1.xpose.msra.mxu0 0.0
    %4578 = vmatprep.subr.mxu0 0.0
    %4579 = vmatpush1.xpose.msra.mxu0 0.0
    %4580 = vmatprep.subr.mxu0 0.0
    %4581 = vmatpush1.xpose.msra.mxu0 0.0
    %4582 = vmatprep.subr.mxu0 0.0
    %4583 = vmatpush1.xpose.msra.mxu0 0.0
    %4584 = vmatprep.subr.mxu0 0.0
    %4585 = vmatpush1.xpose.msra.mxu0 0.0
    %4586 = vmatprep.subr.mxu0 0.0
    %4587 = vmatpush1.xpose.msra.mxu0 0.0
    %4588 = vmatprep.subr.mxu0 0.0
    %4589 = vmatpush1.xpose.msra.mxu0 0.0
    %4590 = vmatprep.subr.mxu0 0.0
    %4591 = vmatpush1.xpose.msra.mxu0 0.0
    %4592 = vmatprep.subr.mxu0 0.0
    %4593 = vmatpush1.xpose.msra.mxu0 0.0
    %4594 = vmatprep.subr.mxu0 0.0
    %4595 = vmatpush1.xpose.msra.mxu0 0.0
    %4596 = vmatprep.subr.mxu0 0.0
    %4597 = vmatpush1.xpose.msra.mxu0 0.0
    %4598 = vmatprep.subr.mxu0 0.0
    %4599 = vmatpush1.xpose.msra.mxu0 0.0
    %4600 = vmatprep.subr.mxu0 0.0
    %4601 = vmatpush1.xpose.msra.mxu0 0.0
    %4602 = vmatprep.mubr.f32.mxu0 0.0
    %4603 = vmatmul.mubr.f32.gmra.mrb[0].mxu0 %v4527
    %v4604 = vpop.f32.mrb[0].mxu0
    %v4605 = vadd.f32 0.0, %v4604
    %v4606 = vpop.f32.mrb[0].mxu0
    %4607 = vmatprep.mubr.f32.mxu0 0.0
    %4608 = vmatmul.mubr.f32.gmra.mrb[0].mxu0 %v4530
    %v4609 = vpop.f32.mrb[0].mxu0
    %v4610 = vadd.f32 0.0, %v4609
    %v4611 = vpop.f32.mrb[0].mxu0
    %4612 = vdwg.mxu0
    %v4613 = vsel %vm119, %v4605, -inf
    %4614 = vmax.xlane.f32.xlu0 %v4613
    %v4615 = vpop.xlane.xlu0 %4614
    %v4616 = vsel %vm119, %v4610, -inf
    %4617 = vmax.xlane.f32.xlu0 %v4616
    %v4618 = vpop.xlane.xlu0 %4617
    %v4619 = vsub.f32 %v4605, %v4615
    %v4620 = vsub.f32 %v4610, %v4618
    %v4621 = vmul.f32 %v4619, 1.442695
    %v4622 = vpow.pop %v4621
    %v4623 = vmul.f32 %v4620, 1.442695
    %v4624 = vpow.pop %v4623
    %v4625 = vsel %vm119, %v4622, 0.0
    %4626 = vadd.xlane.f32.xlu0 %v4625
    %v4627 = vpop.xlane.xlu0 %4626
    %v4628 = vsel %vm119, %v4624, 0.0
    %4629 = vadd.xlane.f32.xlu0 %v4628
    %v4630 = vpop.xlane.xlu0 %4629
    %v4631 = vrcp.pop %v4627
    %v4632 = vrcp.pop %v4630
    %v4633 = vmul.f32 %v4622, %v4631
    %v4634 = vmul.f32 %v4624, %v4632
    %v4636 = vsel %vm119, %v4633, 0
    %v4639 = vsel %vm119, %v4634, 0
    %4641 = vmatprep.subr.mxu0 0.0
    %4642 = vmatpush1.msra.mxu0 %v4518
    %4643 = vmatprep.subr.mxu0 0.0
    %4644 = vmatpush1.msra.mxu0 %v4523
    %4645 = vmatprep.subr.mxu0 0.0
    %4646 = vmatpush1.msra.mxu0 0.0
    %4647 = vmatprep.subr.mxu0 0.0
    %4648 = vmatpush1.msra.mxu0 0.0
    %4649 = vmatprep.subr.mxu0 0.0
    %4650 = vmatpush1.msra.mxu0 0.0
    %4651 = vmatprep.subr.mxu0 0.0
    %4652 = vmatpush1.msra.mxu0 0.0
    %4653 = vmatprep.subr.mxu0 0.0
    %4654 = vmatpush1.msra.mxu0 0.0
    %4655 = vmatprep.subr.mxu0 0.0
    %4656 = vmatpush1.msra.mxu0 0.0
    %4657 = vmatprep.subr.mxu0 0.0
    %4658 = vmatpush1.msra.mxu0 0.0
    %4659 = vmatprep.subr.mxu0 0.0
    %4660 = vmatpush1.msra.mxu0 0.0
    %4661 = vmatprep.subr.mxu0 0.0
    %4662 = vmatpush1.msra.mxu0 0.0
    %4663 = vmatprep.subr.mxu0 0.0
    %4664 = vmatpush1.msra.mxu0 0.0
    %4665 = vmatprep.subr.mxu0 0.0
    %4666 = vmatpush1.msra.mxu0 0.0
    %4667 = vmatprep.subr.mxu0 0.0
    %4668 = vmatpush1.msra.mxu0 0.0
    %4669 = vmatprep.subr.mxu0 0.0
    %4670 = vmatpush1.msra.mxu0 0.0
    %4671 = vmatprep.subr.mxu0 0.0
    %4672 = vmatpush1.msra.mxu0 0.0
    %4673 = vmatprep.subr.mxu0 0.0
    %4674 = vmatpush1.msra.mxu0 0.0
    %4675 = vmatprep.subr.mxu0 0.0
    %4676 = vmatpush1.msra.mxu0 0.0
    %4677 = vmatprep.subr.mxu0 0.0
    %4678 = vmatpush1.msra.mxu0 0.0
    %4679 = vmatprep.subr.mxu0 0.0
    %4680 = vmatpush1.msra.mxu0 0.0
    %4681 = vmatprep.subr.mxu0 0.0
    %4682 = vmatpush1.msra.mxu0 0.0
    %4683 = vmatprep.subr.mxu0 0.0
    %4684 = vmatpush1.msra.mxu0 0.0
    %4685 = vmatprep.subr.mxu0 0.0
    %4686 = vmatpush1.msra.mxu0 0.0
    %4687 = vmatprep.subr.mxu0 0.0
    %4688 = vmatpush1.msra.mxu0 0.0
    %4689 = vmatprep.subr.mxu0 0.0
    %4690 = vmatpush1.msra.mxu0 0.0
    %4691 = vmatprep.subr.mxu0 0.0
    %4692 = vmatpush1.msra.mxu0 0.0
    %4693 = vmatprep.subr.mxu0 0.0
    %4694 = vmatpush1.msra.mxu0 0.0
    %4695 = vmatprep.subr.mxu0 0.0
    %4696 = vmatpush1.msra.mxu0 0.0
    %4697 = vmatprep.subr.mxu0 0.0
    %4698 = vmatpush1.msra.mxu0 0.0
    %4699 = vmatprep.subr.mxu0 0.0
    %4700 = vmatpush1.msra.mxu0 0.0
    %4701 = vmatprep.subr.mxu0 0.0
    %4702 = vmatpush1.msra.mxu0 0.0
    %4703 = vmatprep.subr.mxu0 0.0
    %4704 = vmatpush1.msra.mxu0 0.0
    %4705 = vmatprep.mubr.f32.mxu0 0.0
    %4706 = vmatmul.mubr.f32.gmra.mrb[0].mxu0 %v4636
    %v4707 = vpop.f32.mrb[0].mxu0
    %v4708 = vadd.f32 0.0, %v4707
    %v4709 = vpop.f32.mrb[0].mxu0
    %4710 = vmatprep.mubr.f32.mxu0 0.0
    %4711 = vmatmul.mubr.f32.gmra.mrb[0].mxu0 %v4639
    %v4712 = vpop.f32.mrb[0].mxu0
    %v4713 = vadd.f32 0.0, %v4712
    %v4714 = vpop.f32.mrb[0].mxu0
    %4715 = vdwg.mxu0
    %v4716 = vld [vmem:[%s2 + $0x430] sm:$0xff]
    %v4718 = vsel %vm23, %v4708, 0
    %v4721 = vsel %vm23, %v4713, 0
    %4723 = vmatprep.subr.mxu0 0.0
    %4724 = vmatpush1.msra.mxu0 %v4716
    %4725 = vmatprep.subr.mxu0 0.0
    %4726 = vmatpush1.msra.mxu0 0.0
    %4727 = vmatprep.subr.mxu0 0.0
    %4728 = vmatpush1.msra.mxu0 0.0
    %4729 = vmatprep.subr.mxu0 0.0
    %4730 = vmatpush1.msra.mxu0 0.0
    %4731 = vmatprep.subr.mxu0 0.0
    %4732 = vmatpush1.msra.mxu0 0.0
    %4733 = vmatprep.subr.mxu0 0.0
    %4734 = vmatpush1.msra.mxu0 0.0
    %4735 = vmatprep.subr.mxu0 0.0
    %4736 = vmatpush1.msra.mxu0 0.0
    %4737 = vmatprep.subr.mxu0 0.0
    %4738 = vmatpush1.msra.mxu0 0.0
    %4739 = vmatprep.subr.mxu0 0.0
    %4740 = vmatpush1.msra.mxu0 0.0
    %4741 = vmatprep.subr.mxu0 0.0
    %4742 = vmatpush1.msra.mxu0 0.0
    %4743 = vmatprep.subr.mxu0 0.0
    %4744 = vmatpush1.msra.mxu0 0.0
    %4745 = vmatprep.subr.mxu0 0.0
    %4746 = vmatpush1.msra.mxu0 0.0
    %4747 = vmatprep.subr.mxu0 0.0
    %4748 = vmatpush1.msra.mxu0 0.0
    %4749 = vmatprep.subr.mxu0 0.0
    %4750 = vmatpush1.msra.mxu0 0.0
    %4751 = vmatprep.subr.mxu0 0.0
    %4752 = vmatpush1.msra.mxu0 0.0
    %4753 = vmatprep.subr.mxu0 0.0
    %4754 = vmatpush1.msra.mxu0 0.0
    %4755 = vmatprep.subr.mxu0 0.0
    %4756 = vmatpush1.msra.mxu0 0.0
    %4757 = vmatprep.subr.mxu0 0.0
    %4758 = vmatpush1.msra.mxu0 0.0
    %4759 = vmatprep.subr.mxu0 0.0
    %4760 = vmatpush1.msra.mxu0 0.0
    %4761 = vmatprep.subr.mxu0 0.0
    %4762 = vmatpush1.msra.mxu0 0.0
    %4763 = vmatprep.subr.mxu0 0.0
    %4764 = vmatpush1.msra.mxu0 0.0
    %4765 = vmatprep.subr.mxu0 0.0
    %4766 = vmatpush1.msra.mxu0 0.0
    %4767 = vmatprep.subr.mxu0 0.0
    %4768 = vmatpush1.msra.mxu0 0.0
    %4769 = vmatprep.subr.mxu0 0.0
    %4770 = vmatpush1.msra.mxu0 0.0
    %4771 = vmatprep.subr.mxu0 0.0
    %4772 = vmatpush1.msra.mxu0 0.0
    %4773 = vmatprep.subr.mxu0 0.0
    %4774 = vmatpush1.msra.mxu0 0.0
    %4775 = vmatprep.subr.mxu0 0.0
    %4776 = vmatpush1.msra.mxu0 0.0
    %4777 = vmatprep.subr.mxu0 0.0
    %4778 = vmatpush1.msra.mxu0 0.0
    %4779 = vmatprep.subr.mxu0 0.0
    %4780 = vmatpush1.msra.mxu0 0.0
    %4781 = vmatprep.subr.mxu0 0.0
    %4782 = vmatpush1.msra.mxu0 0.0
    %4783 = vmatprep.subr.mxu0 0.0
    %4784 = vmatpush1.msra.mxu0 0.0
    %4785 = vmatprep.subr.mxu0 0.0
    %4786 = vmatpush1.msra.mxu0 0.0
    %4787 = vmatprep.mubr.f32.mxu0 0.0
    %4788 = vmatmul.mubr.f32.gmra.mrb[0].mxu0 %v4718
    %v4789 = vpop.f32.mrb[0].mxu0
    %v4790 = vadd.f32 0.0, %v4789
    %v4791 = vpop.f32.mrb[0].mxu0
    %4792 = vmatprep.mubr.f32.mxu0 0.0
    %4793 = vmatmul.mubr.f32.gmra.mrb[0].mxu0 %v4721
    %v4794 = vpop.f32.mrb[0].mxu0
    %v4795 = vadd.f32 0.0, %v4794
    %v4796 = vpop.f32.mrb[0].mxu0
    %4797 = vdwg.mxu0
    %v4798 = vadd.f32 %v4282, %v4790
    %v4799 = vadd.f32 %v4283, %v4795
    %v4800 = vadd.f32 %v2723, %v4798
    %v4801 = vadd.f32 %v2724, %v4799
    %v4802 = vld [vmem:[%s2 + $0x4b0] sm:$0x1]
    %v4803 = vld [vmem:[%s2 + $0x4b8] sm:$0x1]
    %v4804 = vsel %vm289, %v4800, 0.0
    %4805 = vadd.xlane.f32.xlu0 %v4804
    %v4806 = vpop.xlane.xlu0 %4805
    %v4807 = vsel %vm289, %v4801, 0.0
    %4808 = vadd.xlane.f32.xlu0 %v4807
    %v4809 = vpop.xlane.xlu0 %4808
    %v4810 = vmul.f32 %v4806, %v2463
    %v4811 = vmul.f32 %v4809, %v2463
    %v4812 = vsub.f32 %v4800, %v4810
    %v4813 = vsub.f32 %v4801, %v4811
    %v4814 = vmul.f32 %v4812, %v4812
    %v4815 = vmul.f32 %v4813, %v4813
    %v4816 = vsel %vm289, %v4814, 0.0
    %4817 = vadd.xlane.f32.xlu0 %v4816
    %v4818 = vpop.xlane.xlu0 %4817
    %v4819 = vsel %vm289, %v4815, 0.0
    %4820 = vadd.xlane.f32.xlu0 %v4819
    %v4821 = vpop.xlane.xlu0 %4820
    %v4822 = vmul.f32 %v4818, %v2463
    %v4823 = vmul.f32 %v4821, %v2463
    %v4824 = vadd.f32 %v4822, 1e-05
    %v4825 = vadd.f32 %v4823, 1e-05
    %v4826 = vrsqrt.pop %v4824
    %v4827 = vrsqrt.pop %v4825
    %v4828 = vmul.f32 %v4812, %v4826
    %v4829 = vmul.f32 %v4813, %v4827
    %v4830 = vlaneseq
    %v4831 = vshrl.u32 %v4830, 7
    %v4832 = vsub.s32 0, %v4831
    %v4833 = vrot.slane %v4802, %v4832
    %v4834 = vmul.f32 %v4828, %v4833
    %v4835 = vmul.f32 %v4829, %v4833
    %v4836 = vlaneseq
    %v4837 = vshrl.u32 %v4836, 7
    %v4838 = vsub.s32 0, %v4837
    %v4839 = vrot.slane %v4803, %v4838
    %v4840 = vadd.f32 %v4834, %v4839
    %v4841 = vadd.f32 %v4835, %v4839
    %v4842 = vld [vmem:[%s2 + $0x440] sm:$0xff]
    %v4843 = vld [vmem:[%s2 + $0x448] sm:$0xff]
    %v4844 = vld [vmem:[%s2 + $0x450] sm:$0xff]
    %v4845 = vld [vmem:[%s2 + $0x458] sm:$0xff]
    %v4846 = vld [vmem:[%s2 + $0x460] sm:$0x1]
    %v4847 = vlaneseq
    %v4848 = vshrl.u32 %v4847, 7
    %v4849 = vsub.s32 0, %v4848
    %v4850 = vrot.slane %v4846, %v4849
    %v4852 = vsel %vm289, %v4840, 0
    %v4855 = vsel %vm289, %v4841, 0
    %4857 = vmatprep.subr.mxu0 0.0
    %4858 = vmatpush1.msra.mxu0 %v4842
    %4859 = vmatprep.subr.mxu0 0.0
    %4860 = vmatpush1.msra.mxu0 %v4843
    %4861 = vmatprep.subr.mxu0 0.0
    %4862 = vmatpush1.msra.mxu0 %v4844
    %4863 = vmatprep.subr.mxu0 0.0
    %4864 = vmatpush1.msra.mxu0 %v4845
    %4865 = vmatprep.subr.mxu0 0.0
    %4866 = vmatpush1.msra.mxu0 0.0
    %4867 = vmatprep.subr.mxu0 0.0
    %4868 = vmatpush1.msra.mxu0 0.0
    %4869 = vmatprep.subr.mxu0 0.0
    %4870 = vmatpush1.msra.mxu0 0.0
    %4871 = vmatprep.subr.mxu0 0.0
    %4872 = vmatpush1.msra.mxu0 0.0
    %4873 = vmatprep.subr.mxu0 0.0
    %4874 = vmatpush1.msra.mxu0 0.0
    %4875 = vmatprep.subr.mxu0 0.0
    %4876 = vmatpush1.msra.mxu0 0.0
    %4877 = vmatprep.subr.mxu0 0.0
    %4878 = vmatpush1.msra.mxu0 0.0
    %4879 = vmatprep.subr.mxu0 0.0
    %4880 = vmatpush1.msra.mxu0 0.0
    %4881 = vmatprep.subr.mxu0 0.0
    %4882 = vmatpush1.msra.mxu0 0.0
    %4883 = vmatprep.subr.mxu0 0.0
    %4884 = vmatpush1.msra.mxu0 0.0
    %4885 = vmatprep.subr.mxu0 0.0
    %4886 = vmatpush1.msra.mxu0 0.0
    %4887 = vmatprep.subr.mxu0 0.0
    %4888 = vmatpush1.msra.mxu0 0.0
    %4889 = vmatprep.subr.mxu0 0.0
    %4890 = vmatpush1.msra.mxu0 0.0
    %4891 = vmatprep.subr.mxu0 0.0
    %4892 = vmatpush1.msra.mxu0 0.0
    %4893 = vmatprep.subr.mxu0 0.0
    %4894 = vmatpush1.msra.mxu0 0.0
    %4895 = vmatprep.subr.mxu0 0.0
    %4896 = vmatpush1.msra.mxu0 0.0
    %4897 = vmatprep.subr.mxu0 0.0
    %4898 = vmatpush1.msra.mxu0 0.0
    %4899 = vmatprep.subr.mxu0 0.0
    %4900 = vmatpush1.msra.mxu0 0.0
    %4901 = vmatprep.subr.mxu0 0.0
    %4902 = vmatpush1.msra.mxu0 0.0
    %4903 = vmatprep.subr.mxu0 0.0
    %4904 = vmatpush1.msra.mxu0 0.0
    %4905 = vmatprep.subr.mxu0 0.0
    %4906 = vmatpush1.msra.mxu0 0.0
    %4907 = vmatprep.subr.mxu0 0.0
    %4908 = vmatpush1.msra.mxu0 0.0
    %4909 = vmatprep.subr.mxu0 0.0
    %4910 = vmatpush1.msra.mxu0 0.0
    %4911 = vmatprep.subr.mxu0 0.0
    %4912 = vmatpush1.msra.mxu0 0.0
    %4913 = vmatprep.subr.mxu0 0.0
    %4914 = vmatpush1.msra.mxu0 0.0
    %4915 = vmatprep.subr.mxu0 0.0
    %4916 = vmatpush1.msra.mxu0 0.0
    %4917 = vmatprep.subr.mxu0 0.0
    %4918 = vmatpush1.msra.mxu0 0.0
    %4919 = vmatprep.subr.mxu0 0.0
    %4920 = vmatpush1.msra.mxu0 0.0
    %4921 = vmatprep.mubr.f32.mxu0 0.0
    %4922 = vmatmul.mubr.f32.gmra.mrb[0].mxu0 %v4852
    %v4923 = vpop.f32.mrb[0].mxu0
    %v4924 = vadd.f32 %v4850, %v4923
    %v4925 = vpop.f32.mrb[0].mxu0
    %4926 = vmatprep.mubr.f32.mxu0 0.0
    %4927 = vmatmul.mubr.f32.gmra.mrb[0].mxu0 %v4855
    %v4928 = vpop.f32.mrb[0].mxu0
    %v4929 = vadd.f32 %v4850, %v4928
    %v4930 = vpop.f32.mrb[0].mxu0
    %4931 = vdwg.mxu0
    %v4932 = vmax.f32 %v4924, 0.0
    %v4933 = vmax.f32 %v4929, 0.0
    %v4934 = vld [vmem:[%s2 + $0x468] sm:$0xff]
    %v4935 = vld [vmem:[%s2 + $0x470] sm:$0xff]
    %v4936 = vld [vmem:[%s2 + $0x478] sm:$0xff]
    %v4937 = vld [vmem:[%s2 + $0x480] sm:$0xff]
    %v4938 = vld [vmem:[%s2 + $0x488] sm:$0xff]
    %v4939 = vld [vmem:[%s2 + $0x490] sm:$0xff]
    %v4940 = vld [vmem:[%s2 + $0x498] sm:$0xff]
    %v4941 = vld [vmem:[%s2 + $0x4a0] sm:$0xff]
    %v4942 = vld [vmem:[%s2 + $0x4a8] sm:$0x1]
    %v4943 = vlaneseq
    %v4944 = vshrl.u32 %v4943, 7
    %v4945 = vsub.s32 0, %v4944
    %v4946 = vrot.slane %v4942, %v4945
    %v4948 = vsel %vm2601, %v4932, 0
    %v4951 = vsel %vm2601, %v4933, 0
    %4953 = vmatprep.subr.mxu0 0.0
    %4954 = vmatpush1.msra.mxu0 %v4934
    %4955 = vmatprep.subr.mxu0 0.0
    %4956 = vmatpush1.msra.mxu0 %v4935
    %4957 = vmatprep.subr.mxu0 0.0
    %4958 = vmatpush1.msra.mxu0 %v4936
    %4959 = vmatprep.subr.mxu0 0.0
    %4960 = vmatpush1.msra.mxu0 %v4937
    %4961 = vmatprep.subr.mxu0 0.0
    %4962 = vmatpush1.msra.mxu0 %v4938
    %4963 = vmatprep.subr.mxu0 0.0
    %4964 = vmatpush1.msra.mxu0 %v4939
    %4965 = vmatprep.subr.mxu0 0.0
    %4966 = vmatpush1.msra.mxu0 %v4940
    %4967 = vmatprep.subr.mxu0 0.0
    %4968 = vmatpush1.msra.mxu0 %v4941
    %4969 = vmatprep.subr.mxu0 0.0
    %4970 = vmatpush1.msra.mxu0 0.0
    %4971 = vmatprep.subr.mxu0 0.0
    %4972 = vmatpush1.msra.mxu0 0.0
    %4973 = vmatprep.subr.mxu0 0.0
    %4974 = vmatpush1.msra.mxu0 0.0
    %4975 = vmatprep.subr.mxu0 0.0
    %4976 = vmatpush1.msra.mxu0 0.0
    %4977 = vmatprep.subr.mxu0 0.0
    %4978 = vmatpush1.msra.mxu0 0.0
    %4979 = vmatprep.subr.mxu0 0.0
    %4980 = vmatpush1.msra.mxu0 0.0
    %4981 = vmatprep.subr.mxu0 0.0
    %4982 = vmatpush1.msra.mxu0 0.0
    %4983 = vmatprep.subr.mxu0 0.0
    %4984 = vmatpush1.msra.mxu0 0.0
    %4985 = vmatprep.subr.mxu0 0.0
    %4986 = vmatpush1.msra.mxu0 0.0
    %4987 = vmatprep.subr.mxu0 0.0
    %4988 = vmatpush1.msra.mxu0 0.0
    %4989 = vmatprep.subr.mxu0 0.0
    %4990 = vmatpush1.msra.mxu0 0.0
    %4991 = vmatprep.subr.mxu0 0.0
    %4992 = vmatpush1.msra.mxu0 0.0
    %4993 = vmatprep.subr.mxu0 0.0
    %4994 = vmatpush1.msra.mxu0 0.0
    %4995 = vmatprep.subr.mxu0 0.0
    %4996 = vmatpush1.msra.mxu0 0.0
    %4997 = vmatprep.subr.mxu0 0.0
    %4998 = vmatpush1.msra.mxu0 0.0
    %4999 = vmatprep.subr.mxu0 0.0
    %5000 = vmatpush1.msra.mxu0 0.0
    %5001 = vmatprep.subr.mxu0 0.0
    %5002 = vmatpush1.msra.mxu0 0.0
    %5003 = vmatprep.subr.mxu0 0.0
    %5004 = vmatpush1.msra.mxu0 0.0
    %5005 = vmatprep.subr.mxu0 0.0
    %5006 = vmatpush1.msra.mxu0 0.0
    %5007 = vmatprep.subr.mxu0 0.0
    %5008 = vmatpush1.msra.mxu0 0.0
    %5009 = vmatprep.subr.mxu0 0.0
    %5010 = vmatpush1.msra.mxu0 0.0
    %5011 = vmatprep.subr.mxu0 0.0
    %5012 = vmatpush1.msra.mxu0 0.0
    %5013 = vmatprep.subr.mxu0 0.0
    %5014 = vmatpush1.msra.mxu0 0.0
    %5015 = vmatprep.subr.mxu0 0.0
    %5016 = vmatpush1.msra.mxu0 0.0
    %5017 = vmatprep.mubr.f32.mxu0 0.0
    %5018 = vmatmul.mubr.f32.gmra.mrb[0].mxu0 %v4948
    %v5019 = vpop.f32.mrb[0].mxu0
    %v5020 = vadd.f32 %v4946, %v5019
    %v5021 = vpop.f32.mrb[0].mxu0
    %5022 = vmatprep.mubr.f32.mxu0 0.0
    %5023 = vmatmul.mubr.f32.gmra.mrb[0].mxu0 %v4951
    %v5024 = vpop.f32.mrb[0].mxu0
    %v5025 = vadd.f32 %v4946, %v5024
    %v5026 = vpop.f32.mrb[0].mxu0
    %5027 = vdwg.mxu0
    %v5028 = vadd.f32 %v4840, %v5020
    %v5029 = vadd.f32 %v4841, %v5025
    %v5030 = vld [vmem:[%s2 + $0x4c0] sm:$0x1]
    %v5031 = vld [vmem:[%s2 + $0x4c8] sm:$0x1]
    %v5032 = vsel %vm289, %v5028, 0.0
    %5033 = vadd.xlane.f32.xlu0 %v5032
    %v5034 = vpop.xlane.xlu0 %5033
    %v5035 = vsel %vm289, %v5029, 0.0
    %5036 = vadd.xlane.f32.xlu0 %v5035
    %v5037 = vpop.xlane.xlu0 %5036
    %v5038 = vmul.f32 %v5034, %v2463
    %v5039 = vmul.f32 %v5037, %v2463
    %v5040 = vsub.f32 %v5028, %v5038
    %v5041 = vsub.f32 %v5029, %v5039
    %v5042 = vmul.f32 %v5040, %v5040
    %v5043 = vmul.f32 %v5041, %v5041
    %v5044 = vsel %vm289, %v5042, 0.0
    %5045 = vadd.xlane.f32.xlu0 %v5044
    %v5046 = vpop.xlane.xlu0 %5045
    %v5047 = vsel %vm289, %v5043, 0.0
    %5048 = vadd.xlane.f32.xlu0 %v5047
    %v5049 = vpop.xlane.xlu0 %5048
    %v5050 = vmul.f32 %v5046, %v2463
    %v5051 = vmul.f32 %v5049, %v2463
    %v5052 = vadd.f32 %v5050, 1e-05
    %v5053 = vadd.f32 %v5051, 1e-05
    %v5054 = vrsqrt.pop %v5052
    %v5055 = vrsqrt.pop %v5053
    %v5056 = vmul.f32 %v5040, %v5054
    %v5057 = vmul.f32 %v5041, %v5055
    %v5058 = vlaneseq
    %v5059 = vshrl.u32 %v5058, 7
    %v5060 = vsub.s32 0, %v5059
    %v5061 = vrot.slane %v5030, %v5060
    %v5062 = vmul.f32 %v5056, %v5061
    %v5063 = vmul.f32 %v5057, %v5061
    %v5064 = vlaneseq
    %v5065 = vshrl.u32 %v5064, 7
    %v5066 = vsub.s32 0, %v5065
    %v5067 = vrot.slane %v5031, %v5066
    %v5068 = vadd.f32 %v5062, %v5067
    %v5069 = vadd.f32 %v5063, %v5067
    %v5070 = vld [vmem:[%s2 + $0x4d0] sm:$0x1]
    %v5071 = vld [vmem:[%s2 + $0x4d8] sm:$0x1]
    %v5072 = vsel %vm289, %v5068, 0.0
    %5073 = vadd.xlane.f32.xlu0 %v5072
    %v5074 = vpop.xlane.xlu0 %5073
    %v5075 = vsel %vm289, %v5069, 0.0
    %5076 = vadd.xlane.f32.xlu0 %v5075
    %v5077 = vpop.xlane.xlu0 %5076
    %v5078 = vmul.f32 %v5074, %v2463
    %v5079 = vmul.f32 %v5077, %v2463
    %v5080 = vsub.f32 %v5068, %v5078
    %v5081 = vsub.f32 %v5069, %v5079
    %v5082 = vmul.f32 %v5080, %v5080
    %v5083 = vmul.f32 %v5081, %v5081
    %v5084 = vsel %vm289, %v5082, 0.0
    %5085 = vadd.xlane.f32.xlu0 %v5084
    %v5086 = vpop.xlane.xlu0 %5085
    %v5087 = vsel %vm289, %v5083, 0.0
    %5088 = vadd.xlane.f32.xlu0 %v5087
    %v5089 = vpop.xlane.xlu0 %5088
    %v5090 = vmul.f32 %v5086, %v2463
    %v5091 = vmul.f32 %v5089, %v2463
    %v5092 = vadd.f32 %v5090, 1e-05
    %v5093 = vadd.f32 %v5091, 1e-05
    %v5094 = vrsqrt.pop %v5092
    %v5095 = vrsqrt.pop %v5093
    %v5096 = vmul.f32 %v5080, %v5094
    %v5097 = vmul.f32 %v5081, %v5095
    %v5098 = vlaneseq
    %v5099 = vshrl.u32 %v5098, 7
    %v5100 = vsub.s32 0, %v5099
    %v5101 = vrot.slane %v5070, %v5100
    %v5102 = vmul.f32 %v5096, %v5101
    %v5103 = vmul.f32 %v5097, %v5101
    %v5104 = vlaneseq
    %v5105 = vshrl.u32 %v5104, 7
    %v5106 = vsub.s32 0, %v5105
    %v5107 = vrot.slane %v5071, %v5106
    %v5108 = vadd.f32 %v5102, %v5107
    %v5109 = vadd.f32 %v5103, %v5107
    %v5110 = vld [vmem:[%s0 + $0x1] sm:$0x1]
    %v5111 = vlaneseq
    %v5112 = vshrl.u32 %v5111, 7
    %v5113 = vsub.s32 0, %v5112
    %v5114 = vrot.slane %v5110, %v5113
    %vm5115 = vcmp.eq.s32.totalorder %v106, %v5114
    %vm5116 = vcmp.eq.s32.totalorder %v107, %v5114
    %v5117 = vsel %vm5115, 1, 0
    %v5118 = vsel %vm5116, 1, 0
    %v5119 = vcvt.s32.f32 %v5117
    %v5120 = vcvt.s32.f32 %v5118
    %5121 = vxpose.xlu0.b32.start [1/16] %v5119, 128
    %5122 = vxpose.xlu0.b32.cont [2/16] %v5120, 128
    %5123 = vxpose.xlu0.b32.cont [3/16] 0.0, 128
    %5124 = vxpose.xlu0.b32.cont [4/16] 0.0, 128
    %5125 = vxpose.xlu0.b32.cont [5/16] 0.0, 128
    %5126 = vxpose.xlu0.b32.cont [6/16] 0.0, 128
    %5127 = vxpose.xlu0.b32.cont [7/16] 0.0, 128
    %5128 = vxpose.xlu0.b32.cont [8/16] 0.0, 128
    %5129 = vxpose.xlu0.b32.cont [9/16] 0.0, 128
    %5130 = vxpose.xlu0.b32.cont [10/16] 0.0, 128
    %5131 = vxpose.xlu0.b32.cont [11/16] 0.0, 128
    %5132 = vxpose.xlu0.b32.cont [12/16] 0.0, 128
    %5133 = vxpose.xlu0.b32.cont [13/16] 0.0, 128
    %5134 = vxpose.xlu0.b32.cont [14/16] 0.0, 128
    %5135 = vxpose.xlu0.b32.cont [15/16] 0.0, 128
    %5136 = vxpose.xlu0.b32.end [16/16] 0.0, 128
    %v5137 = vpop.trf.xlu0
    %v5138 = vpop.trf.xlu0
    %v5139 = vpop.trf.xlu0
    %v5140 = vpop.trf.xlu0
    %v5141 = vpop.trf.xlu0
    %v5142 = vpop.trf.xlu0
    %v5143 = vpop.trf.xlu0
    %v5144 = vpop.trf.xlu0
    %v5145 = vpop.trf.xlu0
    %v5146 = vpop.trf.xlu0
    %v5147 = vpop.trf.xlu0
    %v5148 = vpop.trf.xlu0
    %v5149 = vpop.trf.xlu0
    %v5150 = vpop.trf.xlu0
    %v5151 = vpop.trf.xlu0
    %v5152 = vpop.trf.xlu0
    %v5154 = vsel %vm119, %v5137, 0
    %5156 = vmatprep.subr.mxu0 0.0
    %5157 = vmatpush1.msra.mxu0 %v5108
    %5158 = vmatprep.subr.mxu0 0.0
    %5159 = vmatpush1.msra.mxu0 %v5109
    %5160 = vmatprep.subr.mxu0 0.0
    %5161 = vmatpush1.msra.mxu0 0.0
    %5162 = vmatprep.subr.mxu0 0.0
    %5163 = vmatpush1.msra.mxu0 0.0
    %5164 = vmatprep.subr.mxu0 0.0
    %5165 = vmatpush1.msra.mxu0 0.0
    %5166 = vmatprep.subr.mxu0 0.0
    %5167 = vmatpush1.msra.mxu0 0.0
    %5168 = vmatprep.subr.mxu0 0.0
    %5169 = vmatpush1.msra.mxu0 0.0
    %5170 = vmatprep.subr.mxu0 0.0
    %5171 = vmatpush1.msra.mxu0 0.0
    %5172 = vmatprep.subr.mxu0 0.0
    %5173 = vmatpush1.msra.mxu0 0.0
    %5174 = vmatprep.subr.mxu0 0.0
    %5175 = vmatpush1.msra.mxu0 0.0
    %5176 = vmatprep.subr.mxu0 0.0
    %5177 = vmatpush1.msra.mxu0 0.0
    %5178 = vmatprep.subr.mxu0 0.0
    %5179 = vmatpush1.msra.mxu0 0.0
    %5180 = vmatprep.subr.mxu0 0.0
    %5181 = vmatpush1.msra.mxu0 0.0
    %5182 = vmatprep.subr.mxu0 0.0
    %5183 = vmatpush1.msra.mxu0 0.0
    %5184 = vmatprep.subr.mxu0 0.0
    %5185 = vmatpush1.msra.mxu0 0.0
    %5186 = vmatprep.subr.mxu0 0.0
    %5187 = vmatpush1.msra.mxu0 0.0
    %5188 = vmatprep.subr.mxu0 0.0
    %5189 = vmatpush1.msra.mxu0 0.0
    %5190 = vmatprep.subr.mxu0 0.0
    %5191 = vmatpush1.msra.mxu0 0.0
    %5192 = vmatprep.subr.mxu0 0.0
    %5193 = vmatpush1.msra.mxu0 0.0
    %5194 = vmatprep.subr.mxu0 0.0
    %5195 = vmatpush1.msra.mxu0 0.0
    %5196 = vmatprep.subr.mxu0 0.0
    %5197 = vmatpush1.msra.mxu0 0.0
    %5198 = vmatprep.subr.mxu0 0.0
    %5199 = vmatpush1.msra.mxu0 0.0
    %5200 = vmatprep.subr.mxu0 0.0
    %5201 = vmatpush1.msra.mxu0 0.0
    %5202 = vmatprep.subr.mxu0 0.0
    %5203 = vmatpush1.msra.mxu0 0.0
    %5204 = vmatprep.subr.mxu0 0.0
    %5205 = vmatpush1.msra.mxu0 0.0
    %5206 = vmatprep.subr.mxu0 0.0
    %5207 = vmatpush1.msra.mxu0 0.0
    %5208 = vmatprep.subr.mxu0 0.0
    %5209 = vmatpush1.msra.mxu0 0.0
    %5210 = vmatprep.subr.mxu0 0.0
    %5211 = vmatpush1.msra.mxu0 0.0
    %5212 = vmatprep.subr.mxu0 0.0
    %5213 = vmatpush1.msra.mxu0 0.0
    %5214 = vmatprep.subr.mxu0 0.0
    %5215 = vmatpush1.msra.mxu0 0.0
    %5216 = vmatprep.subr.mxu0 0.0
    %5217 = vmatpush1.msra.mxu0 0.0
    %5218 = vmatprep.subr.mxu0 0.0
    %5219 = vmatpush1.msra.mxu0 0.0
    %5220 = vmatprep.mubr.f32.mxu0 0.0
    %5221 = vmatmul.mubr.f32.gmra.mrb[0].mxu0 %v5154
    %v5222 = vpop.f32.mrb[0].mxu0
    %v5223 = vadd.f32 0.0, %v5222
    %v5224 = vpop.f32.mrb[0].mxu0
    %5225 = vdwg.mxu0
    %5226 = vst.msk [vmem:[#allocation2] sm:$0xff] %vm289, %v5223
    // Predicated region
    $region14: #{our_model_forward.1} parent=1 // pred_check
      _
    $region15: #{our_model_forward.1} parent=1 // pred_check_branch
      %5228 = sbr.rel (0) target = $region17
    $region16: #{our_model_forward.1} parent=1 // pred_region
      %s5230 = ssub.s32 128, 128
      %5231 = vsyncadd [#allocation3], %s5230
      %s5233 = sshll.u32 [#allocation2], 4
      %s5234 = int_to_ptr.vmem [resolvable:$true] %s5233
      %5236 = dma.vmem_to_hbm [thread:$0]  %s5234, 128, %s3, [#allocation3]
    $region17: #{our_model_forward.1} parent=1 // pred_fallthru
      _
    // Predicated region
    $region18: #{our_model_forward.1} parent=1 // pred_check
      _
    $region19: #{our_model_forward.1} parent=1 // pred_check_branch
      %5238 = sbr.rel (0) target = $region21
    $region20: #{our_model_forward.1} parent=1 // pred_region
      %5239 = dma.done [#allocation3], 128
    $region21: #{our_model_forward.1} parent=1 // pred_fallthru
      _
    %5240 = vsyncpa [#allocation3], 1

</llo_original>
